<compile_context>
chip_gen: v7x
topology: tpu7x:2x2x1
jax: 0.10.0
libtpu: 0.0.40
codegen_flags: <defaults>
</compile_context>

<pallas_src>
import functools
import math

import jax
import jax.numpy as jnp
import numpy as np
from jax.experimental import pallas as pl
from jax.experimental.pallas import tpu as pltpu

EPS = 1e-6


# ------------------------------- Pallas kernel ------------------------------ #

def _mcq_kernel(x_ref, g_ref, wa_ref, wb_ref, bc_ref,
                sample_ref, code_ref, onehot_ref, logit_ref,
                *, num_codebooks, codebook_size):
    m, k = num_codebooks, codebook_size

    x = x_ref[...]                     # (T, m*d), compute dtype (f32 or bf16)
    xsq = x * x

    # logit = -(||x||^2 + ||c||^2 - 2 x.c) / sqrt(k) * max(temp, eps), fully folded
    # into Wa / Wb / bc by the wrapper -> two lane-dense MXU matmuls + one bias add.
    logit = (jnp.dot(x, wa_ref[...], preferred_element_type=jnp.float32)
             + jnp.dot(xsq, wb_ref[...], preferred_element_type=jnp.float32)
             + bc_ref[...])            # (T, m*k), f32
    logit_ref[...] = logit             # lane-dense store

    pert = logit + g_ref[...]          # gumbel-perturbed logits (f32)

    tn = logit.shape[0]
    lane = jax.lax.broadcasted_iota(jnp.int32, (tn, k), 1)

    for i in range(m):                 # static loop, lane-aligned K-wide slices
        sl = slice(i * k, (i + 1) * k)
        lg = logit[:, sl]              # (T, k)
        pg = pert[:, sl]               # (T, k)

        # hard gumbel-softmax forward value: one-hot at argmax(logit + g)
        p_idx = jnp.min(
            jnp.where(pg >= jnp.max(pg, axis=-1, keepdims=True), lane, k),
            axis=-1, keepdims=True)                           # first-max index
        sample_ref[:, sl] = (lane == p_idx).astype(jnp.float32)

        # deterministic code = argmax(logit) (first-max tie break, like torch)
        c_idx = jnp.min(
            jnp.where(lg >= jnp.max(lg, axis=-1, keepdims=True), lane, k),
            axis=-1, keepdims=True)
        onehot_ref[:, sl] = (lane == c_idx).astype(jnp.float32)
        code_ref[:, i:i + 1] = c_idx


# --------------------------------- wrapper ---------------------------------- #

def _block_diag(blocks):
    mm = len(blocks)
    r, c = blocks[0].shape
    out = jnp.zeros((mm * r, mm * c), blocks[0].dtype)
    for i, b in enumerate(blocks):
        out = out.at[i * r:(i + 1) * r, i * c:(i + 1) * c].set(b)
    return out


def multi_codebook_quantization_forward(x, codebook, temperature, gumbel_noise,
                                        *, tile_n=128,
                                        compute_dtype=jnp.float32):
    """Forward of _multiCodebookQuantization.

    x           : (n, m*d) float32
    codebook    : (m, k, d) float32
    temperature : (m, 1)   float32 learnable parameter (lower-bounded at EPS)
    gumbel_noise: (n, m, k) float32 standard Gumbel noise
    Returns (sample (n,m,k), code (n,m) int32, oneHot (n,m,k), logit (n,m,k)).
    """
    n, feat = x.shape
    m, k, d = codebook.shape
    assert feat == m * d, "x feature dim must equal m*d"

    # ---- fold codebook + temperature + 1/sqrt(k) into matmul constants (once) ----
    scale_t = jnp.maximum(temperature, EPS) / math.sqrt(k)       # (m, 1)
    wa = _block_diag([jnp.transpose(codebook[i]) * (2.0 * scale_t[i, 0])
                      for i in range(m)])                        # (m*d, m*k)
    wb = _block_diag([-jnp.ones((d, k), jnp.float32) * scale_t[i, 0]
                      for i in range(m)])                        # (m*d, m*k)
    c2 = jnp.sum(codebook * codebook, axis=-1)                   # (m, k)
    bc = (-(scale_t * c2)).reshape(1, m * k).astype(jnp.float32)

    x_in = x.astype(compute_dtype)
    wa = wa.astype(compute_dtype)
    wb = wb.astype(compute_dtype)
    g = gumbel_noise.reshape(n, m * k).astype(jnp.float32)

    tile_n = min(tile_n, n)
    grid = (pl.cdiv(n, tile_n),)

    kernel = functools.partial(_mcq_kernel, num_codebooks=m, codebook_size=k)

    sample_f, code, onehot_f, logit_f = pl.pallas_call(
        kernel,
        grid=grid,
        in_specs=[
            pl.BlockSpec((tile_n, m * d), lambda i: (i, 0)),     # x tile
            pl.BlockSpec((tile_n, m * k), lambda i: (i, 0)),     # gumbel tile
            pl.BlockSpec((m * d, m * k), lambda i: (0, 0)),      # Wa (VMEM resident)
            pl.BlockSpec((m * d, m * k), lambda i: (0, 0)),      # Wb (VMEM resident)
            pl.BlockSpec((1, m * k), lambda i: (0, 0)),          # folded bias
        ],
        out_specs=[
            pl.BlockSpec((tile_n, m * k), lambda i: (i, 0)),     # sample (flat)
            pl.BlockSpec((tile_n, m), lambda i: (i, 0)),         # code
            pl.BlockSpec((tile_n, m * k), lambda i: (i, 0)),     # oneHot (flat)
            pl.BlockSpec((tile_n, m * k), lambda i: (i, 0)),     # logit (flat)
        ],
        out_shape=[
            jax.ShapeDtypeStruct((n, m * k), jnp.float32),
            jax.ShapeDtypeStruct((n, m), jnp.int32),
            jax.ShapeDtypeStruct((n, m * k), jnp.float32),
            jax.ShapeDtypeStruct((n, m * k), jnp.float32),
        ],
        compiler_params=pltpu.CompilerParams(
            dimension_semantics=("parallel",)),
    )(x_in, g, wa, wb, bc)

    return (sample_f.reshape(n, m, k), code,
            onehot_f.reshape(n, m, k), logit_f.reshape(n, m, k))


# -------------------------------- reference --------------------------------- #

def _reference_forward(x, codebook, temperature, gumbel_noise):
    n = x.shape[0]
    m, k, d = codebook.shape
    xr = x.reshape(n, m, d)
    x2 = jnp.sum(xr * xr, axis=2, keepdims=True)                 # (n, m, 1)
    c2 = jnp.sum(codebook * codebook, axis=-1)                   # (m, k)
    inter = jnp.einsum('nmd,mkd->nmk', xr, codebook,
                       precision=jax.lax.Precision.HIGHEST)
    distance = x2 + c2[None, :, :] - 2.0 * inter
    t = jnp.maximum(temperature, EPS)                            # (m, 1)
    logit = (-distance / math.sqrt(k)) * t[None, :, :]
    sample = jax.nn.one_hot(jnp.argmax(logit + gumbel_noise, axis=-1), k,
                            dtype=jnp.float32)
    code = jnp.argmax(logit, axis=-1).astype(jnp.int32)
    onehot = jax.nn.one_hot(code, k, dtype=jnp.float32)
    return sample, code, onehot, logit


# ----------------------------------- main ------------------------------------ #

if __name__ == "__main__":
    # Small shapes consistent with the module: m=4 codebooks, k=128 codewords each,
    # d=32 dims per codeword -> x has m*d=128 features; n=256 rows (grid of 2 tiles).
    N, M, K, D = 256, 4, 128, 32

    key = jax.random.PRNGKey(0)
    kx, kc, kt, kg = jax.random.split(key, 4)
    x = jax.random.normal(kx, (N, M * D), jnp.float32)
    codebook = 0.1 * jax.random.normal(kc, (M, K, D), jnp.float32)
    temperature = 1.0 + 0.1 * jax.random.normal(kt, (M, 1), jnp.float32)
    gumbel = jax.random.gumbel(kg, (N, M, K), jnp.float32)

    sample, code, onehot, logit = multi_codebook_quantization_forward(
        x, codebook, temperature, gumbel, tile_n=128)
    sample, code, onehot, logit = jax.block_until_ready(
        (sample, code, onehot, logit))

    rs, rc, ro, rl = _reference_forward(x, codebook, temperature, gumbel)

    # logit: independent math check (tolerance covers MXU f32-matmul pass order
    # differences vs the XLA reference).
    np.testing.assert_allclose(np.asarray(logit), np.asarray(rl),
                               rtol=2e-2, atol=2e-2)

    # Discrete outputs: validated exactly against argmax/one-hot of the kernel's own
    # logits (avoids flaky flips at float near-ties vs the independent reference),
    # plus structural one-hot checks and a match-rate check vs the reference.
    np.testing.assert_array_equal(
        np.asarray(code),
        np.asarray(jnp.argmax(logit, axis=-1).astype(jnp.int32)))
    np.testing.assert_array_equal(
        np.asarray(onehot),
        np.asarray(jax.nn.one_hot(code, K, dtype=jnp.float32)))
    np.testing.assert_array_equal(
        np.asarray(sample),
        np.asarray(jax.nn.one_hot(jnp.argmax(logit + gumbel, axis=-1), K,
                                  dtype=jnp.float32)))
    np.testing.assert_allclose(np.asarray(sample.sum(-1)), 1.0)
    np.testing.assert_allclose(np.asarray(onehot.sum(-1)), 1.0)
    assert float(jnp.mean((code == rc).astype(jnp.float32))) > 0.99
    assert float(jnp.mean((onehot == ro).astype(jnp.float32))) > 0.99

    # bf16 MXU-operand path (v6e/v7x perf suggestion): f32 accumulation, loose check.
    s16, c16, o16, l16 = multi_codebook_quantization_forward(
        x, codebook, temperature, gumbel, tile_n=128,
        compute_dtype=jnp.bfloat16)
    l16 = jax.block_until_ready(l16)
    np.testing.assert_allclose(np.asarray(l16), np.asarray(rl),
                               rtol=1e-1, atol=1.0)

    print("KERNEL_OK")
</pallas_src>

<mosaic_0001>
module attributes {stable_mosaic.version = 11 : i64} {
  func.func @_mcq_kernel(%arg0: i32, %arg1: memref<128x128xf32, #tpu.memory_space<vmem>>, %arg2: memref<128x512xf32, #tpu.memory_space<vmem>>, %arg3: memref<128x512xf32, #tpu.memory_space<vmem>>, %arg4: memref<128x512xf32, #tpu.memory_space<vmem>>, %arg5: memref<1x512xf32, #tpu.memory_space<vmem>>, %arg6: memref<128x512xf32, #tpu.memory_space<vmem>>, %arg7: memref<128x4xi32, #tpu.memory_space<vmem>>, %arg8: memref<128x512xf32, #tpu.memory_space<vmem>>, %arg9: memref<128x512xf32, #tpu.memory_space<vmem>>) attributes {dimension_semantics = [#tpu.dimension_semantics<parallel>], iteration_bounds = array<i64: 2>, scalar_prefetch = 0 : i64, scratch_operands = 0 : i64, tpu.core_type = #tpu.core_type<tc>, window_params = [{transform_indices = @transform_0, window_bounds = array<i64: 128, 128>}, {transform_indices = @transform_1, window_bounds = array<i64: 128, 512>}, {pipeline_mode = #tpu.pipeline_mode<synchronous>, transform_indices = @transform_2, window_bounds = array<i64: 128, 512>}, {pipeline_mode = #tpu.pipeline_mode<synchronous>, transform_indices = @transform_3, window_bounds = array<i64: 128, 512>}, {pipeline_mode = #tpu.pipeline_mode<synchronous>, transform_indices = @transform_4, window_bounds = array<i64: 1, 512>}, {transform_indices = @transform_5, window_bounds = array<i64: 128, 512>}, {transform_indices = @transform_6, window_bounds = array<i64: 128, 4>}, {transform_indices = @transform_7, window_bounds = array<i64: 128, 512>}, {transform_indices = @transform_8, window_bounds = array<i64: 128, 512>}]} {
    %c0 = arith.constant 0 : index
    %c0_0 = arith.constant 0 : index
    %0 = vector.load %arg1[%c0, %c0_0] : memref<128x128xf32, #tpu.memory_space<vmem>>, vector<128x128xf32>
    %1 = arith.mulf %0, %0 : vector<128x128xf32>
    %c0_1 = arith.constant 0 : index
    %c0_2 = arith.constant 0 : index
    %2 = vector.load %arg3[%c0_1, %c0_2] : memref<128x512xf32, #tpu.memory_space<vmem>>, vector<128x512xf32>
    %cst = arith.constant dense<0.000000e+00> : vector<128x512xf32>
    %3 = tpu.matmul %0, %2, %cst {dimension_numbers = #tpu.dot_dimension_numbers<[1], [0], [0], [1], [0, 0, 1, 1], [], []>} : vector<128x128xf32>, vector<128x512xf32>, vector<128x512xf32> -> vector<128x512xf32>
    %c0_3 = arith.constant 0 : index
    %c0_4 = arith.constant 0 : index
    %4 = vector.load %arg4[%c0_3, %c0_4] : memref<128x512xf32, #tpu.memory_space<vmem>>, vector<128x512xf32>
    %cst_5 = arith.constant dense<0.000000e+00> : vector<128x512xf32>
    %5 = tpu.matmul %1, %4, %cst_5 {dimension_numbers = #tpu.dot_dimension_numbers<[1], [0], [0], [1], [0, 0, 1, 1], [], []>} : vector<128x128xf32>, vector<128x512xf32>, vector<128x512xf32> -> vector<128x512xf32>
    %6 = arith.addf %3, %5 : vector<128x512xf32>
    %c0_6 = arith.constant 0 : index
    %c0_7 = arith.constant 0 : index
    %7 = vector.load %arg5[%c0_6, %c0_7] : memref<1x512xf32, #tpu.memory_space<vmem>>, vector<1x512xf32>
    %8 = vector.broadcast %7 : vector<1x512xf32> to vector<128x512xf32>
    %9 = arith.addf %6, %8 : vector<128x512xf32>
    %c0_8 = arith.constant 0 : index
    %c0_9 = arith.constant 0 : index
    %10 = vector.load %arg9[%c0_8, %c0_9] : memref<128x512xf32, #tpu.memory_space<vmem>>, vector<128x512xf32>
    tpu.vector_store %arg9[%c0_8, %c0_9], %9 {strides = array<i32>} : memref<128x512xf32, #tpu.memory_space<vmem>>, vector<128x512xf32>,
    %c0_10 = arith.constant 0 : index
    %c0_11 = arith.constant 0 : index
    %11 = vector.load %arg2[%c0_10, %c0_11] : memref<128x512xf32, #tpu.memory_space<vmem>>, vector<128x512xf32>
    %12 = arith.addf %9, %11 : vector<128x512xf32>
    %13 = tpu.iota {dimensions = array<i32: 1>} : vector<128x128xi32>
    %14 = vector.extract_strided_slice %9 {offsets = [0, 0], sizes = [128, 128], strides = [1, 1]} : vector<128x512xf32> to vector<128x128xf32>
    %15 = vector.extract_strided_slice %12 {offsets = [0, 0], sizes = [128, 128], strides = [1, 1]} : vector<128x512xf32> to vector<128x128xf32>
    %cst_12 = arith.constant dense<0xFF800000> : vector<128xf32>
    %16 = vector.multi_reduction <maximumf>, %15, %cst_12 [1] : vector<128x128xf32> to vector<128xf32>
    %17 = vector.shape_cast %16 : vector<128xf32> to vector<128x1xf32>
    %18 = vector.broadcast %17 : vector<128x1xf32> to vector<128x128xf32>
    %19 = arith.cmpf oge, %15, %18 : vector<128x128xf32>
    %c128_i32 = arith.constant 128 : i32
    %20 = vector.broadcast %c128_i32 : i32 to vector<128x128xi32>
    %21 = arith.select %19, %13, %20 : vector<128x128xi1>, vector<128x128xi32>
    %cst_13 = arith.constant dense<2147483647> : vector<128xi32>
    %22 = vector.multi_reduction <minsi>, %21, %cst_13 [1] : vector<128x128xi32> to vector<128xi32>
    %23 = vector.shape_cast %22 : vector<128xi32> to vector<128x1xi32>
    %24 = vector.broadcast %23 : vector<128x1xi32> to vector<128x128xi32>
    %25 = arith.cmpi eq, %13, %24 : vector<128x128xi32>
    %26 = arith.extui %25 : vector<128x128xi1> to vector<128x128xi32>
    %27 = arith.sitofp %26 : vector<128x128xi32> to vector<128x128xf32>
    %c0_14 = arith.constant 0 : index
    %c0_15 = arith.constant 0 : index
    %28 = vector.load %arg6[%c0_14, %c0_15] : memref<128x512xf32, #tpu.memory_space<vmem>>, vector<128x128xf32>
    tpu.vector_store %arg6[%c0_14, %c0_15], %27 {strides = array<i32>} : memref<128x512xf32, #tpu.memory_space<vmem>>, vector<128x128xf32>,
    %cst_16 = arith.constant dense<0xFF800000> : vector<128xf32>
    %29 = vector.multi_reduction <maximumf>, %14, %cst_16 [1] : vector<128x128xf32> to vector<128xf32>
    %30 = vector.shape_cast %29 : vector<128xf32> to vector<128x1xf32>
    %31 = vector.broadcast %30 : vector<128x1xf32> to vector<128x128xf32>
    %32 = arith.cmpf oge, %14, %31 : vector<128x128xf32>
    %c128_i32_17 = arith.constant 128 : i32
    %33 = vector.broadcast %c128_i32_17 : i32 to vector<128x128xi32>
    %34 = arith.select %32, %13, %33 : vector<128x128xi1>, vector<128x128xi32>
    %cst_18 = arith.constant dense<2147483647> : vector<128xi32>
    %35 = vector.multi_reduction <minsi>, %34, %cst_18 [1] : vector<128x128xi32> to vector<128xi32>
    %36 = vector.shape_cast %35 : vector<128xi32> to vector<128x1xi32>
    %37 = vector.broadcast %36 : vector<128x1xi32> to vector<128x128xi32>
    %38 = arith.cmpi eq, %13, %37 : vector<128x128xi32>
    %39 = arith.extui %38 : vector<128x128xi1> to vector<128x128xi32>
    %40 = arith.sitofp %39 : vector<128x128xi32> to vector<128x128xf32>
    %c0_19 = arith.constant 0 : index
    %c0_20 = arith.constant 0 : index
    %41 = vector.load %arg8[%c0_19, %c0_20] : memref<128x512xf32, #tpu.memory_space<vmem>>, vector<128x128xf32>
    tpu.vector_store %arg8[%c0_19, %c0_20], %40 {strides = array<i32>} : memref<128x512xf32, #tpu.memory_space<vmem>>, vector<128x128xf32>,
    %c0_21 = arith.constant 0 : index
    %c0_22 = arith.constant 0 : index
    %42 = vector.load %arg7[%c0_21, %c0_22] : memref<128x4xi32, #tpu.memory_space<vmem>>, vector<128x1xi32>
    tpu.vector_store %arg7[%c0_21, %c0_22], %36 {strides = array<i32>} : memref<128x4xi32, #tpu.memory_space<vmem>>, vector<128x1xi32>,
    %43 = vector.extract_strided_slice %9 {offsets = [0, 128], sizes = [128, 128], strides = [1, 1]} : vector<128x512xf32> to vector<128x128xf32>
    %44 = vector.extract_strided_slice %12 {offsets = [0, 128], sizes = [128, 128], strides = [1, 1]} : vector<128x512xf32> to vector<128x128xf32>
    %cst_23 = arith.constant dense<0xFF800000> : vector<128xf32>
    %45 = vector.multi_reduction <maximumf>, %44, %cst_23 [1] : vector<128x128xf32> to vector<128xf32>
    %46 = vector.shape_cast %45 : vector<128xf32> to vector<128x1xf32>
    %47 = vector.broadcast %46 : vector<128x1xf32> to vector<128x128xf32>
    %48 = arith.cmpf oge, %44, %47 : vector<128x128xf32>
    %c128_i32_24 = arith.constant 128 : i32
    %49 = vector.broadcast %c128_i32_24 : i32 to vector<128x128xi32>
    %50 = arith.select %48, %13, %49 : vector<128x128xi1>, vector<128x128xi32>
    %cst_25 = arith.constant dense<2147483647> : vector<128xi32>
    %51 = vector.multi_reduction <minsi>, %50, %cst_25 [1] : vector<128x128xi32> to vector<128xi32>
    %52 = vector.shape_cast %51 : vector<128xi32> to vector<128x1xi32>
    %53 = vector.broadcast %52 : vector<128x1xi32> to vector<128x128xi32>
    %54 = arith.cmpi eq, %13, %53 : vector<128x128xi32>
    %55 = arith.extui %54 : vector<128x128xi1> to vector<128x128xi32>
    %56 = arith.sitofp %55 : vector<128x128xi32> to vector<128x128xf32>
    %c0_26 = arith.constant 0 : index
    %c128 = arith.constant 128 : index
    %57 = vector.load %arg6[%c0_26, %c128] : memref<128x512xf32, #tpu.memory_space<vmem>>, vector<128x128xf32>
    tpu.vector_store %arg6[%c0_26, %c128], %56 {strides = array<i32>} : memref<128x512xf32, #tpu.memory_space<vmem>>, vector<128x128xf32>,
    %cst_27 = arith.constant dense<0xFF800000> : vector<128xf32>
    %58 = vector.multi_reduction <maximumf>, %43, %cst_27 [1] : vector<128x128xf32> to vector<128xf32>
    %59 = vector.shape_cast %58 : vector<128xf32> to vector<128x1xf32>
    %60 = vector.broadcast %59 : vector<128x1xf32> to vector<128x128xf32>
    %61 = arith.cmpf oge, %43, %60 : vector<128x128xf32>
    %c128_i32_28 = arith.constant 128 : i32
    %62 = vector.broadcast %c128_i32_28 : i32 to vector<128x128xi32>
    %63 = arith.select %61, %13, %62 : vector<128x128xi1>, vector<128x128xi32>
    %cst_29 = arith.constant dense<2147483647> : vector<128xi32>
    %64 = vector.multi_reduction <minsi>, %63, %cst_29 [1] : vector<128x128xi32> to vector<128xi32>
    %65 = vector.shape_cast %64 : vector<128xi32> to vector<128x1xi32>
    %66 = vector.broadcast %65 : vector<128x1xi32> to vector<128x128xi32>
    %67 = arith.cmpi eq, %13, %66 : vector<128x128xi32>
    %68 = arith.extui %67 : vector<128x128xi1> to vector<128x128xi32>
    %69 = arith.sitofp %68 : vector<128x128xi32> to vector<128x128xf32>
    %c0_30 = arith.constant 0 : index
    %c128_31 = arith.constant 128 : index
    %70 = vector.load %arg8[%c0_30, %c128_31] : memref<128x512xf32, #tpu.memory_space<vmem>>, vector<128x128xf32>
    tpu.vector_store %arg8[%c0_30, %c128_31], %69 {strides = array<i32>} : memref<128x512xf32, #tpu.memory_space<vmem>>, vector<128x128xf32>,
    %c0_32 = arith.constant 0 : index
    %c1 = arith.constant 1 : index
    %71 = vector.load %arg7[%c0_32, %c1] : memref<128x4xi32, #tpu.memory_space<vmem>>, vector<128x1xi32>
    tpu.vector_store %arg7[%c0_32, %c1], %65 {strides = array<i32>} : memref<128x4xi32, #tpu.memory_space<vmem>>, vector<128x1xi32>,
    %72 = vector.extract_strided_slice %9 {offsets = [0, 256], sizes = [128, 128], strides = [1, 1]} : vector<128x512xf32> to vector<128x128xf32>
    %73 = vector.extract_strided_slice %12 {offsets = [0, 256], sizes = [128, 128], strides = [1, 1]} : vector<128x512xf32> to vector<128x128xf32>
    %cst_33 = arith.constant dense<0xFF800000> : vector<128xf32>
    %74 = vector.multi_reduction <maximumf>, %73, %cst_33 [1] : vector<128x128xf32> to vector<128xf32>
    %75 = vector.shape_cast %74 : vector<128xf32> to vector<128x1xf32>
    %76 = vector.broadcast %75 : vector<128x1xf32> to vector<128x128xf32>
    %77 = arith.cmpf oge, %73, %76 : vector<128x128xf32>
    %c128_i32_34 = arith.constant 128 : i32
    %78 = vector.broadcast %c128_i32_34 : i32 to vector<128x128xi32>
    %79 = arith.select %77, %13, %78 : vector<128x128xi1>, vector<128x128xi32>
    %cst_35 = arith.constant dense<2147483647> : vector<128xi32>
    %80 = vector.multi_reduction <minsi>, %79, %cst_35 [1] : vector<128x128xi32> to vector<128xi32>
    %81 = vector.shape_cast %80 : vector<128xi32> to vector<128x1xi32>
    %82 = vector.broadcast %81 : vector<128x1xi32> to vector<128x128xi32>
    %83 = arith.cmpi eq, %13, %82 : vector<128x128xi32>
    %84 = arith.extui %83 : vector<128x128xi1> to vector<128x128xi32>
    %85 = arith.sitofp %84 : vector<128x128xi32> to vector<128x128xf32>
    %c0_36 = arith.constant 0 : index
    %c256 = arith.constant 256 : index
    %86 = vector.load %arg6[%c0_36, %c256] : memref<128x512xf32, #tpu.memory_space<vmem>>, vector<128x128xf32>
    tpu.vector_store %arg6[%c0_36, %c256], %85 {strides = array<i32>} : memref<128x512xf32, #tpu.memory_space<vmem>>, vector<128x128xf32>,
    %cst_37 = arith.constant dense<0xFF800000> : vector<128xf32>
    %87 = vector.multi_reduction <maximumf>, %72, %cst_37 [1] : vector<128x128xf32> to vector<128xf32>
    %88 = vector.shape_cast %87 : vector<128xf32> to vector<128x1xf32>
    %89 = vector.broadcast %88 : vector<128x1xf32> to vector<128x128xf32>
    %90 = arith.cmpf oge, %72, %89 : vector<128x128xf32>
    %c128_i32_38 = arith.constant 128 : i32
    %91 = vector.broadcast %c128_i32_38 : i32 to vector<128x128xi32>
    %92 = arith.select %90, %13, %91 : vector<128x128xi1>, vector<128x128xi32>
    %cst_39 = arith.constant dense<2147483647> : vector<128xi32>
    %93 = vector.multi_reduction <minsi>, %92, %cst_39 [1] : vector<128x128xi32> to vector<128xi32>
    %94 = vector.shape_cast %93 : vector<128xi32> to vector<128x1xi32>
    %95 = vector.broadcast %94 : vector<128x1xi32> to vector<128x128xi32>
    %96 = arith.cmpi eq, %13, %95 : vector<128x128xi32>
    %97 = arith.extui %96 : vector<128x128xi1> to vector<128x128xi32>
    %98 = arith.sitofp %97 : vector<128x128xi32> to vector<128x128xf32>
    %c0_40 = arith.constant 0 : index
    %c256_41 = arith.constant 256 : index
    %99 = vector.load %arg8[%c0_40, %c256_41] : memref<128x512xf32, #tpu.memory_space<vmem>>, vector<128x128xf32>
    tpu.vector_store %arg8[%c0_40, %c256_41], %98 {strides = array<i32>} : memref<128x512xf32, #tpu.memory_space<vmem>>, vector<128x128xf32>,
    %c0_42 = arith.constant 0 : index
    %c2 = arith.constant 2 : index
    %100 = vector.load %arg7[%c0_42, %c2] : memref<128x4xi32, #tpu.memory_space<vmem>>, vector<128x1xi32>
    tpu.vector_store %arg7[%c0_42, %c2], %94 {strides = array<i32>} : memref<128x4xi32, #tpu.memory_space<vmem>>, vector<128x1xi32>,
    %101 = vector.extract_strided_slice %9 {offsets = [0, 384], sizes = [128, 128], strides = [1, 1]} : vector<128x512xf32> to vector<128x128xf32>
    %102 = vector.extract_strided_slice %12 {offsets = [0, 384], sizes = [128, 128], strides = [1, 1]} : vector<128x512xf32> to vector<128x128xf32>
    %cst_43 = arith.constant dense<0xFF800000> : vector<128xf32>
    %103 = vector.multi_reduction <maximumf>, %102, %cst_43 [1] : vector<128x128xf32> to vector<128xf32>
    %104 = vector.shape_cast %103 : vector<128xf32> to vector<128x1xf32>
    %105 = vector.broadcast %104 : vector<128x1xf32> to vector<128x128xf32>
    %106 = arith.cmpf oge, %102, %105 : vector<128x128xf32>
    %c128_i32_44 = arith.constant 128 : i32
    %107 = vector.broadcast %c128_i32_44 : i32 to vector<128x128xi32>
    %108 = arith.select %106, %13, %107 : vector<128x128xi1>, vector<128x128xi32>
    %cst_45 = arith.constant dense<2147483647> : vector<128xi32>
    %109 = vector.multi_reduction <minsi>, %108, %cst_45 [1] : vector<128x128xi32> to vector<128xi32>
    %110 = vector.shape_cast %109 : vector<128xi32> to vector<128x1xi32>
    %111 = vector.broadcast %110 : vector<128x1xi32> to vector<128x128xi32>
    %112 = arith.cmpi eq, %13, %111 : vector<128x128xi32>
    %113 = arith.extui %112 : vector<128x128xi1> to vector<128x128xi32>
    %114 = arith.sitofp %113 : vector<128x128xi32> to vector<128x128xf32>
    %c0_46 = arith.constant 0 : index
    %c384 = arith.constant 384 : index
    %115 = vector.load %arg6[%c0_46, %c384] : memref<128x512xf32, #tpu.memory_space<vmem>>, vector<128x128xf32>
    tpu.vector_store %arg6[%c0_46, %c384], %114 {strides = array<i32>} : memref<128x512xf32, #tpu.memory_space<vmem>>, vector<128x128xf32>,
    %cst_47 = arith.constant dense<0xFF800000> : vector<128xf32>
    %116 = vector.multi_reduction <maximumf>, %101, %cst_47 [1] : vector<128x128xf32> to vector<128xf32>
    %117 = vector.shape_cast %116 : vector<128xf32> to vector<128x1xf32>
    %118 = vector.broadcast %117 : vector<128x1xf32> to vector<128x128xf32>
    %119 = arith.cmpf oge, %101, %118 : vector<128x128xf32>
    %c128_i32_48 = arith.constant 128 : i32
    %120 = vector.broadcast %c128_i32_48 : i32 to vector<128x128xi32>
    %121 = arith.select %119, %13, %120 : vector<128x128xi1>, vector<128x128xi32>
    %cst_49 = arith.constant dense<2147483647> : vector<128xi32>
    %122 = vector.multi_reduction <minsi>, %121, %cst_49 [1] : vector<128x128xi32> to vector<128xi32>
    %123 = vector.shape_cast %122 : vector<128xi32> to vector<128x1xi32>
    %124 = vector.broadcast %123 : vector<128x1xi32> to vector<128x128xi32>
    %125 = arith.cmpi eq, %13, %124 : vector<128x128xi32>
    %126 = arith.extui %125 : vector<128x128xi1> to vector<128x128xi32>
    %127 = arith.sitofp %126 : vector<128x128xi32> to vector<128x128xf32>
    %c0_50 = arith.constant 0 : index
    %c384_51 = arith.constant 384 : index
    %128 = vector.load %arg8[%c0_50, %c384_51] : memref<128x512xf32, #tpu.memory_space<vmem>>, vector<128x128xf32>
    tpu.vector_store %arg8[%c0_50, %c384_51], %127 {strides = array<i32>} : memref<128x512xf32, #tpu.memory_space<vmem>>, vector<128x128xf32>,
    %c0_52 = arith.constant 0 : index
    %c3 = arith.constant 3 : index
    %129 = vector.load %arg7[%c0_52, %c3] : memref<128x4xi32, #tpu.memory_space<vmem>>, vector<128x1xi32>
    tpu.vector_store %arg7[%c0_52, %c3], %123 {strides = array<i32>} : memref<128x4xi32, #tpu.memory_space<vmem>>, vector<128x1xi32>,
    return
  }
  func.func @transform_0(%arg0: i32) -> (i32, i32) {
    %c0_i32 = arith.constant 0 : i32
    %c0_i32_0 = arith.constant 0 : i32
    return %arg0, %c0_i32 : i32, i32
  }
  func.func @transform_1(%arg0: i32) -> (i32, i32) {
    %c0_i32 = arith.constant 0 : i32
    %c0_i32_0 = arith.constant 0 : i32
    return %arg0, %c0_i32 : i32, i32
  }
  func.func @transform_2(%arg0: i32) -> (i32, i32) {
    %c0_i32 = arith.constant 0 : i32
    %c0_i32_0 = arith.constant 0 : i32
    %c0_i32_1 = arith.constant 0 : i32
    return %c0_i32, %c0_i32_0 : i32, i32
  }
  func.func @transform_3(%arg0: i32) -> (i32, i32) {
    %c0_i32 = arith.constant 0 : i32
    %c0_i32_0 = arith.constant 0 : i32
    %c0_i32_1 = arith.constant 0 : i32
    return %c0_i32, %c0_i32_0 : i32, i32
  }
  func.func @transform_4(%arg0: i32) -> (i32, i32) {
    %c0_i32 = arith.constant 0 : i32
    %c0_i32_0 = arith.constant 0 : i32
    %c0_i32_1 = arith.constant 0 : i32
    return %c0_i32, %c0_i32_0 : i32, i32
  }
  func.func @transform_5(%arg0: i32) -> (i32, i32) {
    %c0_i32 = arith.constant 0 : i32
    %c0_i32_0 = arith.constant 0 : i32
    return %arg0, %c0_i32 : i32, i32
  }
  func.func @transform_6(%arg0: i32) -> (i32, i32) {
    %c0_i32 = arith.constant 0 : i32
    %c0_i32_0 = arith.constant 0 : i32
    return %arg0, %c0_i32 : i32, i32
  }
  func.func @transform_7(%arg0: i32) -> (i32, i32) {
    %c0_i32 = arith.constant 0 : i32
    %c0_i32_0 = arith.constant 0 : i32
    return %arg0, %c0_i32 : i32, i32
  }
  func.func @transform_8(%arg0: i32) -> (i32, i32) {
    %c0_i32 = arith.constant 0 : i32
    %c0_i32_0 = arith.constant 0 : i32
    return %arg0, %c0_i32 : i32, i32
  }
}

</mosaic_0001>

<llo_original>
// kernel: tpu_custom_call.1
$region0: #{tpu_custom_call.1}
  #allocation0 [shape = 'u32[]', space=smem, size = 0x4, offset = 0x4, fixed_abs, tag = 'smem constant byte address 0x4 - core index']
  #allocation1 [shape = 'u32[144,128]{1,0:T(1,128)}', space=vmem, size = 0x12000, scoped, tag = 'internal scratch']
  %s0 = inlined_call_operand.hbm [shape: f32[256,128], index: 0, kind: input, shape index: {}]
  %s1 = inlined_call_operand.hbm [shape: f32[256,512], index: 1, kind: input, shape index: {}]
  %s2 = inlined_call_operand.hbm [shape: f32[128,512], index: 2, kind: input, shape index: {}]
  %s3 = inlined_call_operand.hbm [shape: f32[128,512], index: 3, kind: input, shape index: {}]
  %s4 = inlined_call_operand.vmem [shape: f32[1,512], index: 4, kind: input, shape index: {}]
  %s5 = inlined_call_operand.hbm [shape: f32[256,512], index: 5, kind: output, shape index: {0}]
  %s6 = inlined_call_operand.vmem [shape: s32[256,4], index: 6, kind: output, shape index: {1}]
  %s7 = inlined_call_operand.hbm [shape: f32[256,512], index: 7, kind: output, shape index: {2}]
  %s8 = inlined_call_operand.hbm [shape: f32[256,512], index: 8, kind: output, shape index: {3}]
  %9 = xla_tuple %s5, %s6, %s7, %s8
  %s10 = sld [smem:[#allocation0]]
  $region93: #{tpu_custom_call.1} parent=0
    _
  %s12 = ssub.s32 1, %s10
  %s13 = scalar_select 0, %s12, %s10
  $region1: #{tpu_custom_call.1} parent=0
    #allocation2 [shape = 'u8[131072]{0}', space=vmem, size = 0x20000, scoped, tag = 'input window, operand 0']
    #allocation3 [shape = 's32[2]{0}', space=sflag, size = 0x8, scoped, tag = 'scoped memory for tpu_custom_call.1']
    #allocation4 [shape = 's32[2]{0}', space=sflag, size = 0x8, scoped, tag = 'scoped memory for tpu_custom_call.1']
    #allocation5 [shape = 'u8[524288]{0}', space=vmem, size = 0x80000, scoped, tag = 'input window, operand 1']
    #allocation6 [shape = 's32[2]{0}', space=sflag, size = 0x8, scoped, tag = 'scoped memory for tpu_custom_call.1']
    #allocation7 [shape = 'u8[262144]{0}', space=vmem, size = 0x40000, scoped, tag = 'input window, operand 2, single buffered']
    #allocation8 [shape = 'u8[262144]{0}', space=vmem, size = 0x40000, scoped, tag = 'input window, operand 3, single buffered']
    #allocation9 [shape = 's32[1]{0}', space=sflag, size = 0x4, scoped, tag = 'scoped memory for tpu_custom_call.1']
    #allocation10 [shape = 'u8[524288]{0}', space=vmem, size = 0x80000, scoped, tag = 'output window, operand 0']
    #allocation11 [shape = 'u8[524288]{0}', space=vmem, size = 0x80000, scoped, tag = 'output window, operand 2']
    #allocation12 [shape = 's32[2]{0}', space=sflag, size = 0x8, scoped, tag = 'scoped memory for tpu_custom_call.1']
    #allocation13 [shape = 'u8[524288]{0}', space=vmem, size = 0x80000, scoped, tag = 'output window, operand 3']
    %14 = vsyncpa [#allocation3], 0
    %s15 = scalar_lea.sflag [#allocation3], 1
    %16 = vsyncpa %s15, 0
    %17 = vsyncpa [#allocation6], 0
    %s18 = scalar_lea.sflag [#allocation6], 1
    %19 = vsyncpa %s18, 0
    %20 = vsyncpa [#allocation9], 0
    %21 = vsyncpa [#allocation4], 0
    %s22 = scalar_lea.sflag [#allocation4], 1
    %23 = vsyncpa %s22, 0
    %24 = vsyncpa [#allocation12], 0
    %s25 = scalar_lea.sflag [#allocation12], 1
    %26 = vsyncpa %s25, 0
    loop: start=0, step=1, limit=4
    $region2: #{tpu_custom_call.1} parent=1 // loop_pre_header
      _
    $region3: #{tpu_custom_call.1} parent=1 // loop_header
      %s28 = sphi 0, %s32
      %p29 = scmp.ge.s32.totalorder %s28, 4
      %s38 = sphi 0, %s40
      %s41 = sphi 0, %s38
      %s42 = sphi 0, %s41
      %s58 = sphi 0, %s42
      %s64 = sphi 0, %s66
      %s67 = sphi 0, %s64
      %s68 = sphi 0, %s67
      %s84 = sphi 0, %s68
      %s88 = sphi 0, %s88
      %s90 = sphi 0, %s88
      %s91 = sphi 0, %s90
      %s105 = sphi 0, %s91
      %s109 = sphi 0, %s109
      %s111 = sphi 0, %s109
      %s112 = sphi 0, %s111
      %s126 = sphi 0, %s112
      %s130 = sphi 0, %s130
      %s132 = sphi 0, %s130
      %s133 = sphi 0, %s132
      %s147 = sphi 0, %s133
      %s153 = sphi 0, %s155
      %s156 = sphi 0, %s153
      %s157 = sphi 0, %s156
      %s173 = sphi 0, %s157
      %s179 = sphi 0, %s181
      %s182 = sphi 0, %s179
      %s183 = sphi 0, %s182
      %s199 = sphi 0, %s183
      %s205 = sphi 0, %s207
      %s208 = sphi 0, %s205
      %s209 = sphi 0, %s208
      %s225 = sphi 0, %s209
      %s231 = sphi 0, %s233
      %s234 = sphi 0, %s231
      %s235 = sphi 0, %s234
      %s251 = sphi 0, %s235
    $region4: #{tpu_custom_call.1} parent=1 // loop_header_branch
      %31 = sbr.rel (%p29) target = $region8
    $region5: #{tpu_custom_call.1} parent=1 // loop_body
      %s33 = ssub.s32 %s28, 1
      %s34 = ssub.s32 %s28, 2
      %s35 = sadd.s32 %s28, 1
      %s36 = ssub.s32 %s28, %s35
      %p37 = scmp.eq.s32.totalorder %s36, 0
      %s39 = sadd.s32 %s38, 1
      %s40 = scalar_select %p37, %s38, %s39
      %p43 = pneg %p37
      %p44 = scmp.eq.s32.totalorder %s28, 1
      %p45 = por %p43, %p44
      %p46 = scmp.ne.s32.totalorder %s38, %s41
      %p47 = scmp.eq.s32.totalorder %s28, 0
      %p48 = por %p46, %p47
      %p49 = scmp.ne.s32.totalorder %s38, %s41
      %p50 = scmp.eq.s32.totalorder %s33, 1
      %p51 = por %p49, %p50
      %p52 = scmp.ne.s32.totalorder %s41, %s42
      %p53 = scmp.eq.s32.totalorder %s33, 0
      %p54 = por %p52, %p53
      %p55 = scmp.ne.s32.totalorder %s41, %s42
      %p56 = scmp.eq.s32.totalorder %s34, 1
      %p57 = por %p55, %p56
      %p59 = scmp.ne.s32.totalorder %s42, %s58
      %p60 = scmp.eq.s32.totalorder %s34, 0
      %p61 = por %p59, %p60
      %s62 = ssub.s32 %s28, %s35
      %p63 = scmp.eq.s32.totalorder %s62, 0
      %s65 = sadd.s32 %s64, 1
      %s66 = scalar_select %p63, %s64, %s65
      %p69 = pneg %p63
      %p70 = scmp.eq.s32.totalorder %s28, 1
      %p71 = por %p69, %p70
      %p72 = scmp.ne.s32.totalorder %s64, %s67
      %p73 = scmp.eq.s32.totalorder %s28, 0
      %p74 = por %p72, %p73
      %p75 = scmp.ne.s32.totalorder %s64, %s67
      %p76 = scmp.eq.s32.totalorder %s33, 1
      %p77 = por %p75, %p76
      %p78 = scmp.ne.s32.totalorder %s67, %s68
      %p79 = scmp.eq.s32.totalorder %s33, 0
      %p80 = por %p78, %p79
      %p81 = scmp.ne.s32.totalorder %s67, %s68
      %p82 = scmp.eq.s32.totalorder %s34, 1
      %p83 = por %p81, %p82
      %p85 = scmp.ne.s32.totalorder %s68, %s84
      %p86 = scmp.eq.s32.totalorder %s34, 0
      %p87 = por %p85, %p86
      %s89 = sadd.s32 %s88, 1
      %p92 = scmp.eq.s32.totalorder %s28, 1
      %p93 = scmp.ne.s32.totalorder %s88, %s90
      %p94 = scmp.eq.s32.totalorder %s28, 0
      %p95 = por %p93, %p94
      %p96 = scmp.ne.s32.totalorder %s88, %s90
      %p97 = scmp.eq.s32.totalorder %s33, 1
      %p98 = por %p96, %p97
      %p99 = scmp.ne.s32.totalorder %s90, %s91
      %p100 = scmp.eq.s32.totalorder %s33, 0
      %p101 = por %p99, %p100
      %p102 = scmp.ne.s32.totalorder %s90, %s91
      %p103 = scmp.eq.s32.totalorder %s34, 1
      %p104 = por %p102, %p103
      %p106 = scmp.ne.s32.totalorder %s91, %s105
      %p107 = scmp.eq.s32.totalorder %s34, 0
      %p108 = por %p106, %p107
      %s110 = sadd.s32 %s109, 1
      %p113 = scmp.eq.s32.totalorder %s28, 1
      %p114 = scmp.ne.s32.totalorder %s109, %s111
      %p115 = scmp.eq.s32.totalorder %s28, 0
      %p116 = por %p114, %p115
      %p117 = scmp.ne.s32.totalorder %s109, %s111
      %p118 = scmp.eq.s32.totalorder %s33, 1
      %p119 = por %p117, %p118
      %p120 = scmp.ne.s32.totalorder %s111, %s112
      %p121 = scmp.eq.s32.totalorder %s33, 0
      %p122 = por %p120, %p121
      %p123 = scmp.ne.s32.totalorder %s111, %s112
      %p124 = scmp.eq.s32.totalorder %s34, 1
      %p125 = por %p123, %p124
      %p127 = scmp.ne.s32.totalorder %s112, %s126
      %p128 = scmp.eq.s32.totalorder %s34, 0
      %p129 = por %p127, %p128
      %s131 = sadd.s32 %s130, 1
      %p134 = scmp.eq.s32.totalorder %s28, 1
      %p135 = scmp.ne.s32.totalorder %s130, %s132
      %p136 = scmp.eq.s32.totalorder %s28, 0
      %p137 = por %p135, %p136
      %p138 = scmp.ne.s32.totalorder %s130, %s132
      %p139 = scmp.eq.s32.totalorder %s33, 1
      %p140 = por %p138, %p139
      %p141 = scmp.ne.s32.totalorder %s132, %s133
      %p142 = scmp.eq.s32.totalorder %s33, 0
      %p143 = por %p141, %p142
      %p144 = scmp.ne.s32.totalorder %s132, %s133
      %p145 = scmp.eq.s32.totalorder %s34, 1
      %p146 = por %p144, %p145
      %p148 = scmp.ne.s32.totalorder %s133, %s147
      %p149 = scmp.eq.s32.totalorder %s34, 0
      %p150 = por %p148, %p149
      %s151 = ssub.s32 %s28, %s35
      %p152 = scmp.eq.s32.totalorder %s151, 0
      %s154 = sadd.s32 %s153, 1
      %s155 = scalar_select %p152, %s153, %s154
      %p158 = pneg %p152
      %p159 = scmp.eq.s32.totalorder %s28, 1
      %p160 = por %p158, %p159
      %p161 = scmp.ne.s32.totalorder %s153, %s156
      %p162 = scmp.eq.s32.totalorder %s28, 0
      %p163 = por %p161, %p162
      %p164 = scmp.ne.s32.totalorder %s153, %s156
      %p165 = scmp.eq.s32.totalorder %s33, 1
      %p166 = por %p164, %p165
      %p167 = scmp.ne.s32.totalorder %s156, %s157
      %p168 = scmp.eq.s32.totalorder %s33, 0
      %p169 = por %p167, %p168
      %p170 = scmp.ne.s32.totalorder %s156, %s157
      %p171 = scmp.eq.s32.totalorder %s34, 1
      %p172 = por %p170, %p171
      %p174 = scmp.ne.s32.totalorder %s157, %s173
      %p175 = scmp.eq.s32.totalorder %s34, 0
      %p176 = por %p174, %p175
      %s177 = ssub.s32 %s28, %s35
      %p178 = scmp.eq.s32.totalorder %s177, 0
      %s180 = sadd.s32 %s179, 1
      %s181 = scalar_select %p178, %s179, %s180
      %p184 = pneg %p178
      %p185 = scmp.eq.s32.totalorder %s28, 1
      %p186 = por %p184, %p185
      %p187 = scmp.ne.s32.totalorder %s179, %s182
      %p188 = scmp.eq.s32.totalorder %s28, 0
      %p189 = por %p187, %p188
      %p190 = scmp.ne.s32.totalorder %s179, %s182
      %p191 = scmp.eq.s32.totalorder %s33, 1
      %p192 = por %p190, %p191
      %p193 = scmp.ne.s32.totalorder %s182, %s183
      %p194 = scmp.eq.s32.totalorder %s33, 0
      %p195 = por %p193, %p194
      %p196 = scmp.ne.s32.totalorder %s182, %s183
      %p197 = scmp.eq.s32.totalorder %s34, 1
      %p198 = por %p196, %p197
      %p200 = scmp.ne.s32.totalorder %s183, %s199
      %p201 = scmp.eq.s32.totalorder %s34, 0
      %p202 = por %p200, %p201
      %s203 = ssub.s32 %s28, %s35
      %p204 = scmp.eq.s32.totalorder %s203, 0
      %s206 = sadd.s32 %s205, 1
      %s207 = scalar_select %p204, %s205, %s206
      %p210 = pneg %p204
      %p211 = scmp.eq.s32.totalorder %s28, 1
      %p212 = por %p210, %p211
      %p213 = scmp.ne.s32.totalorder %s205, %s208
      %p214 = scmp.eq.s32.totalorder %s28, 0
      %p215 = por %p213, %p214
      %p216 = scmp.ne.s32.totalorder %s205, %s208
      %p217 = scmp.eq.s32.totalorder %s33, 1
      %p218 = por %p216, %p217
      %p219 = scmp.ne.s32.totalorder %s208, %s209
      %p220 = scmp.eq.s32.totalorder %s33, 0
      %p221 = por %p219, %p220
      %p222 = scmp.ne.s32.totalorder %s208, %s209
      %p223 = scmp.eq.s32.totalorder %s34, 1
      %p224 = por %p222, %p223
      %p226 = scmp.ne.s32.totalorder %s209, %s225
      %p227 = scmp.eq.s32.totalorder %s34, 0
      %p228 = por %p226, %p227
      %s229 = ssub.s32 %s28, %s35
      %p230 = scmp.eq.s32.totalorder %s229, 0
      %s232 = sadd.s32 %s231, 1
      %s233 = scalar_select %p230, %s231, %s232
      %p236 = pneg %p230
      %p237 = scmp.eq.s32.totalorder %s28, 1
      %p238 = por %p236, %p237
      %p239 = scmp.ne.s32.totalorder %s231, %s234
      %p240 = scmp.eq.s32.totalorder %s28, 0
      %p241 = por %p239, %p240
      %p242 = scmp.ne.s32.totalorder %s231, %s234
      %p243 = scmp.eq.s32.totalorder %s33, 1
      %p244 = por %p242, %p243
      %p245 = scmp.ne.s32.totalorder %s234, %s235
      %p246 = scmp.eq.s32.totalorder %s33, 0
      %p247 = por %p245, %p246
      %p248 = scmp.ne.s32.totalorder %s234, %s235
      %p249 = scmp.eq.s32.totalorder %s34, 1
      %p250 = por %p248, %p249
      %p252 = scmp.ne.s32.totalorder %s235, %s251
      %p253 = scmp.eq.s32.totalorder %s34, 0
      %p254 = por %p252, %p253
      %p255 = scmp.le.s32.totalorder 1, %s28
      %p256 = scmp.lt.s32.totalorder %s28, 3
      %p257 = pnand %p255, %p256
      %p258 = pneg %p257
      // Predicated region
      $region9: #{tpu_custom_call.1} parent=5 // pred_check
        _
      $region10: #{tpu_custom_call.1} parent=5 // pred_check_branch
        %260 = sbr.rel (%p257) target = $region12
      $region11: #{tpu_custom_call.1} parent=5 // pred_region
        %s261 = ssub.s32 %s28, 1
        // Predicated region
        $region13: #{tpu_custom_call.1} parent=11 // pred_check
          %p262 = pneg %p101
        $region14: #{tpu_custom_call.1} parent=11 // pred_check_branch
          %264 = sbr.rel (%p262) target = $region16
        $region15: #{tpu_custom_call.1} parent=11 // pred_region
          %s266 = ssub.s32 8192, 8192
          %267 = vsyncadd [#allocation6], %s266
          %s268 = sshll.u32 [#allocation7], 4
          %s269 = int_to_ptr.vmem [resolvable:$true] %s268
          %274 = dma.hbm_to_vmem [thread:$0]  %s2, 8192, %s269, [#allocation6], 512, 512, 32
        $region16: #{tpu_custom_call.1} parent=11 // pred_fallthru
          _
        // Predicated region
        $region17: #{tpu_custom_call.1} parent=11 // pred_check
          %p275 = pneg %p122
        $region18: #{tpu_custom_call.1} parent=11 // pred_check_branch
          %277 = sbr.rel (%p275) target = $region20
        $region19: #{tpu_custom_call.1} parent=11 // pred_region
          %s279 = ssub.s32 8192, 8192
          %280 = vsyncadd [#allocation9], %s279
          %s281 = sshll.u32 [#allocation8], 4
          %s282 = int_to_ptr.vmem [resolvable:$true] %s281
          %287 = dma.hbm_to_vmem [thread:$0]  %s3, 8192, %s282, [#allocation9], 512, 512, 32
        $region20: #{tpu_custom_call.1} parent=11 // pred_fallthru
          _
        // Predicated region
        $region21: #{tpu_custom_call.1} parent=11 // pred_check
          %p288 = pneg %p143
        $region22: #{tpu_custom_call.1} parent=11 // pred_check_branch
          %290 = sbr.rel (%p288) target = $region24
        $region23: #{tpu_custom_call.1} parent=11 // pred_region
          _
        $region24: #{tpu_custom_call.1} parent=11 // pred_fallthru
          _
      $region12: #{tpu_custom_call.1} parent=5 // pred_fallthru
        _
      %p291 = scmp.lt.s32.totalorder %s28, 2
      // Predicated region
      $region25: #{tpu_custom_call.1} parent=5 // pred_check
        %p292 = pneg %p291
      $region26: #{tpu_custom_call.1} parent=5 // pred_check_branch
        %294 = sbr.rel (%p292) target = $region28
      $region27: #{tpu_custom_call.1} parent=5 // pred_region
        // Predicated region
        $region29: #{tpu_custom_call.1} parent=27 // pred_check
          %p295 = pneg %p48
        $region30: #{tpu_custom_call.1} parent=27 // pred_check_branch
          %297 = sbr.rel (%p295) target = $region32
        $region31: #{tpu_custom_call.1} parent=27 // pred_region
          %s298 = sand.u32 %s38, 1
          %s299 = scalar_lea.sflag [#allocation3], %s298
          %s300 = sand.u32 %s38, 1
          %s301 = smul.addr %s300, 128
          %s302 = scalar_lea.vmem [#allocation2], %s301
          %s303 = smul.u32 16, %s28
          %s305 = ssub.s32 2048, 2048
          %306 = vsyncadd %s299, %s305
          %s307 = smul.addr %s303, 128
          %s308 = scalar_lea.hbm %s0, %s307
          %s309 = sshll.u32 %s302, 4
          %s310 = int_to_ptr.vmem [resolvable:$true] %s309
          %315 = dma.hbm_to_vmem [thread:$0]  %s308, 2048, %s310, %s299, 128, 128, 8
        $region32: #{tpu_custom_call.1} parent=27 // pred_fallthru
          _
        // Predicated region
        $region33: #{tpu_custom_call.1} parent=27 // pred_check
          %p316 = pneg %p74
        $region34: #{tpu_custom_call.1} parent=27 // pred_check_branch
          %318 = sbr.rel (%p316) target = $region36
        $region35: #{tpu_custom_call.1} parent=27 // pred_region
          %s319 = sand.u32 %s28, 1
          %s320 = scalar_lea.sflag [#allocation6], %s319
          %s321 = sand.u32 %s64, 1
          %s322 = smul.addr %s321, 512
          %s323 = scalar_lea.vmem [#allocation5], %s322
          %s324 = smul.u32 16, %s28
          %s326 = ssub.s32 8192, 8192
          %327 = vsyncadd %s320, %s326
          %s328 = smul.addr %s324, 4
          %s329 = smul.addr %s328, 128
          %s330 = scalar_lea.hbm %s1, %s329
          %s331 = sshll.u32 %s323, 4
          %s332 = int_to_ptr.vmem [resolvable:$true] %s331
          %337 = dma.hbm_to_vmem [thread:$0]  %s330, 8192, %s332, %s320, 512, 512, 32
        $region36: #{tpu_custom_call.1} parent=27 // pred_fallthru
          _
      $region28: #{tpu_custom_call.1} parent=5 // pred_fallthru
        _
      %p338 = scmp.le.s32.totalorder 1, %s28
      %p339 = scmp.lt.s32.totalorder %s28, 3
      %p340 = pnand %p338, %p339
      %p341 = pneg %p340
      // Predicated region
      $region37: #{tpu_custom_call.1} parent=5 // pred_check
        _
      $region38: #{tpu_custom_call.1} parent=5 // pred_check_branch
        %343 = sbr.rel (%p340) target = $region40
      $region39: #{tpu_custom_call.1} parent=5 // pred_region
        %s344 = ssub.s32 %s28, 1
        %s345 = sand.u32 %s41, 1
        %s346 = scalar_lea.sflag [#allocation3], %s345
        %s347 = sand.u32 %s41, 1
        %s348 = smul.addr %s347, 128
        %s349 = scalar_lea.vmem [#allocation2], %s348
        // Predicated region
        $region41: #{tpu_custom_call.1} parent=39 // pred_check
          %p350 = pneg %p54
        $region42: #{tpu_custom_call.1} parent=39 // pred_check_branch
          %352 = sbr.rel (%p350) target = $region44
        $region43: #{tpu_custom_call.1} parent=39 // pred_region
          %353 = dma.done %s346, 2048
        $region44: #{tpu_custom_call.1} parent=39 // pred_fallthru
          _
        %s354 = sand.u32 %s33, 1
        %s355 = scalar_lea.sflag [#allocation6], %s354
        %s356 = sand.u32 %s67, 1
        %s357 = smul.addr %s356, 512
        %s358 = scalar_lea.vmem [#allocation5], %s357
        // Predicated region
        $region45: #{tpu_custom_call.1} parent=39 // pred_check
          %p359 = pneg %p80
        $region46: #{tpu_custom_call.1} parent=39 // pred_check_branch
          %361 = sbr.rel (%p359) target = $region48
        $region47: #{tpu_custom_call.1} parent=39 // pred_region
          %362 = dma.done %s355, 8192
        $region48: #{tpu_custom_call.1} parent=39 // pred_fallthru
          _
        // Predicated region
        $region49: #{tpu_custom_call.1} parent=39 // pred_check
          %p363 = pneg %p101
        $region50: #{tpu_custom_call.1} parent=39 // pred_check_branch
          %365 = sbr.rel (%p363) target = $region52
        $region51: #{tpu_custom_call.1} parent=39 // pred_region
          %366 = dma.done [#allocation6], 8192
        $region52: #{tpu_custom_call.1} parent=39 // pred_fallthru
          _
        // Predicated region
        $region53: #{tpu_custom_call.1} parent=39 // pred_check
          %p367 = pneg %p122
        $region54: #{tpu_custom_call.1} parent=39 // pred_check_branch
          %369 = sbr.rel (%p367) target = $region56
        $region55: #{tpu_custom_call.1} parent=39 // pred_region
          %370 = dma.done [#allocation9], 8192
        $region56: #{tpu_custom_call.1} parent=39 // pred_fallthru
          _
        %s371 = sand.u32 %s41, 1
        %s372 = scalar_lea.sflag [#allocation3], %s371
        %s373 = sand.u32 %s41, 1
        %s374 = smul.addr %s373, 128
        %s375 = scalar_lea.vmem [#allocation2], %s374
        %p376 = pneg %p54
        %p377 = pneg %p51
        %s378 = sand.u32 %s33, 1
        %s379 = scalar_lea.sflag [#allocation6], %s378
        %s380 = sand.u32 %s67, 1
        %s381 = smul.addr %s380, 512
        %s382 = scalar_lea.vmem [#allocation5], %s381
        %p383 = pneg %p80
        %p384 = pneg %p77
        %p385 = pneg %p101
        %p386 = pneg %p98
        %p387 = pneg %p122
        %p388 = pneg %p119
        %p389 = pneg %p143
        %p390 = pneg %p140
        %p391 = pneg %p169
        %p392 = pneg %p166
        %s393 = sand.u32 %s156, 1
        %s394 = scalar_lea.sflag [#allocation4], %s393
        %s395 = sand.u32 %s156, 1
        %s396 = smul.addr %s395, 512
        %s397 = scalar_lea.vmem [#allocation10], %s396
        %p398 = pneg %p195
        %p399 = pneg %p192
        %s400 = smul.u32 16, %s33
        %p401 = scmp.lt.s32.totalorder %s400, 31
        %s402 = scalar_select %p401, %s400, 31
        %s403 = smul.addr %s402, 8
        %s404 = scalar_lea.vmem %s6, %s403
        %p405 = pneg %p221
        %p406 = pneg %p218
        %s407 = sand.u32 %s33, 1
        %s408 = scalar_lea.sflag [#allocation12], %s407
        %s409 = sand.u32 %s208, 1
        %s410 = smul.addr %s409, 512
        %s411 = scalar_lea.vmem [#allocation11], %s410
        %p412 = pneg %p247
        %p413 = pneg %p244
        %s414 = sand.u32 %s33, 1
        %s415 = scalar_lea.sflag [#allocation12], %s414
        %s416 = sand.u32 %s234, 1
        %s417 = smul.addr %s416, 512
        %s418 = scalar_lea.vmem [#allocation13], %s417
        %s419 = smul.u32 16, %s33
        %s420 = smul.u32 16, %s33
        %s421 = smul.u32 16, %s33
        %s422 = smul.u32 16, %s33
        %p423 = scmp.lt.s32.totalorder %s422, 31
        %s424 = scalar_select %p423, %s422, 31
        %s425 = smul.addr %s424, 8
        %s426 = scalar_lea.vmem %s6, %s425
        %s427 = smul.u32 16, %s33
        %s428 = smul.u32 16, %s33
        %s429 = smul.u32 16, %s33
        %v430 = vld [vmem:[%s349] sm:$0xff]
        %v431 = vld [vmem:[%s349 + $0x8] sm:$0xff]
        %v432 = vld [vmem:[%s349 + $0x10] sm:$0xff]
        %v433 = vld [vmem:[%s349 + $0x18] sm:$0xff]
        %v434 = vld [vmem:[%s349 + $0x20] sm:$0xff]
        %v435 = vld [vmem:[%s349 + $0x28] sm:$0xff]
        %v436 = vld [vmem:[%s349 + $0x30] sm:$0xff]
        %v437 = vld [vmem:[%s349 + $0x38] sm:$0xff]
        %v438 = vld [vmem:[%s349 + $0x40] sm:$0xff]
        %v439 = vld [vmem:[%s349 + $0x48] sm:$0xff]
        %v440 = vld [vmem:[%s349 + $0x50] sm:$0xff]
        %v441 = vld [vmem:[%s349 + $0x58] sm:$0xff]
        %v442 = vld [vmem:[%s349 + $0x60] sm:$0xff]
        %v443 = vld [vmem:[%s349 + $0x68] sm:$0xff]
        %v444 = vld [vmem:[%s349 + $0x70] sm:$0xff]
        %v445 = vld [vmem:[%s349 + $0x78] sm:$0xff]
        %v446 = vmul.f32 %v430, %v430
        %v447 = vmul.f32 %v431, %v431
        %v448 = vmul.f32 %v432, %v432
        %v449 = vmul.f32 %v433, %v433
        %v450 = vmul.f32 %v434, %v434
        %v451 = vmul.f32 %v435, %v435
        %v452 = vmul.f32 %v436, %v436
        %v453 = vmul.f32 %v437, %v437
        %v454 = vmul.f32 %v438, %v438
        %v455 = vmul.f32 %v439, %v439
        %v456 = vmul.f32 %v440, %v440
        %v457 = vmul.f32 %v441, %v441
        %v458 = vmul.f32 %v442, %v442
        %v459 = vmul.f32 %v443, %v443
        %v460 = vmul.f32 %v444, %v444
        %v461 = vmul.f32 %v445, %v445
        %v462 = vld [vmem:[#allocation7] sm:$0xff]
        %v463 = vld [vmem:[#allocation7 + $0x8] sm:$0xff]
        %v464 = vld [vmem:[#allocation7 + $0x10] sm:$0xff]
        %v465 = vld [vmem:[#allocation7 + $0x18] sm:$0xff]
        %v466 = vld [vmem:[#allocation7 + $0x20] sm:$0xff]
        %v467 = vld [vmem:[#allocation7 + $0x28] sm:$0xff]
        %v468 = vld [vmem:[#allocation7 + $0x30] sm:$0xff]
        %v469 = vld [vmem:[#allocation7 + $0x38] sm:$0xff]
        %v470 = vld [vmem:[#allocation7 + $0x40] sm:$0xff]
        %v471 = vld [vmem:[#allocation7 + $0x48] sm:$0xff]
        %v472 = vld [vmem:[#allocation7 + $0x50] sm:$0xff]
        %v473 = vld [vmem:[#allocation7 + $0x58] sm:$0xff]
        %v474 = vld [vmem:[#allocation7 + $0x60] sm:$0xff]
        %v475 = vld [vmem:[#allocation7 + $0x68] sm:$0xff]
        %v476 = vld [vmem:[#allocation7 + $0x70] sm:$0xff]
        %v477 = vld [vmem:[#allocation7 + $0x78] sm:$0xff]
        %v478 = vld [vmem:[#allocation7 + $0x80] sm:$0xff]
        %v479 = vld [vmem:[#allocation7 + $0x88] sm:$0xff]
        %v480 = vld [vmem:[#allocation7 + $0x90] sm:$0xff]
        %v481 = vld [vmem:[#allocation7 + $0x98] sm:$0xff]
        %v482 = vld [vmem:[#allocation7 + $0xa0] sm:$0xff]
        %v483 = vld [vmem:[#allocation7 + $0xa8] sm:$0xff]
        %v484 = vld [vmem:[#allocation7 + $0xb0] sm:$0xff]
        %v485 = vld [vmem:[#allocation7 + $0xb8] sm:$0xff]
        %v486 = vld [vmem:[#allocation7 + $0xc0] sm:$0xff]
        %v487 = vld [vmem:[#allocation7 + $0xc8] sm:$0xff]
        %v488 = vld [vmem:[#allocation7 + $0xd0] sm:$0xff]
        %v489 = vld [vmem:[#allocation7 + $0xd8] sm:$0xff]
        %v490 = vld [vmem:[#allocation7 + $0xe0] sm:$0xff]
        %v491 = vld [vmem:[#allocation7 + $0xe8] sm:$0xff]
        %v492 = vld [vmem:[#allocation7 + $0xf0] sm:$0xff]
        %v493 = vld [vmem:[#allocation7 + $0xf8] sm:$0xff]
        %v494 = vld [vmem:[#allocation7 + $0x100] sm:$0xff]
        %v495 = vld [vmem:[#allocation7 + $0x108] sm:$0xff]
        %v496 = vld [vmem:[#allocation7 + $0x110] sm:$0xff]
        %v497 = vld [vmem:[#allocation7 + $0x118] sm:$0xff]
        %v498 = vld [vmem:[#allocation7 + $0x120] sm:$0xff]
        %v499 = vld [vmem:[#allocation7 + $0x128] sm:$0xff]
        %v500 = vld [vmem:[#allocation7 + $0x130] sm:$0xff]
        %v501 = vld [vmem:[#allocation7 + $0x138] sm:$0xff]
        %v502 = vld [vmem:[#allocation7 + $0x140] sm:$0xff]
        %v503 = vld [vmem:[#allocation7 + $0x148] sm:$0xff]
        %v504 = vld [vmem:[#allocation7 + $0x150] sm:$0xff]
        %v505 = vld [vmem:[#allocation7 + $0x158] sm:$0xff]
        %v506 = vld [vmem:[#allocation7 + $0x160] sm:$0xff]
        %v507 = vld [vmem:[#allocation7 + $0x168] sm:$0xff]
        %v508 = vld [vmem:[#allocation7 + $0x170] sm:$0xff]
        %v509 = vld [vmem:[#allocation7 + $0x178] sm:$0xff]
        %v510 = vld [vmem:[#allocation7 + $0x180] sm:$0xff]
        %v511 = vld [vmem:[#allocation7 + $0x188] sm:$0xff]
        %v512 = vld [vmem:[#allocation7 + $0x190] sm:$0xff]
        %v513 = vld [vmem:[#allocation7 + $0x198] sm:$0xff]
        %v514 = vld [vmem:[#allocation7 + $0x1a0] sm:$0xff]
        %v515 = vld [vmem:[#allocation7 + $0x1a8] sm:$0xff]
        %v516 = vld [vmem:[#allocation7 + $0x1b0] sm:$0xff]
        %v517 = vld [vmem:[#allocation7 + $0x1b8] sm:$0xff]
        %v518 = vld [vmem:[#allocation7 + $0x1c0] sm:$0xff]
        %v519 = vld [vmem:[#allocation7 + $0x1c8] sm:$0xff]
        %v520 = vld [vmem:[#allocation7 + $0x1d0] sm:$0xff]
        %v521 = vld [vmem:[#allocation7 + $0x1d8] sm:$0xff]
        %v522 = vld [vmem:[#allocation7 + $0x1e0] sm:$0xff]
        %v523 = vld [vmem:[#allocation7 + $0x1e8] sm:$0xff]
        %v524 = vld [vmem:[#allocation7 + $0x1f0] sm:$0xff]
        %v525 = vld [vmem:[#allocation7 + $0x1f8] sm:$0xff]
        %v526 = vld [vmem:[#allocation8] sm:$0xff]
        %v527 = vld [vmem:[#allocation8 + $0x8] sm:$0xff]
        %v528 = vld [vmem:[#allocation8 + $0x10] sm:$0xff]
        %v529 = vld [vmem:[#allocation8 + $0x18] sm:$0xff]
        %v530 = vld [vmem:[#allocation8 + $0x20] sm:$0xff]
        %v531 = vld [vmem:[#allocation8 + $0x28] sm:$0xff]
        %v532 = vld [vmem:[#allocation8 + $0x30] sm:$0xff]
        %v533 = vld [vmem:[#allocation8 + $0x38] sm:$0xff]
        %v534 = vld [vmem:[#allocation8 + $0x40] sm:$0xff]
        %v535 = vld [vmem:[#allocation8 + $0x48] sm:$0xff]
        %v536 = vld [vmem:[#allocation8 + $0x50] sm:$0xff]
        %v537 = vld [vmem:[#allocation8 + $0x58] sm:$0xff]
        %v538 = vld [vmem:[#allocation8 + $0x60] sm:$0xff]
        %v539 = vld [vmem:[#allocation8 + $0x68] sm:$0xff]
        %v540 = vld [vmem:[#allocation8 + $0x70] sm:$0xff]
        %v541 = vld [vmem:[#allocation8 + $0x78] sm:$0xff]
        %v542 = vld [vmem:[#allocation8 + $0x80] sm:$0xff]
        %v543 = vld [vmem:[#allocation8 + $0x88] sm:$0xff]
        %v544 = vld [vmem:[#allocation8 + $0x90] sm:$0xff]
        %v545 = vld [vmem:[#allocation8 + $0x98] sm:$0xff]
        %v546 = vld [vmem:[#allocation8 + $0xa0] sm:$0xff]
        %v547 = vld [vmem:[#allocation8 + $0xa8] sm:$0xff]
        %v548 = vld [vmem:[#allocation8 + $0xb0] sm:$0xff]
        %v549 = vld [vmem:[#allocation8 + $0xb8] sm:$0xff]
        %v550 = vld [vmem:[#allocation8 + $0xc0] sm:$0xff]
        %v551 = vld [vmem:[#allocation8 + $0xc8] sm:$0xff]
        %v552 = vld [vmem:[#allocation8 + $0xd0] sm:$0xff]
        %v553 = vld [vmem:[#allocation8 + $0xd8] sm:$0xff]
        %v554 = vld [vmem:[#allocation8 + $0xe0] sm:$0xff]
        %v555 = vld [vmem:[#allocation8 + $0xe8] sm:$0xff]
        %v556 = vld [vmem:[#allocation8 + $0xf0] sm:$0xff]
        %v557 = vld [vmem:[#allocation8 + $0xf8] sm:$0xff]
        %v558 = vld [vmem:[#allocation8 + $0x100] sm:$0xff]
        %v559 = vld [vmem:[#allocation8 + $0x108] sm:$0xff]
        %v560 = vld [vmem:[#allocation8 + $0x110] sm:$0xff]
        %v561 = vld [vmem:[#allocation8 + $0x118] sm:$0xff]
        %v562 = vld [vmem:[#allocation8 + $0x120] sm:$0xff]
        %v563 = vld [vmem:[#allocation8 + $0x128] sm:$0xff]
        %v564 = vld [vmem:[#allocation8 + $0x130] sm:$0xff]
        %v565 = vld [vmem:[#allocation8 + $0x138] sm:$0xff]
        %v566 = vld [vmem:[#allocation8 + $0x140] sm:$0xff]
        %v567 = vld [vmem:[#allocation8 + $0x148] sm:$0xff]
        %v568 = vld [vmem:[#allocation8 + $0x150] sm:$0xff]
        %v569 = vld [vmem:[#allocation8 + $0x158] sm:$0xff]
        %v570 = vld [vmem:[#allocation8 + $0x160] sm:$0xff]
        %v571 = vld [vmem:[#allocation8 + $0x168] sm:$0xff]
        %v572 = vld [vmem:[#allocation8 + $0x170] sm:$0xff]
        %v573 = vld [vmem:[#allocation8 + $0x178] sm:$0xff]
        %v574 = vld [vmem:[#allocation8 + $0x180] sm:$0xff]
        %v575 = vld [vmem:[#allocation8 + $0x188] sm:$0xff]
        %v576 = vld [vmem:[#allocation8 + $0x190] sm:$0xff]
        %v577 = vld [vmem:[#allocation8 + $0x198] sm:$0xff]
        %v578 = vld [vmem:[#allocation8 + $0x1a0] sm:$0xff]
        %v579 = vld [vmem:[#allocation8 + $0x1a8] sm:$0xff]
        %v580 = vld [vmem:[#allocation8 + $0x1b0] sm:$0xff]
        %v581 = vld [vmem:[#allocation8 + $0x1b8] sm:$0xff]
        %v582 = vld [vmem:[#allocation8 + $0x1c0] sm:$0xff]
        %v583 = vld [vmem:[#allocation8 + $0x1c8] sm:$0xff]
        %v584 = vld [vmem:[#allocation8 + $0x1d0] sm:$0xff]
        %v585 = vld [vmem:[#allocation8 + $0x1d8] sm:$0xff]
        %v586 = vld [vmem:[#allocation8 + $0x1e0] sm:$0xff]
        %v587 = vld [vmem:[#allocation8 + $0x1e8] sm:$0xff]
        %v588 = vld [vmem:[#allocation8 + $0x1f0] sm:$0xff]
        %v589 = vld [vmem:[#allocation8 + $0x1f8] sm:$0xff]
        %590 = vmatprep.subr.mxu0 %v527
        %591 = vmatpush1.msra.mxu0 %v526
        %592 = vmatprep.subr.mxu0 %v531
        %593 = vmatpush1.msra.mxu0 %v530
        %594 = vmatprep.subr.mxu0 %v535
        %595 = vmatpush1.msra.mxu0 %v534
        %596 = vmatprep.subr.mxu0 %v539
        %597 = vmatpush1.msra.mxu0 %v538
        %598 = vmatprep.subr.mxu0 %v543
        %599 = vmatpush1.msra.mxu0 %v542
        %600 = vmatprep.subr.mxu0 %v547
        %601 = vmatpush1.msra.mxu0 %v546
        %602 = vmatprep.subr.mxu0 %v551
        %603 = vmatpush1.msra.mxu0 %v550
        %604 = vmatprep.subr.mxu0 %v555
        %605 = vmatpush1.msra.mxu0 %v554
        %606 = vmatprep.subr.mxu0 %v559
        %607 = vmatpush1.msra.mxu0 %v558
        %608 = vmatprep.subr.mxu0 %v563
        %609 = vmatpush1.msra.mxu0 %v562
        %610 = vmatprep.subr.mxu0 %v567
        %611 = vmatpush1.msra.mxu0 %v566
        %612 = vmatprep.subr.mxu0 %v571
        %613 = vmatpush1.msra.mxu0 %v570
        %614 = vmatprep.subr.mxu0 %v575
        %615 = vmatpush1.msra.mxu0 %v574
        %616 = vmatprep.subr.mxu0 %v579
        %617 = vmatpush1.msra.mxu0 %v578
        %618 = vmatprep.subr.mxu0 %v583
        %619 = vmatpush1.msra.mxu0 %v582
        %620 = vmatprep.subr.mxu0 %v587
        %621 = vmatpush1.msra.mxu0 %v586
        %622 = vmatprep.subr.mxu0 0.0
        %623 = vmatpush1.msra.mxu0 0.0
        %624 = vmatprep.subr.mxu0 0.0
        %625 = vmatpush1.msra.mxu0 0.0
        %626 = vmatprep.subr.mxu0 0.0
        %627 = vmatpush1.msra.mxu0 0.0
        %628 = vmatprep.subr.mxu0 0.0
        %629 = vmatpush1.msra.mxu0 0.0
        %630 = vmatprep.subr.mxu0 0.0
        %631 = vmatpush1.msra.mxu0 0.0
        %632 = vmatprep.subr.mxu0 0.0
        %633 = vmatpush1.msra.mxu0 0.0
        %634 = vmatprep.subr.mxu0 0.0
        %635 = vmatpush1.msra.mxu0 0.0
        %636 = vmatprep.subr.mxu0 0.0
        %637 = vmatpush1.msra.mxu0 0.0
        %638 = vmatprep.subr.mxu0 0.0
        %639 = vmatpush1.msra.mxu0 0.0
        %640 = vmatprep.subr.mxu0 0.0
        %641 = vmatpush1.msra.mxu0 0.0
        %642 = vmatprep.subr.mxu0 0.0
        %643 = vmatpush1.msra.mxu0 0.0
        %644 = vmatprep.subr.mxu0 0.0
        %645 = vmatpush1.msra.mxu0 0.0
        %646 = vmatprep.subr.mxu0 0.0
        %647 = vmatpush1.msra.mxu0 0.0
        %648 = vmatprep.subr.mxu0 0.0
        %649 = vmatpush1.msra.mxu0 0.0
        %650 = vmatprep.subr.mxu0 0.0
        %651 = vmatpush1.msra.mxu0 0.0
        %652 = vmatprep.subr.mxu0 0.0
        %653 = vmatpush1.msra.mxu0 0.0
        %654 = vmatprep.mubr.f32.mxu0 0.0
        %655 = vmatmul.mubr.f32.gmra.mrb[0].mxu0 %v446
        %v656 = vpop.f32.mrb[0].mxu0
        %v657 = vadd.f32 0.0, %v656
        %v658 = vpop.f32.mrb[0].mxu0
        %v659 = vadd.f32 0.0, %v658
        %660 = vmatprep.mubr.f32.mxu0 0.0
        %661 = vmatmul.mubr.f32.gmra.mrb[0].mxu0 %v447
        %v662 = vpop.f32.mrb[0].mxu0
        %v663 = vadd.f32 0.0, %v662
        %v664 = vpop.f32.mrb[0].mxu0
        %v665 = vadd.f32 0.0, %v664
        %666 = vmatprep.mubr.f32.mxu0 0.0
        %667 = vmatmul.mubr.f32.gmra.mrb[0].mxu0 %v448
        %v668 = vpop.f32.mrb[0].mxu0
        %v669 = vadd.f32 0.0, %v668
        %v670 = vpop.f32.mrb[0].mxu0
        %v671 = vadd.f32 0.0, %v670
        %672 = vmatprep.mubr.f32.mxu0 0.0
        %673 = vmatmul.mubr.f32.gmra.mrb[0].mxu0 %v449
        %v674 = vpop.f32.mrb[0].mxu0
        %v675 = vadd.f32 0.0, %v674
        %v676 = vpop.f32.mrb[0].mxu0
        %v677 = vadd.f32 0.0, %v676
        %678 = vmatprep.mubr.f32.mxu0 0.0
        %679 = vmatmul.mubr.f32.gmra.mrb[0].mxu0 %v450
        %v680 = vpop.f32.mrb[0].mxu0
        %v681 = vadd.f32 0.0, %v680
        %v682 = vpop.f32.mrb[0].mxu0
        %v683 = vadd.f32 0.0, %v682
        %684 = vmatprep.mubr.f32.mxu0 0.0
        %685 = vmatmul.mubr.f32.gmra.mrb[0].mxu0 %v451
        %v686 = vpop.f32.mrb[0].mxu0
        %v687 = vadd.f32 0.0, %v686
        %v688 = vpop.f32.mrb[0].mxu0
        %v689 = vadd.f32 0.0, %v688
        %690 = vmatprep.mubr.f32.mxu0 0.0
        %691 = vmatmul.mubr.f32.gmra.mrb[0].mxu0 %v452
        %v692 = vpop.f32.mrb[0].mxu0
        %v693 = vadd.f32 0.0, %v692
        %v694 = vpop.f32.mrb[0].mxu0
        %v695 = vadd.f32 0.0, %v694
        %696 = vmatprep.mubr.f32.mxu0 0.0
        %697 = vmatmul.mubr.f32.gmra.mrb[0].mxu0 %v453
        %v698 = vpop.f32.mrb[0].mxu0
        %v699 = vadd.f32 0.0, %v698
        %v700 = vpop.f32.mrb[0].mxu0
        %v701 = vadd.f32 0.0, %v700
        %702 = vmatprep.mubr.f32.mxu0 0.0
        %703 = vmatmul.mubr.f32.gmra.mrb[0].mxu0 %v454
        %v704 = vpop.f32.mrb[0].mxu0
        %v705 = vadd.f32 0.0, %v704
        %v706 = vpop.f32.mrb[0].mxu0
        %v707 = vadd.f32 0.0, %v706
        %708 = vmatprep.mubr.f32.mxu0 0.0
        %709 = vmatmul.mubr.f32.gmra.mrb[0].mxu0 %v455
        %v710 = vpop.f32.mrb[0].mxu0
        %v711 = vadd.f32 0.0, %v710
        %v712 = vpop.f32.mrb[0].mxu0
        %v713 = vadd.f32 0.0, %v712
        %714 = vmatprep.mubr.f32.mxu0 0.0
        %715 = vmatmul.mubr.f32.gmra.mrb[0].mxu0 %v456
        %v716 = vpop.f32.mrb[0].mxu0
        %v717 = vadd.f32 0.0, %v716
        %v718 = vpop.f32.mrb[0].mxu0
        %v719 = vadd.f32 0.0, %v718
        %720 = vmatprep.mubr.f32.mxu0 0.0
        %721 = vmatmul.mubr.f32.gmra.mrb[0].mxu0 %v457
        %v722 = vpop.f32.mrb[0].mxu0
        %v723 = vadd.f32 0.0, %v722
        %v724 = vpop.f32.mrb[0].mxu0
        %v725 = vadd.f32 0.0, %v724
        %726 = vmatprep.mubr.f32.mxu0 0.0
        %727 = vmatmul.mubr.f32.gmra.mrb[0].mxu0 %v458
        %v728 = vpop.f32.mrb[0].mxu0
        %v729 = vadd.f32 0.0, %v728
        %v730 = vpop.f32.mrb[0].mxu0
        %v731 = vadd.f32 0.0, %v730
        %732 = vmatprep.mubr.f32.mxu0 0.0
        %733 = vmatmul.mubr.f32.gmra.mrb[0].mxu0 %v459
        %v734 = vpop.f32.mrb[0].mxu0
        %v735 = vadd.f32 0.0, %v734
        %v736 = vpop.f32.mrb[0].mxu0
        %v737 = vadd.f32 0.0, %v736
        %738 = vmatprep.mubr.f32.mxu0 0.0
        %739 = vmatmul.mubr.f32.gmra.mrb[0].mxu0 %v460
        %v740 = vpop.f32.mrb[0].mxu0
        %v741 = vadd.f32 0.0, %v740
        %v742 = vpop.f32.mrb[0].mxu0
        %v743 = vadd.f32 0.0, %v742
        %744 = vmatprep.mubr.f32.mxu0 0.0
        %745 = vmatmul.mubr.f32.gmra.mrb[0].mxu0 %v461
        %v746 = vpop.f32.mrb[0].mxu0
        %v747 = vadd.f32 0.0, %v746
        %v748 = vpop.f32.mrb[0].mxu0
        %v749 = vadd.f32 0.0, %v748
        %750 = vdwg.mxu0
        %751 = vmatprep.subr.mxu0 %v529
        %752 = vmatpush1.msra.mxu0 %v528
        %753 = vmatprep.subr.mxu0 %v533
        %754 = vmatpush1.msra.mxu0 %v532
        %755 = vmatprep.subr.mxu0 %v537
        %756 = vmatpush1.msra.mxu0 %v536
        %757 = vmatprep.subr.mxu0 %v541
        %758 = vmatpush1.msra.mxu0 %v540
        %759 = vmatprep.subr.mxu0 %v545
        %760 = vmatpush1.msra.mxu0 %v544
        %761 = vmatprep.subr.mxu0 %v549
        %762 = vmatpush1.msra.mxu0 %v548
        %763 = vmatprep.subr.mxu0 %v553
        %764 = vmatpush1.msra.mxu0 %v552
        %765 = vmatprep.subr.mxu0 %v557
        %766 = vmatpush1.msra.mxu0 %v556
        %767 = vmatprep.subr.mxu0 %v561
        %768 = vmatpush1.msra.mxu0 %v560
        %769 = vmatprep.subr.mxu0 %v565
        %770 = vmatpush1.msra.mxu0 %v564
        %771 = vmatprep.subr.mxu0 %v569
        %772 = vmatpush1.msra.mxu0 %v568
        %773 = vmatprep.subr.mxu0 %v573
        %774 = vmatpush1.msra.mxu0 %v572
        %775 = vmatprep.subr.mxu0 %v577
        %776 = vmatpush1.msra.mxu0 %v576
        %777 = vmatprep.subr.mxu0 %v581
        %778 = vmatpush1.msra.mxu0 %v580
        %779 = vmatprep.subr.mxu0 %v585
        %780 = vmatpush1.msra.mxu0 %v584
        %781 = vmatprep.subr.mxu0 %v589
        %782 = vmatpush1.msra.mxu0 %v588
        %783 = vmatprep.subr.mxu0 0.0
        %784 = vmatpush1.msra.mxu0 0.0
        %785 = vmatprep.subr.mxu0 0.0
        %786 = vmatpush1.msra.mxu0 0.0
        %787 = vmatprep.subr.mxu0 0.0
        %788 = vmatpush1.msra.mxu0 0.0
        %789 = vmatprep.subr.mxu0 0.0
        %790 = vmatpush1.msra.mxu0 0.0
        %791 = vmatprep.subr.mxu0 0.0
        %792 = vmatpush1.msra.mxu0 0.0
        %793 = vmatprep.subr.mxu0 0.0
        %794 = vmatpush1.msra.mxu0 0.0
        %795 = vmatprep.subr.mxu0 0.0
        %796 = vmatpush1.msra.mxu0 0.0
        %797 = vmatprep.subr.mxu0 0.0
        %798 = vmatpush1.msra.mxu0 0.0
        %799 = vmatprep.subr.mxu0 0.0
        %800 = vmatpush1.msra.mxu0 0.0
        %801 = vmatprep.subr.mxu0 0.0
        %802 = vmatpush1.msra.mxu0 0.0
        %803 = vmatprep.subr.mxu0 0.0
        %804 = vmatpush1.msra.mxu0 0.0
        %805 = vmatprep.subr.mxu0 0.0
        %806 = vmatpush1.msra.mxu0 0.0
        %807 = vmatprep.subr.mxu0 0.0
        %808 = vmatpush1.msra.mxu0 0.0
        %809 = vmatprep.subr.mxu0 0.0
        %810 = vmatpush1.msra.mxu0 0.0
        %811 = vmatprep.subr.mxu0 0.0
        %812 = vmatpush1.msra.mxu0 0.0
        %813 = vmatprep.subr.mxu0 0.0
        %814 = vmatpush1.msra.mxu0 0.0
        %815 = vmatprep.mubr.f32.mxu0 0.0
        %816 = vmatmul.mubr.f32.gmra.mrb[0].mxu0 %v446
        %v817 = vpop.f32.mrb[0].mxu0
        %v818 = vadd.f32 0.0, %v817
        %v819 = vpop.f32.mrb[0].mxu0
        %v820 = vadd.f32 0.0, %v819
        %821 = vmatprep.mubr.f32.mxu0 0.0
        %822 = vmatmul.mubr.f32.gmra.mrb[0].mxu0 %v447
        %v823 = vpop.f32.mrb[0].mxu0
        %v824 = vadd.f32 0.0, %v823
        %v825 = vpop.f32.mrb[0].mxu0
        %v826 = vadd.f32 0.0, %v825
        %827 = vmatprep.mubr.f32.mxu0 0.0
        %828 = vmatmul.mubr.f32.gmra.mrb[0].mxu0 %v448
        %v829 = vpop.f32.mrb[0].mxu0
        %v830 = vadd.f32 0.0, %v829
        %v831 = vpop.f32.mrb[0].mxu0
        %v832 = vadd.f32 0.0, %v831
        %833 = vmatprep.mubr.f32.mxu0 0.0
        %834 = vmatmul.mubr.f32.gmra.mrb[0].mxu0 %v449
        %v835 = vpop.f32.mrb[0].mxu0
        %v836 = vadd.f32 0.0, %v835
        %v837 = vpop.f32.mrb[0].mxu0
        %v838 = vadd.f32 0.0, %v837
        %839 = vmatprep.mubr.f32.mxu0 0.0
        %840 = vmatmul.mubr.f32.gmra.mrb[0].mxu0 %v450
        %v841 = vpop.f32.mrb[0].mxu0
        %v842 = vadd.f32 0.0, %v841
        %v843 = vpop.f32.mrb[0].mxu0
        %v844 = vadd.f32 0.0, %v843
        %845 = vmatprep.mubr.f32.mxu0 0.0
        %846 = vmatmul.mubr.f32.gmra.mrb[0].mxu0 %v451
        %v847 = vpop.f32.mrb[0].mxu0
        %v848 = vadd.f32 0.0, %v847
        %v849 = vpop.f32.mrb[0].mxu0
        %v850 = vadd.f32 0.0, %v849
        %851 = vmatprep.mubr.f32.mxu0 0.0
        %852 = vmatmul.mubr.f32.gmra.mrb[0].mxu0 %v452
        %v853 = vpop.f32.mrb[0].mxu0
        %v854 = vadd.f32 0.0, %v853
        %v855 = vpop.f32.mrb[0].mxu0
        %v856 = vadd.f32 0.0, %v855
        %857 = vmatprep.mubr.f32.mxu0 0.0
        %858 = vmatmul.mubr.f32.gmra.mrb[0].mxu0 %v453
        %v859 = vpop.f32.mrb[0].mxu0
        %v860 = vadd.f32 0.0, %v859
        %v861 = vpop.f32.mrb[0].mxu0
        %v862 = vadd.f32 0.0, %v861
        %863 = vmatprep.mubr.f32.mxu0 0.0
        %864 = vmatmul.mubr.f32.gmra.mrb[0].mxu0 %v454
        %v865 = vpop.f32.mrb[0].mxu0
        %v866 = vadd.f32 0.0, %v865
        %v867 = vpop.f32.mrb[0].mxu0
        %v868 = vadd.f32 0.0, %v867
        %869 = vmatprep.mubr.f32.mxu0 0.0
        %870 = vmatmul.mubr.f32.gmra.mrb[0].mxu0 %v455
        %v871 = vpop.f32.mrb[0].mxu0
        %v872 = vadd.f32 0.0, %v871
        %v873 = vpop.f32.mrb[0].mxu0
        %v874 = vadd.f32 0.0, %v873
        %875 = vmatprep.mubr.f32.mxu0 0.0
        %876 = vmatmul.mubr.f32.gmra.mrb[0].mxu0 %v456
        %v877 = vpop.f32.mrb[0].mxu0
        %v878 = vadd.f32 0.0, %v877
        %v879 = vpop.f32.mrb[0].mxu0
        %v880 = vadd.f32 0.0, %v879
        %881 = vmatprep.mubr.f32.mxu0 0.0
        %882 = vmatmul.mubr.f32.gmra.mrb[0].mxu0 %v457
        %v883 = vpop.f32.mrb[0].mxu0
        %v884 = vadd.f32 0.0, %v883
        %v885 = vpop.f32.mrb[0].mxu0
        %v886 = vadd.f32 0.0, %v885
        %887 = vmatprep.mubr.f32.mxu0 0.0
        %888 = vmatmul.mubr.f32.gmra.mrb[0].mxu0 %v458
        %v889 = vpop.f32.mrb[0].mxu0
        %v890 = vadd.f32 0.0, %v889
        %v891 = vpop.f32.mrb[0].mxu0
        %v892 = vadd.f32 0.0, %v891
        %893 = vmatprep.mubr.f32.mxu0 0.0
        %894 = vmatmul.mubr.f32.gmra.mrb[0].mxu0 %v459
        %v895 = vpop.f32.mrb[0].mxu0
        %v896 = vadd.f32 0.0, %v895
        %v897 = vpop.f32.mrb[0].mxu0
        %v898 = vadd.f32 0.0, %v897
        %899 = vmatprep.mubr.f32.mxu0 0.0
        %900 = vmatmul.mubr.f32.gmra.mrb[0].mxu0 %v460
        %v901 = vpop.f32.mrb[0].mxu0
        %v902 = vadd.f32 0.0, %v901
        %v903 = vpop.f32.mrb[0].mxu0
        %v904 = vadd.f32 0.0, %v903
        %905 = vmatprep.mubr.f32.mxu0 0.0
        %906 = vmatmul.mubr.f32.gmra.mrb[0].mxu0 %v461
        %v907 = vpop.f32.mrb[0].mxu0
        %v908 = vadd.f32 0.0, %v907
        %v909 = vpop.f32.mrb[0].mxu0
        %v910 = vadd.f32 0.0, %v909
        %911 = vdwg.mxu0
        %912 = vmatprep.subr.mxu0 %v463
        %913 = vmatpush1.msra.mxu0 %v462
        %914 = vmatprep.subr.mxu0 %v467
        %915 = vmatpush1.msra.mxu0 %v466
        %916 = vmatprep.subr.mxu0 %v471
        %917 = vmatpush1.msra.mxu0 %v470
        %918 = vmatprep.subr.mxu0 %v475
        %919 = vmatpush1.msra.mxu0 %v474
        %920 = vmatprep.subr.mxu0 %v479
        %921 = vmatpush1.msra.mxu0 %v478
        %922 = vmatprep.subr.mxu0 %v483
        %923 = vmatpush1.msra.mxu0 %v482
        %924 = vmatprep.subr.mxu0 %v487
        %925 = vmatpush1.msra.mxu0 %v486
        %926 = vmatprep.subr.mxu0 %v491
        %927 = vmatpush1.msra.mxu0 %v490
        %928 = vmatprep.subr.mxu0 %v495
        %929 = vmatpush1.msra.mxu0 %v494
        %930 = vmatprep.subr.mxu0 %v499
        %931 = vmatpush1.msra.mxu0 %v498
        %932 = vmatprep.subr.mxu0 %v503
        %933 = vmatpush1.msra.mxu0 %v502
        %934 = vmatprep.subr.mxu0 %v507
        %935 = vmatpush1.msra.mxu0 %v506
        %936 = vmatprep.subr.mxu0 %v511
        %937 = vmatpush1.msra.mxu0 %v510
        %938 = vmatprep.subr.mxu0 %v515
        %939 = vmatpush1.msra.mxu0 %v514
        %940 = vmatprep.subr.mxu0 %v519
        %941 = vmatpush1.msra.mxu0 %v518
        %942 = vmatprep.subr.mxu0 %v523
        %943 = vmatpush1.msra.mxu0 %v522
        %944 = vmatprep.subr.mxu0 0.0
        %945 = vmatpush1.msra.mxu0 0.0
        %946 = vmatprep.subr.mxu0 0.0
        %947 = vmatpush1.msra.mxu0 0.0
        %948 = vmatprep.subr.mxu0 0.0
        %949 = vmatpush1.msra.mxu0 0.0
        %950 = vmatprep.subr.mxu0 0.0
        %951 = vmatpush1.msra.mxu0 0.0
        %952 = vmatprep.subr.mxu0 0.0
        %953 = vmatpush1.msra.mxu0 0.0
        %954 = vmatprep.subr.mxu0 0.0
        %955 = vmatpush1.msra.mxu0 0.0
        %956 = vmatprep.subr.mxu0 0.0
        %957 = vmatpush1.msra.mxu0 0.0
        %958 = vmatprep.subr.mxu0 0.0
        %959 = vmatpush1.msra.mxu0 0.0
        %960 = vmatprep.subr.mxu0 0.0
        %961 = vmatpush1.msra.mxu0 0.0
        %962 = vmatprep.subr.mxu0 0.0
        %963 = vmatpush1.msra.mxu0 0.0
        %964 = vmatprep.subr.mxu0 0.0
        %965 = vmatpush1.msra.mxu0 0.0
        %966 = vmatprep.subr.mxu0 0.0
        %967 = vmatpush1.msra.mxu0 0.0
        %968 = vmatprep.subr.mxu0 0.0
        %969 = vmatpush1.msra.mxu0 0.0
        %970 = vmatprep.subr.mxu0 0.0
        %971 = vmatpush1.msra.mxu0 0.0
        %972 = vmatprep.subr.mxu0 0.0
        %973 = vmatpush1.msra.mxu0 0.0
        %974 = vmatprep.subr.mxu0 0.0
        %975 = vmatpush1.msra.mxu0 0.0
        %976 = vmatprep.mubr.f32.mxu0 0.0
        %977 = vmatmul.mubr.f32.gmra.mrb[0].mxu0 %v430
        %v978 = vpop.f32.mrb[0].mxu0
        %v979 = vadd.f32 %v657, %v978
        %v980 = vpop.f32.mrb[0].mxu0
        %v981 = vadd.f32 %v659, %v980
        %982 = vmatprep.mubr.f32.mxu0 0.0
        %983 = vmatmul.mubr.f32.gmra.mrb[0].mxu0 %v431
        %v984 = vpop.f32.mrb[0].mxu0
        %v985 = vadd.f32 %v663, %v984
        %v986 = vpop.f32.mrb[0].mxu0
        %v987 = vadd.f32 %v665, %v986
        %988 = vmatprep.mubr.f32.mxu0 0.0
        %989 = vmatmul.mubr.f32.gmra.mrb[0].mxu0 %v432
        %v990 = vpop.f32.mrb[0].mxu0
        %v991 = vadd.f32 %v669, %v990
        %v992 = vpop.f32.mrb[0].mxu0
        %v993 = vadd.f32 %v671, %v992
        %994 = vmatprep.mubr.f32.mxu0 0.0
        %995 = vmatmul.mubr.f32.gmra.mrb[0].mxu0 %v433
        %v996 = vpop.f32.mrb[0].mxu0
        %v997 = vadd.f32 %v675, %v996
        %v998 = vpop.f32.mrb[0].mxu0
        %v999 = vadd.f32 %v677, %v998
        %1000 = vmatprep.mubr.f32.mxu0 0.0
        %1001 = vmatmul.mubr.f32.gmra.mrb[0].mxu0 %v434
        %v1002 = vpop.f32.mrb[0].mxu0
        %v1003 = vadd.f32 %v681, %v1002
        %v1004 = vpop.f32.mrb[0].mxu0
        %v1005 = vadd.f32 %v683, %v1004
        %1006 = vmatprep.mubr.f32.mxu0 0.0
        %1007 = vmatmul.mubr.f32.gmra.mrb[0].mxu0 %v435
        %v1008 = vpop.f32.mrb[0].mxu0
        %v1009 = vadd.f32 %v687, %v1008
        %v1010 = vpop.f32.mrb[0].mxu0
        %v1011 = vadd.f32 %v689, %v1010
        %1012 = vmatprep.mubr.f32.mxu0 0.0
        %1013 = vmatmul.mubr.f32.gmra.mrb[0].mxu0 %v436
        %v1014 = vpop.f32.mrb[0].mxu0
        %v1015 = vadd.f32 %v693, %v1014
        %v1016 = vpop.f32.mrb[0].mxu0
        %v1017 = vadd.f32 %v695, %v1016
        %1018 = vmatprep.mubr.f32.mxu0 0.0
        %1019 = vmatmul.mubr.f32.gmra.mrb[0].mxu0 %v437
        %v1020 = vpop.f32.mrb[0].mxu0
        %v1021 = vadd.f32 %v699, %v1020
        %v1022 = vpop.f32.mrb[0].mxu0
        %v1023 = vadd.f32 %v701, %v1022
        %1024 = vmatprep.mubr.f32.mxu0 0.0
        %1025 = vmatmul.mubr.f32.gmra.mrb[0].mxu0 %v438
        %v1026 = vpop.f32.mrb[0].mxu0
        %v1027 = vadd.f32 %v705, %v1026
        %v1028 = vpop.f32.mrb[0].mxu0
        %v1029 = vadd.f32 %v707, %v1028
        %1030 = vmatprep.mubr.f32.mxu0 0.0
        %1031 = vmatmul.mubr.f32.gmra.mrb[0].mxu0 %v439
        %v1032 = vpop.f32.mrb[0].mxu0
        %v1033 = vadd.f32 %v711, %v1032
        %v1034 = vpop.f32.mrb[0].mxu0
        %v1035 = vadd.f32 %v713, %v1034
        %1036 = vmatprep.mubr.f32.mxu0 0.0
        %1037 = vmatmul.mubr.f32.gmra.mrb[0].mxu0 %v440
        %v1038 = vpop.f32.mrb[0].mxu0
        %v1039 = vadd.f32 %v717, %v1038
        %v1040 = vpop.f32.mrb[0].mxu0
        %v1041 = vadd.f32 %v719, %v1040
        %1042 = vmatprep.mubr.f32.mxu0 0.0
        %1043 = vmatmul.mubr.f32.gmra.mrb[0].mxu0 %v441
        %v1044 = vpop.f32.mrb[0].mxu0
        %v1045 = vadd.f32 %v723, %v1044
        %v1046 = vpop.f32.mrb[0].mxu0
        %v1047 = vadd.f32 %v725, %v1046
        %1048 = vmatprep.mubr.f32.mxu0 0.0
        %1049 = vmatmul.mubr.f32.gmra.mrb[0].mxu0 %v442
        %v1050 = vpop.f32.mrb[0].mxu0
        %v1051 = vadd.f32 %v729, %v1050
        %v1052 = vpop.f32.mrb[0].mxu0
        %v1053 = vadd.f32 %v731, %v1052
        %1054 = vmatprep.mubr.f32.mxu0 0.0
        %1055 = vmatmul.mubr.f32.gmra.mrb[0].mxu0 %v443
        %v1056 = vpop.f32.mrb[0].mxu0
        %v1057 = vadd.f32 %v735, %v1056
        %v1058 = vpop.f32.mrb[0].mxu0
        %v1059 = vadd.f32 %v737, %v1058
        %1060 = vmatprep.mubr.f32.mxu0 0.0
        %1061 = vmatmul.mubr.f32.gmra.mrb[0].mxu0 %v444
        %v1062 = vpop.f32.mrb[0].mxu0
        %v1063 = vadd.f32 %v741, %v1062
        %v1064 = vpop.f32.mrb[0].mxu0
        %v1065 = vadd.f32 %v743, %v1064
        %1066 = vmatprep.mubr.f32.mxu0 0.0
        %1067 = vmatmul.mubr.f32.gmra.mrb[0].mxu0 %v445
        %v1068 = vpop.f32.mrb[0].mxu0
        %v1069 = vadd.f32 %v747, %v1068
        %v1070 = vpop.f32.mrb[0].mxu0
        %v1071 = vadd.f32 %v749, %v1070
        %1072 = vdwg.mxu0
        %1073 = vmatprep.subr.mxu0 %v465
        %1074 = vmatpush1.msra.mxu0 %v464
        %1075 = vmatprep.subr.mxu0 %v469
        %1076 = vmatpush1.msra.mxu0 %v468
        %1077 = vmatprep.subr.mxu0 %v473
        %1078 = vmatpush1.msra.mxu0 %v472
        %1079 = vmatprep.subr.mxu0 %v477
        %1080 = vmatpush1.msra.mxu0 %v476
        %1081 = vmatprep.subr.mxu0 %v481
        %1082 = vmatpush1.msra.mxu0 %v480
        %1083 = vmatprep.subr.mxu0 %v485
        %1084 = vmatpush1.msra.mxu0 %v484
        %1085 = vmatprep.subr.mxu0 %v489
        %1086 = vmatpush1.msra.mxu0 %v488
        %1087 = vmatprep.subr.mxu0 %v493
        %1088 = vmatpush1.msra.mxu0 %v492
        %1089 = vmatprep.subr.mxu0 %v497
        %1090 = vmatpush1.msra.mxu0 %v496
        %1091 = vmatprep.subr.mxu0 %v501
        %1092 = vmatpush1.msra.mxu0 %v500
        %1093 = vmatprep.subr.mxu0 %v505
        %1094 = vmatpush1.msra.mxu0 %v504
        %1095 = vmatprep.subr.mxu0 %v509
        %1096 = vmatpush1.msra.mxu0 %v508
        %1097 = vmatprep.subr.mxu0 %v513
        %1098 = vmatpush1.msra.mxu0 %v512
        %1099 = vmatprep.subr.mxu0 %v517
        %1100 = vmatpush1.msra.mxu0 %v516
        %1101 = vmatprep.subr.mxu0 %v521
        %1102 = vmatpush1.msra.mxu0 %v520
        %1103 = vmatprep.subr.mxu0 %v525
        %1104 = vmatpush1.msra.mxu0 %v524
        %1105 = vmatprep.subr.mxu0 0.0
        %1106 = vmatpush1.msra.mxu0 0.0
        %1107 = vmatprep.subr.mxu0 0.0
        %1108 = vmatpush1.msra.mxu0 0.0
        %1109 = vmatprep.subr.mxu0 0.0
        %1110 = vmatpush1.msra.mxu0 0.0
        %1111 = vmatprep.subr.mxu0 0.0
        %1112 = vmatpush1.msra.mxu0 0.0
        %1113 = vmatprep.subr.mxu0 0.0
        %1114 = vmatpush1.msra.mxu0 0.0
        %1115 = vmatprep.subr.mxu0 0.0
        %1116 = vmatpush1.msra.mxu0 0.0
        %1117 = vmatprep.subr.mxu0 0.0
        %1118 = vmatpush1.msra.mxu0 0.0
        %1119 = vmatprep.subr.mxu0 0.0
        %1120 = vmatpush1.msra.mxu0 0.0
        %1121 = vmatprep.subr.mxu0 0.0
        %1122 = vmatpush1.msra.mxu0 0.0
        %1123 = vmatprep.subr.mxu0 0.0
        %1124 = vmatpush1.msra.mxu0 0.0
        %1125 = vmatprep.subr.mxu0 0.0
        %1126 = vmatpush1.msra.mxu0 0.0
        %1127 = vmatprep.subr.mxu0 0.0
        %1128 = vmatpush1.msra.mxu0 0.0
        %1129 = vmatprep.subr.mxu0 0.0
        %1130 = vmatpush1.msra.mxu0 0.0
        %1131 = vmatprep.subr.mxu0 0.0
        %1132 = vmatpush1.msra.mxu0 0.0
        %1133 = vmatprep.subr.mxu0 0.0
        %1134 = vmatpush1.msra.mxu0 0.0
        %1135 = vmatprep.subr.mxu0 0.0
        %1136 = vmatpush1.msra.mxu0 0.0
        %1137 = vmatprep.mubr.f32.mxu0 0.0
        %1138 = vmatmul.mubr.f32.gmra.mrb[0].mxu0 %v430
        %v1139 = vpop.f32.mrb[0].mxu0
        %v1140 = vadd.f32 %v818, %v1139
        %v1141 = vpop.f32.mrb[0].mxu0
        %v1142 = vadd.f32 %v820, %v1141
        %1143 = vmatprep.mubr.f32.mxu0 0.0
        %1144 = vmatmul.mubr.f32.gmra.mrb[0].mxu0 %v431
        %v1145 = vpop.f32.mrb[0].mxu0
        %v1146 = vadd.f32 %v824, %v1145
        %v1147 = vpop.f32.mrb[0].mxu0
        %v1148 = vadd.f32 %v826, %v1147
        %1149 = vmatprep.mubr.f32.mxu0 0.0
        %1150 = vmatmul.mubr.f32.gmra.mrb[0].mxu0 %v432
        %v1151 = vpop.f32.mrb[0].mxu0
        %v1152 = vadd.f32 %v830, %v1151
        %v1153 = vpop.f32.mrb[0].mxu0
        %v1154 = vadd.f32 %v832, %v1153
        %1155 = vmatprep.mubr.f32.mxu0 0.0
        %1156 = vmatmul.mubr.f32.gmra.mrb[0].mxu0 %v433
        %v1157 = vpop.f32.mrb[0].mxu0
        %v1158 = vadd.f32 %v836, %v1157
        %v1159 = vpop.f32.mrb[0].mxu0
        %v1160 = vadd.f32 %v838, %v1159
        %1161 = vmatprep.mubr.f32.mxu0 0.0
        %1162 = vmatmul.mubr.f32.gmra.mrb[0].mxu0 %v434
        %v1163 = vpop.f32.mrb[0].mxu0
        %v1164 = vadd.f32 %v842, %v1163
        %v1165 = vpop.f32.mrb[0].mxu0
        %v1166 = vadd.f32 %v844, %v1165
        %1167 = vmatprep.mubr.f32.mxu0 0.0
        %1168 = vmatmul.mubr.f32.gmra.mrb[0].mxu0 %v435
        %v1169 = vpop.f32.mrb[0].mxu0
        %v1170 = vadd.f32 %v848, %v1169
        %v1171 = vpop.f32.mrb[0].mxu0
        %v1172 = vadd.f32 %v850, %v1171
        %1173 = vmatprep.mubr.f32.mxu0 0.0
        %1174 = vmatmul.mubr.f32.gmra.mrb[0].mxu0 %v436
        %v1175 = vpop.f32.mrb[0].mxu0
        %v1176 = vadd.f32 %v854, %v1175
        %v1177 = vpop.f32.mrb[0].mxu0
        %v1178 = vadd.f32 %v856, %v1177
        %1179 = vmatprep.mubr.f32.mxu0 0.0
        %1180 = vmatmul.mubr.f32.gmra.mrb[0].mxu0 %v437
        %v1181 = vpop.f32.mrb[0].mxu0
        %v1182 = vadd.f32 %v860, %v1181
        %v1183 = vpop.f32.mrb[0].mxu0
        %v1184 = vadd.f32 %v862, %v1183
        %1185 = vmatprep.mubr.f32.mxu0 0.0
        %1186 = vmatmul.mubr.f32.gmra.mrb[0].mxu0 %v438
        %v1187 = vpop.f32.mrb[0].mxu0
        %v1188 = vadd.f32 %v866, %v1187
        %v1189 = vpop.f32.mrb[0].mxu0
        %v1190 = vadd.f32 %v868, %v1189
        %1191 = vmatprep.mubr.f32.mxu0 0.0
        %1192 = vmatmul.mubr.f32.gmra.mrb[0].mxu0 %v439
        %v1193 = vpop.f32.mrb[0].mxu0
        %v1194 = vadd.f32 %v872, %v1193
        %v1195 = vpop.f32.mrb[0].mxu0
        %v1196 = vadd.f32 %v874, %v1195
        %1197 = vmatprep.mubr.f32.mxu0 0.0
        %1198 = vmatmul.mubr.f32.gmra.mrb[0].mxu0 %v440
        %v1199 = vpop.f32.mrb[0].mxu0
        %v1200 = vadd.f32 %v878, %v1199
        %v1201 = vpop.f32.mrb[0].mxu0
        %v1202 = vadd.f32 %v880, %v1201
        %1203 = vmatprep.mubr.f32.mxu0 0.0
        %1204 = vmatmul.mubr.f32.gmra.mrb[0].mxu0 %v441
        %v1205 = vpop.f32.mrb[0].mxu0
        %v1206 = vadd.f32 %v884, %v1205
        %v1207 = vpop.f32.mrb[0].mxu0
        %v1208 = vadd.f32 %v886, %v1207
        %1209 = vmatprep.mubr.f32.mxu0 0.0
        %1210 = vmatmul.mubr.f32.gmra.mrb[0].mxu0 %v442
        %v1211 = vpop.f32.mrb[0].mxu0
        %v1212 = vadd.f32 %v890, %v1211
        %v1213 = vpop.f32.mrb[0].mxu0
        %v1214 = vadd.f32 %v892, %v1213
        %1215 = vmatprep.mubr.f32.mxu0 0.0
        %1216 = vmatmul.mubr.f32.gmra.mrb[0].mxu0 %v443
        %v1217 = vpop.f32.mrb[0].mxu0
        %v1218 = vadd.f32 %v896, %v1217
        %v1219 = vpop.f32.mrb[0].mxu0
        %v1220 = vadd.f32 %v898, %v1219
        %1221 = vmatprep.mubr.f32.mxu0 0.0
        %1222 = vmatmul.mubr.f32.gmra.mrb[0].mxu0 %v444
        %v1223 = vpop.f32.mrb[0].mxu0
        %v1224 = vadd.f32 %v902, %v1223
        %v1225 = vpop.f32.mrb[0].mxu0
        %v1226 = vadd.f32 %v904, %v1225
        %1227 = vmatprep.mubr.f32.mxu0 0.0
        %1228 = vmatmul.mubr.f32.gmra.mrb[0].mxu0 %v445
        %v1229 = vpop.f32.mrb[0].mxu0
        %v1230 = vadd.f32 %v908, %v1229
        %v1231 = vpop.f32.mrb[0].mxu0
        %v1232 = vadd.f32 %v910, %v1231
        %1233 = vdwg.mxu0
        %v1234 = vld [vmem:[%s4] sm:$0xf]
        %v1236 = vlaneseq
        %v1237 = vshrl.u32 %v1236, 7
        %v1238 = vsub.s32 0, %v1237
        %v1239 = vrot.slane %v1234, %v1238
        %v1240 = vlaneseq
        %v1241 = vshrl.u32 %v1240, 7
        %v1242 = vsub.s32 1, %v1241
        %v1243 = vrot.slane %v1234, %v1242
        %v1244 = vlaneseq
        %v1245 = vshrl.u32 %v1244, 7
        %v1246 = vsub.s32 2, %v1245
        %v1247 = vrot.slane %v1234, %v1246
        %v1248 = vlaneseq
        %v1249 = vshrl.u32 %v1248, 7
        %v1250 = vsub.s32 3, %v1249
        %v1251 = vrot.slane %v1234, %v1250
        %v1256 = vadd.f32 %v979, %v1239
        %v1257 = vadd.f32 %v981, %v1243
        %v1258 = vadd.f32 %v1140, %v1247
        %v1259 = vadd.f32 %v1142, %v1251
        %v1260 = vadd.f32 %v985, %v1239
        %v1261 = vadd.f32 %v987, %v1243
        %v1262 = vadd.f32 %v1146, %v1247
        %v1263 = vadd.f32 %v1148, %v1251
        %v1264 = vadd.f32 %v991, %v1239
        %v1265 = vadd.f32 %v993, %v1243
        %v1266 = vadd.f32 %v1152, %v1247
        %v1267 = vadd.f32 %v1154, %v1251
        %v1268 = vadd.f32 %v997, %v1239
        %v1269 = vadd.f32 %v999, %v1243
        %v1270 = vadd.f32 %v1158, %v1247
        %v1271 = vadd.f32 %v1160, %v1251
        %v1272 = vadd.f32 %v1003, %v1239
        %v1273 = vadd.f32 %v1005, %v1243
        %v1274 = vadd.f32 %v1164, %v1247
        %v1275 = vadd.f32 %v1166, %v1251
        %v1276 = vadd.f32 %v1009, %v1239
        %v1277 = vadd.f32 %v1011, %v1243
        %v1278 = vadd.f32 %v1170, %v1247
        %v1279 = vadd.f32 %v1172, %v1251
        %v1280 = vadd.f32 %v1015, %v1239
        %v1281 = vadd.f32 %v1017, %v1243
        %v1282 = vadd.f32 %v1176, %v1247
        %v1283 = vadd.f32 %v1178, %v1251
        %v1284 = vadd.f32 %v1021, %v1239
        %v1285 = vadd.f32 %v1023, %v1243
        %v1286 = vadd.f32 %v1182, %v1247
        %v1287 = vadd.f32 %v1184, %v1251
        %v1288 = vadd.f32 %v1027, %v1239
        %v1289 = vadd.f32 %v1029, %v1243
        %v1290 = vadd.f32 %v1188, %v1247
        %v1291 = vadd.f32 %v1190, %v1251
        %v1292 = vadd.f32 %v1033, %v1239
        %v1293 = vadd.f32 %v1035, %v1243
        %v1294 = vadd.f32 %v1194, %v1247
        %v1295 = vadd.f32 %v1196, %v1251
        %v1296 = vadd.f32 %v1039, %v1239
        %v1297 = vadd.f32 %v1041, %v1243
        %v1298 = vadd.f32 %v1200, %v1247
        %v1299 = vadd.f32 %v1202, %v1251
        %v1300 = vadd.f32 %v1045, %v1239
        %v1301 = vadd.f32 %v1047, %v1243
        %v1302 = vadd.f32 %v1206, %v1247
        %v1303 = vadd.f32 %v1208, %v1251
        %v1304 = vadd.f32 %v1051, %v1239
        %v1305 = vadd.f32 %v1053, %v1243
        %v1306 = vadd.f32 %v1212, %v1247
        %v1307 = vadd.f32 %v1214, %v1251
        %v1308 = vadd.f32 %v1057, %v1239
        %v1309 = vadd.f32 %v1059, %v1243
        %v1310 = vadd.f32 %v1218, %v1247
        %v1311 = vadd.f32 %v1220, %v1251
        %v1312 = vadd.f32 %v1063, %v1239
        %v1313 = vadd.f32 %v1065, %v1243
        %v1314 = vadd.f32 %v1224, %v1247
        %v1315 = vadd.f32 %v1226, %v1251
        %v1316 = vadd.f32 %v1069, %v1239
        %v1317 = vadd.f32 %v1071, %v1243
        %v1318 = vadd.f32 %v1230, %v1247
        %v1319 = vadd.f32 %v1232, %v1251
        %1320 = vst [vmem:[%s418] sm:$0xff] %v1256
        %1321 = vst [vmem:[%s418 + $0x8] sm:$0xff] %v1257
        %1322 = vst [vmem:[%s418 + $0x10] sm:$0xff] %v1258
        %1323 = vst [vmem:[%s418 + $0x18] sm:$0xff] %v1259
        %1324 = vst [vmem:[%s418 + $0x20] sm:$0xff] %v1260
        %1325 = vst [vmem:[%s418 + $0x28] sm:$0xff] %v1261
        %1326 = vst [vmem:[%s418 + $0x30] sm:$0xff] %v1262
        %1327 = vst [vmem:[%s418 + $0x38] sm:$0xff] %v1263
        %1328 = vst [vmem:[%s418 + $0x40] sm:$0xff] %v1264
        %1329 = vst [vmem:[%s418 + $0x48] sm:$0xff] %v1265
        %1330 = vst [vmem:[%s418 + $0x50] sm:$0xff] %v1266
        %1331 = vst [vmem:[%s418 + $0x58] sm:$0xff] %v1267
        %1332 = vst [vmem:[%s418 + $0x60] sm:$0xff] %v1268
        %1333 = vst [vmem:[%s418 + $0x68] sm:$0xff] %v1269
        %1334 = vst [vmem:[%s418 + $0x70] sm:$0xff] %v1270
        %1335 = vst [vmem:[%s418 + $0x78] sm:$0xff] %v1271
        %1336 = vst [vmem:[%s418 + $0x80] sm:$0xff] %v1272
        %1337 = vst [vmem:[%s418 + $0x88] sm:$0xff] %v1273
        %1338 = vst [vmem:[%s418 + $0x90] sm:$0xff] %v1274
        %1339 = vst [vmem:[%s418 + $0x98] sm:$0xff] %v1275
        %1340 = vst [vmem:[%s418 + $0xa0] sm:$0xff] %v1276
        %1341 = vst [vmem:[%s418 + $0xa8] sm:$0xff] %v1277
        %1342 = vst [vmem:[%s418 + $0xb0] sm:$0xff] %v1278
        %1343 = vst [vmem:[%s418 + $0xb8] sm:$0xff] %v1279
        %1344 = vst [vmem:[%s418 + $0xc0] sm:$0xff] %v1280
        %1345 = vst [vmem:[%s418 + $0xc8] sm:$0xff] %v1281
        %1346 = vst [vmem:[%s418 + $0xd0] sm:$0xff] %v1282
        %1347 = vst [vmem:[%s418 + $0xd8] sm:$0xff] %v1283
        %1348 = vst [vmem:[%s418 + $0xe0] sm:$0xff] %v1284
        %1349 = vst [vmem:[%s418 + $0xe8] sm:$0xff] %v1285
        %1350 = vst [vmem:[%s418 + $0xf0] sm:$0xff] %v1286
        %1351 = vst [vmem:[%s418 + $0xf8] sm:$0xff] %v1287
        %1352 = vst [vmem:[%s418 + $0x100] sm:$0xff] %v1288
        %1353 = vst [vmem:[%s418 + $0x108] sm:$0xff] %v1289
        %1354 = vst [vmem:[%s418 + $0x110] sm:$0xff] %v1290
        %1355 = vst [vmem:[%s418 + $0x118] sm:$0xff] %v1291
        %1356 = vst [vmem:[%s418 + $0x120] sm:$0xff] %v1292
        %1357 = vst [vmem:[%s418 + $0x128] sm:$0xff] %v1293
        %1358 = vst [vmem:[%s418 + $0x130] sm:$0xff] %v1294
        %1359 = vst [vmem:[%s418 + $0x138] sm:$0xff] %v1295
        %1360 = vst [vmem:[%s418 + $0x140] sm:$0xff] %v1296
        %1361 = vst [vmem:[%s418 + $0x148] sm:$0xff] %v1297
        %1362 = vst [vmem:[%s418 + $0x150] sm:$0xff] %v1298
        %1363 = vst [vmem:[%s418 + $0x158] sm:$0xff] %v1299
        %1364 = vst [vmem:[%s418 + $0x160] sm:$0xff] %v1300
        %1365 = vst [vmem:[%s418 + $0x168] sm:$0xff] %v1301
        %1366 = vst [vmem:[%s418 + $0x170] sm:$0xff] %v1302
        %1367 = vst [vmem:[%s418 + $0x178] sm:$0xff] %v1303
        %1368 = vst [vmem:[%s418 + $0x180] sm:$0xff] %v1304
        %1369 = vst [vmem:[%s418 + $0x188] sm:$0xff] %v1305
        %1370 = vst [vmem:[%s418 + $0x190] sm:$0xff] %v1306
        %1371 = vst [vmem:[%s418 + $0x198] sm:$0xff] %v1307
        %1372 = vst [vmem:[%s418 + $0x1a0] sm:$0xff] %v1308
        %1373 = vst [vmem:[%s418 + $0x1a8] sm:$0xff] %v1309
        %1374 = vst [vmem:[%s418 + $0x1b0] sm:$0xff] %v1310
        %1375 = vst [vmem:[%s418 + $0x1b8] sm:$0xff] %v1311
        %1376 = vst [vmem:[%s418 + $0x1c0] sm:$0xff] %v1312
        %1377 = vst [vmem:[%s418 + $0x1c8] sm:$0xff] %v1313
        %1378 = vst [vmem:[%s418 + $0x1d0] sm:$0xff] %v1314
        %1379 = vst [vmem:[%s418 + $0x1d8] sm:$0xff] %v1315
        %1380 = vst [vmem:[%s418 + $0x1e0] sm:$0xff] %v1316
        %1381 = vst [vmem:[%s418 + $0x1e8] sm:$0xff] %v1317
        %1382 = vst [vmem:[%s418 + $0x1f0] sm:$0xff] %v1318
        %1383 = vst [vmem:[%s418 + $0x1f8] sm:$0xff] %v1319
        %v1384 = vld [vmem:[%s358] sm:$0xff]
        %v1385 = vld [vmem:[%s358 + $0x8] sm:$0xff]
        %v1386 = vld [vmem:[%s358 + $0x10] sm:$0xff]
        %v1387 = vld [vmem:[%s358 + $0x18] sm:$0xff]
        %v1388 = vld [vmem:[%s358 + $0x20] sm:$0xff]
        %v1389 = vld [vmem:[%s358 + $0x28] sm:$0xff]
        %v1390 = vld [vmem:[%s358 + $0x30] sm:$0xff]
        %v1391 = vld [vmem:[%s358 + $0x38] sm:$0xff]
        %v1392 = vld [vmem:[%s358 + $0x40] sm:$0xff]
        %v1393 = vld [vmem:[%s358 + $0x48] sm:$0xff]
        %v1394 = vld [vmem:[%s358 + $0x50] sm:$0xff]
        %v1395 = vld [vmem:[%s358 + $0x58] sm:$0xff]
        %v1396 = vld [vmem:[%s358 + $0x60] sm:$0xff]
        %v1397 = vld [vmem:[%s358 + $0x68] sm:$0xff]
        %v1398 = vld [vmem:[%s358 + $0x70] sm:$0xff]
        %v1399 = vld [vmem:[%s358 + $0x78] sm:$0xff]
        %v1400 = vld [vmem:[%s358 + $0x80] sm:$0xff]
        %v1401 = vld [vmem:[%s358 + $0x88] sm:$0xff]
        %v1402 = vld [vmem:[%s358 + $0x90] sm:$0xff]
        %v1403 = vld [vmem:[%s358 + $0x98] sm:$0xff]
        %v1404 = vld [vmem:[%s358 + $0xa0] sm:$0xff]
        %v1405 = vld [vmem:[%s358 + $0xa8] sm:$0xff]
        %v1406 = vld [vmem:[%s358 + $0xb0] sm:$0xff]
        %v1407 = vld [vmem:[%s358 + $0xb8] sm:$0xff]
        %v1408 = vld [vmem:[%s358 + $0xc0] sm:$0xff]
        %v1409 = vld [vmem:[%s358 + $0xc8] sm:$0xff]
        %v1410 = vld [vmem:[%s358 + $0xd0] sm:$0xff]
        %v1411 = vld [vmem:[%s358 + $0xd8] sm:$0xff]
        %v1412 = vld [vmem:[%s358 + $0xe0] sm:$0xff]
        %v1413 = vld [vmem:[%s358 + $0xe8] sm:$0xff]
        %v1414 = vld [vmem:[%s358 + $0xf0] sm:$0xff]
        %v1415 = vld [vmem:[%s358 + $0xf8] sm:$0xff]
        %v1416 = vld [vmem:[%s358 + $0x100] sm:$0xff]
        %v1417 = vld [vmem:[%s358 + $0x108] sm:$0xff]
        %v1418 = vld [vmem:[%s358 + $0x110] sm:$0xff]
        %v1419 = vld [vmem:[%s358 + $0x118] sm:$0xff]
        %v1420 = vld [vmem:[%s358 + $0x120] sm:$0xff]
        %v1421 = vld [vmem:[%s358 + $0x128] sm:$0xff]
        %v1422 = vld [vmem:[%s358 + $0x130] sm:$0xff]
        %v1423 = vld [vmem:[%s358 + $0x138] sm:$0xff]
        %v1424 = vld [vmem:[%s358 + $0x140] sm:$0xff]
        %v1425 = vld [vmem:[%s358 + $0x148] sm:$0xff]
        %v1426 = vld [vmem:[%s358 + $0x150] sm:$0xff]
        %v1427 = vld [vmem:[%s358 + $0x158] sm:$0xff]
        %v1428 = vld [vmem:[%s358 + $0x160] sm:$0xff]
        %v1429 = vld [vmem:[%s358 + $0x168] sm:$0xff]
        %v1430 = vld [vmem:[%s358 + $0x170] sm:$0xff]
        %v1431 = vld [vmem:[%s358 + $0x178] sm:$0xff]
        %v1432 = vld [vmem:[%s358 + $0x180] sm:$0xff]
        %v1433 = vld [vmem:[%s358 + $0x188] sm:$0xff]
        %v1434 = vld [vmem:[%s358 + $0x190] sm:$0xff]
        %v1435 = vld [vmem:[%s358 + $0x198] sm:$0xff]
        %v1436 = vld [vmem:[%s358 + $0x1a0] sm:$0xff]
        %v1437 = vld [vmem:[%s358 + $0x1a8] sm:$0xff]
        %v1438 = vld [vmem:[%s358 + $0x1b0] sm:$0xff]
        %v1439 = vld [vmem:[%s358 + $0x1b8] sm:$0xff]
        %v1440 = vld [vmem:[%s358 + $0x1c0] sm:$0xff]
        %v1441 = vld [vmem:[%s358 + $0x1c8] sm:$0xff]
        %v1442 = vld [vmem:[%s358 + $0x1d0] sm:$0xff]
        %v1443 = vld [vmem:[%s358 + $0x1d8] sm:$0xff]
        %v1444 = vld [vmem:[%s358 + $0x1e0] sm:$0xff]
        %v1445 = vld [vmem:[%s358 + $0x1e8] sm:$0xff]
        %v1446 = vld [vmem:[%s358 + $0x1f0] sm:$0xff]
        %v1447 = vld [vmem:[%s358 + $0x1f8] sm:$0xff]
        %v1448 = vadd.f32 %v1256, %v1384
        %v1449 = vadd.f32 %v1257, %v1385
        %v1450 = vadd.f32 %v1258, %v1386
        %v1451 = vadd.f32 %v1259, %v1387
        %v1452 = vadd.f32 %v1260, %v1388
        %v1453 = vadd.f32 %v1261, %v1389
        %v1454 = vadd.f32 %v1262, %v1390
        %v1455 = vadd.f32 %v1263, %v1391
        %v1456 = vadd.f32 %v1264, %v1392
        %v1457 = vadd.f32 %v1265, %v1393
        %v1458 = vadd.f32 %v1266, %v1394
        %v1459 = vadd.f32 %v1267, %v1395
        %v1460 = vadd.f32 %v1268, %v1396
        %v1461 = vadd.f32 %v1269, %v1397
        %v1462 = vadd.f32 %v1270, %v1398
        %v1463 = vadd.f32 %v1271, %v1399
        %v1464 = vadd.f32 %v1272, %v1400
        %v1465 = vadd.f32 %v1273, %v1401
        %v1466 = vadd.f32 %v1274, %v1402
        %v1467 = vadd.f32 %v1275, %v1403
        %v1468 = vadd.f32 %v1276, %v1404
        %v1469 = vadd.f32 %v1277, %v1405
        %v1470 = vadd.f32 %v1278, %v1406
        %v1471 = vadd.f32 %v1279, %v1407
        %v1472 = vadd.f32 %v1280, %v1408
        %v1473 = vadd.f32 %v1281, %v1409
        %v1474 = vadd.f32 %v1282, %v1410
        %v1475 = vadd.f32 %v1283, %v1411
        %v1476 = vadd.f32 %v1284, %v1412
        %v1477 = vadd.f32 %v1285, %v1413
        %v1478 = vadd.f32 %v1286, %v1414
        %v1479 = vadd.f32 %v1287, %v1415
        %v1480 = vadd.f32 %v1288, %v1416
        %v1481 = vadd.f32 %v1289, %v1417
        %v1482 = vadd.f32 %v1290, %v1418
        %v1483 = vadd.f32 %v1291, %v1419
        %v1484 = vadd.f32 %v1292, %v1420
        %v1485 = vadd.f32 %v1293, %v1421
        %v1486 = vadd.f32 %v1294, %v1422
        %v1487 = vadd.f32 %v1295, %v1423
        %v1488 = vadd.f32 %v1296, %v1424
        %v1489 = vadd.f32 %v1297, %v1425
        %v1490 = vadd.f32 %v1298, %v1426
        %v1491 = vadd.f32 %v1299, %v1427
        %v1492 = vadd.f32 %v1300, %v1428
        %v1493 = vadd.f32 %v1301, %v1429
        %v1494 = vadd.f32 %v1302, %v1430
        %v1495 = vadd.f32 %v1303, %v1431
        %v1496 = vadd.f32 %v1304, %v1432
        %v1497 = vadd.f32 %v1305, %v1433
        %v1498 = vadd.f32 %v1306, %v1434
        %v1499 = vadd.f32 %v1307, %v1435
        %v1500 = vadd.f32 %v1308, %v1436
        %v1501 = vadd.f32 %v1309, %v1437
        %v1502 = vadd.f32 %v1310, %v1438
        %v1503 = vadd.f32 %v1311, %v1439
        %v1504 = vadd.f32 %v1312, %v1440
        %v1505 = vadd.f32 %v1313, %v1441
        %v1506 = vadd.f32 %v1314, %v1442
        %v1507 = vadd.f32 %v1315, %v1443
        %v1508 = vadd.f32 %v1316, %v1444
        %v1509 = vadd.f32 %v1317, %v1445
        %v1510 = vadd.f32 %v1318, %v1446
        %v1511 = vadd.f32 %v1319, %v1447
        %v1512 = vlaneseq
        %v1513 = vand.u32 %v1512, 127
        %1514 = vmax.xlane.f32.xlu0 %v1448
        %v1515 = vpop.xlane.xlu0 %1514
        %1516 = vmax.xlane.f32.xlu0 %v1452
        %v1517 = vpop.xlane.xlu0 %1516
        %1518 = vmax.xlane.f32.xlu0 %v1456
        %v1519 = vpop.xlane.xlu0 %1518
        %1520 = vmax.xlane.f32.xlu0 %v1460
        %v1521 = vpop.xlane.xlu0 %1520
        %1522 = vmax.xlane.f32.xlu0 %v1464
        %v1523 = vpop.xlane.xlu0 %1522
        %1524 = vmax.xlane.f32.xlu0 %v1468
        %v1525 = vpop.xlane.xlu0 %1524
        %1526 = vmax.xlane.f32.xlu0 %v1472
        %v1527 = vpop.xlane.xlu0 %1526
        %1528 = vmax.xlane.f32.xlu0 %v1476
        %v1529 = vpop.xlane.xlu0 %1528
        %1530 = vmax.xlane.f32.xlu0 %v1480
        %v1531 = vpop.xlane.xlu0 %1530
        %1532 = vmax.xlane.f32.xlu0 %v1484
        %v1533 = vpop.xlane.xlu0 %1532
        %1534 = vmax.xlane.f32.xlu0 %v1488
        %v1535 = vpop.xlane.xlu0 %1534
        %1536 = vmax.xlane.f32.xlu0 %v1492
        %v1537 = vpop.xlane.xlu0 %1536
        %1538 = vmax.xlane.f32.xlu0 %v1496
        %v1539 = vpop.xlane.xlu0 %1538
        %1540 = vmax.xlane.f32.xlu0 %v1500
        %v1541 = vpop.xlane.xlu0 %1540
        %1542 = vmax.xlane.f32.xlu0 %v1504
        %v1543 = vpop.xlane.xlu0 %1542
        %1544 = vmax.xlane.f32.xlu0 %v1508
        %v1545 = vpop.xlane.xlu0 %1544
        %vm1546 = vcmp.ge.f32.partialorder %v1448, %v1515
        %vm1547 = vcmp.ge.f32.partialorder %v1452, %v1517
        %vm1548 = vcmp.ge.f32.partialorder %v1456, %v1519
        %vm1549 = vcmp.ge.f32.partialorder %v1460, %v1521
        %vm1550 = vcmp.ge.f32.partialorder %v1464, %v1523
        %vm1551 = vcmp.ge.f32.partialorder %v1468, %v1525
        %vm1552 = vcmp.ge.f32.partialorder %v1472, %v1527
        %vm1553 = vcmp.ge.f32.partialorder %v1476, %v1529
        %vm1554 = vcmp.ge.f32.partialorder %v1480, %v1531
        %vm1555 = vcmp.ge.f32.partialorder %v1484, %v1533
        %vm1556 = vcmp.ge.f32.partialorder %v1488, %v1535
        %vm1557 = vcmp.ge.f32.partialorder %v1492, %v1537
        %vm1558 = vcmp.ge.f32.partialorder %v1496, %v1539
        %vm1559 = vcmp.ge.f32.partialorder %v1500, %v1541
        %vm1560 = vcmp.ge.f32.partialorder %v1504, %v1543
        %vm1561 = vcmp.ge.f32.partialorder %v1508, %v1545
        %v1562 = vsel %vm1546, %v1513, 128
        %v1563 = vsel %vm1547, %v1513, 128
        %v1564 = vsel %vm1548, %v1513, 128
        %v1565 = vsel %vm1549, %v1513, 128
        %v1566 = vsel %vm1550, %v1513, 128
        %v1567 = vsel %vm1551, %v1513, 128
        %v1568 = vsel %vm1552, %v1513, 128
        %v1569 = vsel %vm1553, %v1513, 128
        %v1570 = vsel %vm1554, %v1513, 128
        %v1571 = vsel %vm1555, %v1513, 128
        %v1572 = vsel %vm1556, %v1513, 128
        %v1573 = vsel %vm1557, %v1513, 128
        %v1574 = vsel %vm1558, %v1513, 128
        %v1575 = vsel %vm1559, %v1513, 128
        %v1576 = vsel %vm1560, %v1513, 128
        %v1577 = vsel %vm1561, %v1513, 128
        %v1578 = vand.u32 %v1562, 65535
        %v1579 = vshra.s32 %v1562, 16
        %v1580 = vcvt.s32.f32 %v1578
        %v1581 = vcvt.s32.f32 %v1579
        %1582 = vmin.xlane.f32.xlu0 %v1581
        %v1583 = vpop.xlane.xlu0 %1582
        %vm1584 = vcmp.eq.f32.partialorder %v1581, %v1583
        %v1585 = vsel %vm1584, %v1580, inf
        %1586 = vmin.xlane.f32.xlu0 %v1585
        %v1587 = vpop.xlane.xlu0 %1586
        %v1588 = vcvt.f32.s32 %v1587
        %v1589 = vcvt.f32.s32 %v1583
        %v1590 = vshll.u32 %v1589, 16
        %v1591 = vadd.s32 %v1590, %v1588
        %v1592 = vand.u32 %v1563, 65535
        %v1593 = vshra.s32 %v1563, 16
        %v1594 = vcvt.s32.f32 %v1592
        %v1595 = vcvt.s32.f32 %v1593
        %1596 = vmin.xlane.f32.xlu0 %v1595
        %v1597 = vpop.xlane.xlu0 %1596
        %vm1598 = vcmp.eq.f32.partialorder %v1595, %v1597
        %v1599 = vsel %vm1598, %v1594, inf
        %1600 = vmin.xlane.f32.xlu0 %v1599
        %v1601 = vpop.xlane.xlu0 %1600
        %v1602 = vcvt.f32.s32 %v1601
        %v1603 = vcvt.f32.s32 %v1597
        %v1604 = vshll.u32 %v1603, 16
        %v1605 = vadd.s32 %v1604, %v1602
        %v1606 = vand.u32 %v1564, 65535
        %v1607 = vshra.s32 %v1564, 16
        %v1608 = vcvt.s32.f32 %v1606
        %v1609 = vcvt.s32.f32 %v1607
        %1610 = vmin.xlane.f32.xlu0 %v1609
        %v1611 = vpop.xlane.xlu0 %1610
        %vm1612 = vcmp.eq.f32.partialorder %v1609, %v1611
        %v1613 = vsel %vm1612, %v1608, inf
        %1614 = vmin.xlane.f32.xlu0 %v1613
        %v1615 = vpop.xlane.xlu0 %1614
        %v1616 = vcvt.f32.s32 %v1615
        %v1617 = vcvt.f32.s32 %v1611
        %v1618 = vshll.u32 %v1617, 16
        %v1619 = vadd.s32 %v1618, %v1616
        %v1620 = vand.u32 %v1565, 65535
        %v1621 = vshra.s32 %v1565, 16
        %v1622 = vcvt.s32.f32 %v1620
        %v1623 = vcvt.s32.f32 %v1621
        %1624 = vmin.xlane.f32.xlu0 %v1623
        %v1625 = vpop.xlane.xlu0 %1624
        %vm1626 = vcmp.eq.f32.partialorder %v1623, %v1625
        %v1627 = vsel %vm1626, %v1622, inf
        %1628 = vmin.xlane.f32.xlu0 %v1627
        %v1629 = vpop.xlane.xlu0 %1628
        %v1630 = vcvt.f32.s32 %v1629
        %v1631 = vcvt.f32.s32 %v1625
        %v1632 = vshll.u32 %v1631, 16
        %v1633 = vadd.s32 %v1632, %v1630
        %v1634 = vand.u32 %v1566, 65535
        %v1635 = vshra.s32 %v1566, 16
        %v1636 = vcvt.s32.f32 %v1634
        %v1637 = vcvt.s32.f32 %v1635
        %1638 = vmin.xlane.f32.xlu0 %v1637
        %v1639 = vpop.xlane.xlu0 %1638
        %vm1640 = vcmp.eq.f32.partialorder %v1637, %v1639
        %v1641 = vsel %vm1640, %v1636, inf
        %1642 = vmin.xlane.f32.xlu0 %v1641
        %v1643 = vpop.xlane.xlu0 %1642
        %v1644 = vcvt.f32.s32 %v1643
        %v1645 = vcvt.f32.s32 %v1639
        %v1646 = vshll.u32 %v1645, 16
        %v1647 = vadd.s32 %v1646, %v1644
        %v1648 = vand.u32 %v1567, 65535
        %v1649 = vshra.s32 %v1567, 16
        %v1650 = vcvt.s32.f32 %v1648
        %v1651 = vcvt.s32.f32 %v1649
        %1652 = vmin.xlane.f32.xlu0 %v1651
        %v1653 = vpop.xlane.xlu0 %1652
        %vm1654 = vcmp.eq.f32.partialorder %v1651, %v1653
        %v1655 = vsel %vm1654, %v1650, inf
        %1656 = vmin.xlane.f32.xlu0 %v1655
        %v1657 = vpop.xlane.xlu0 %1656
        %v1658 = vcvt.f32.s32 %v1657
        %v1659 = vcvt.f32.s32 %v1653
        %v1660 = vshll.u32 %v1659, 16
        %v1661 = vadd.s32 %v1660, %v1658
        %v1662 = vand.u32 %v1568, 65535
        %v1663 = vshra.s32 %v1568, 16
        %v1664 = vcvt.s32.f32 %v1662
        %v1665 = vcvt.s32.f32 %v1663
        %1666 = vmin.xlane.f32.xlu0 %v1665
        %v1667 = vpop.xlane.xlu0 %1666
        %vm1668 = vcmp.eq.f32.partialorder %v1665, %v1667
        %v1669 = vsel %vm1668, %v1664, inf
        %1670 = vmin.xlane.f32.xlu0 %v1669
        %v1671 = vpop.xlane.xlu0 %1670
        %v1672 = vcvt.f32.s32 %v1671
        %v1673 = vcvt.f32.s32 %v1667
        %v1674 = vshll.u32 %v1673, 16
        %v1675 = vadd.s32 %v1674, %v1672
        %v1676 = vand.u32 %v1569, 65535
        %v1677 = vshra.s32 %v1569, 16
        %v1678 = vcvt.s32.f32 %v1676
        %v1679 = vcvt.s32.f32 %v1677
        %1680 = vmin.xlane.f32.xlu0 %v1679
        %v1681 = vpop.xlane.xlu0 %1680
        %vm1682 = vcmp.eq.f32.partialorder %v1679, %v1681
        %v1683 = vsel %vm1682, %v1678, inf
        %1684 = vmin.xlane.f32.xlu0 %v1683
        %v1685 = vpop.xlane.xlu0 %1684
        %v1686 = vcvt.f32.s32 %v1685
        %v1687 = vcvt.f32.s32 %v1681
        %v1688 = vshll.u32 %v1687, 16
        %v1689 = vadd.s32 %v1688, %v1686
        %v1690 = vand.u32 %v1570, 65535
        %v1691 = vshra.s32 %v1570, 16
        %v1692 = vcvt.s32.f32 %v1690
        %v1693 = vcvt.s32.f32 %v1691
        %1694 = vmin.xlane.f32.xlu0 %v1693
        %v1695 = vpop.xlane.xlu0 %1694
        %vm1696 = vcmp.eq.f32.partialorder %v1693, %v1695
        %v1697 = vsel %vm1696, %v1692, inf
        %1698 = vmin.xlane.f32.xlu0 %v1697
        %v1699 = vpop.xlane.xlu0 %1698
        %v1700 = vcvt.f32.s32 %v1699
        %v1701 = vcvt.f32.s32 %v1695
        %v1702 = vshll.u32 %v1701, 16
        %v1703 = vadd.s32 %v1702, %v1700
        %v1704 = vand.u32 %v1571, 65535
        %v1705 = vshra.s32 %v1571, 16
        %v1706 = vcvt.s32.f32 %v1704
        %v1707 = vcvt.s32.f32 %v1705
        %1708 = vmin.xlane.f32.xlu0 %v1707
        %v1709 = vpop.xlane.xlu0 %1708
        %vm1710 = vcmp.eq.f32.partialorder %v1707, %v1709
        %v1711 = vsel %vm1710, %v1706, inf
        %1712 = vmin.xlane.f32.xlu0 %v1711
        %v1713 = vpop.xlane.xlu0 %1712
        %v1714 = vcvt.f32.s32 %v1713
        %v1715 = vcvt.f32.s32 %v1709
        %v1716 = vshll.u32 %v1715, 16
        %v1717 = vadd.s32 %v1716, %v1714
        %v1718 = vand.u32 %v1572, 65535
        %v1719 = vshra.s32 %v1572, 16
        %v1720 = vcvt.s32.f32 %v1718
        %v1721 = vcvt.s32.f32 %v1719
        %1722 = vmin.xlane.f32.xlu0 %v1721
        %v1723 = vpop.xlane.xlu0 %1722
        %vm1724 = vcmp.eq.f32.partialorder %v1721, %v1723
        %v1725 = vsel %vm1724, %v1720, inf
        %1726 = vmin.xlane.f32.xlu0 %v1725
        %v1727 = vpop.xlane.xlu0 %1726
        %v1728 = vcvt.f32.s32 %v1727
        %v1729 = vcvt.f32.s32 %v1723
        %v1730 = vshll.u32 %v1729, 16
        %v1731 = vadd.s32 %v1730, %v1728
        %v1732 = vand.u32 %v1573, 65535
        %v1733 = vshra.s32 %v1573, 16
        %v1734 = vcvt.s32.f32 %v1732
        %v1735 = vcvt.s32.f32 %v1733
        %1736 = vmin.xlane.f32.xlu0 %v1735
        %v1737 = vpop.xlane.xlu0 %1736
        %vm1738 = vcmp.eq.f32.partialorder %v1735, %v1737
        %v1739 = vsel %vm1738, %v1734, inf
        %1740 = vmin.xlane.f32.xlu0 %v1739
        %v1741 = vpop.xlane.xlu0 %1740
        %v1742 = vcvt.f32.s32 %v1741
        %v1743 = vcvt.f32.s32 %v1737
        %v1744 = vshll.u32 %v1743, 16
        %v1745 = vadd.s32 %v1744, %v1742
        %v1746 = vand.u32 %v1574, 65535
        %v1747 = vshra.s32 %v1574, 16
        %v1748 = vcvt.s32.f32 %v1746
        %v1749 = vcvt.s32.f32 %v1747
        %1750 = vmin.xlane.f32.xlu0 %v1749
        %v1751 = vpop.xlane.xlu0 %1750
        %vm1752 = vcmp.eq.f32.partialorder %v1749, %v1751
        %v1753 = vsel %vm1752, %v1748, inf
        %1754 = vmin.xlane.f32.xlu0 %v1753
        %v1755 = vpop.xlane.xlu0 %1754
        %v1756 = vcvt.f32.s32 %v1755
        %v1757 = vcvt.f32.s32 %v1751
        %v1758 = vshll.u32 %v1757, 16
        %v1759 = vadd.s32 %v1758, %v1756
        %v1760 = vand.u32 %v1575, 65535
        %v1761 = vshra.s32 %v1575, 16
        %v1762 = vcvt.s32.f32 %v1760
        %v1763 = vcvt.s32.f32 %v1761
        %1764 = vmin.xlane.f32.xlu0 %v1763
        %v1765 = vpop.xlane.xlu0 %1764
        %vm1766 = vcmp.eq.f32.partialorder %v1763, %v1765
        %v1767 = vsel %vm1766, %v1762, inf
        %1768 = vmin.xlane.f32.xlu0 %v1767
        %v1769 = vpop.xlane.xlu0 %1768
        %v1770 = vcvt.f32.s32 %v1769
        %v1771 = vcvt.f32.s32 %v1765
        %v1772 = vshll.u32 %v1771, 16
        %v1773 = vadd.s32 %v1772, %v1770
        %v1774 = vand.u32 %v1576, 65535
        %v1775 = vshra.s32 %v1576, 16
        %v1776 = vcvt.s32.f32 %v1774
        %v1777 = vcvt.s32.f32 %v1775
        %1778 = vmin.xlane.f32.xlu0 %v1777
        %v1779 = vpop.xlane.xlu0 %1778
        %vm1780 = vcmp.eq.f32.partialorder %v1777, %v1779
        %v1781 = vsel %vm1780, %v1776, inf
        %1782 = vmin.xlane.f32.xlu0 %v1781
        %v1783 = vpop.xlane.xlu0 %1782
        %v1784 = vcvt.f32.s32 %v1783
        %v1785 = vcvt.f32.s32 %v1779
        %v1786 = vshll.u32 %v1785, 16
        %v1787 = vadd.s32 %v1786, %v1784
        %v1788 = vand.u32 %v1577, 65535
        %v1789 = vshra.s32 %v1577, 16
        %v1790 = vcvt.s32.f32 %v1788
        %v1791 = vcvt.s32.f32 %v1789
        %1792 = vmin.xlane.f32.xlu0 %v1791
        %v1793 = vpop.xlane.xlu0 %1792
        %vm1794 = vcmp.eq.f32.partialorder %v1791, %v1793
        %v1795 = vsel %vm1794, %v1790, inf
        %1796 = vmin.xlane.f32.xlu0 %v1795
        %v1797 = vpop.xlane.xlu0 %1796
        %v1798 = vcvt.f32.s32 %v1797
        %v1799 = vcvt.f32.s32 %v1793
        %v1800 = vshll.u32 %v1799, 16
        %v1801 = vadd.s32 %v1800, %v1798
        %vm1802 = vcmp.eq.s32.totalorder %v1513, %v1591
        %vm1803 = vcmp.eq.s32.totalorder %v1513, %v1605
        %vm1804 = vcmp.eq.s32.totalorder %v1513, %v1619
        %vm1805 = vcmp.eq.s32.totalorder %v1513, %v1633
        %vm1806 = vcmp.eq.s32.totalorder %v1513, %v1647
        %vm1807 = vcmp.eq.s32.totalorder %v1513, %v1661
        %vm1808 = vcmp.eq.s32.totalorder %v1513, %v1675
        %vm1809 = vcmp.eq.s32.totalorder %v1513, %v1689
        %vm1810 = vcmp.eq.s32.totalorder %v1513, %v1703
        %vm1811 = vcmp.eq.s32.totalorder %v1513, %v1717
        %vm1812 = vcmp.eq.s32.totalorder %v1513, %v1731
        %vm1813 = vcmp.eq.s32.totalorder %v1513, %v1745
        %vm1814 = vcmp.eq.s32.totalorder %v1513, %v1759
        %vm1815 = vcmp.eq.s32.totalorder %v1513, %v1773
        %vm1816 = vcmp.eq.s32.totalorder %v1513, %v1787
        %vm1817 = vcmp.eq.s32.totalorder %v1513, %v1801
        %v1818 = vsel %vm1802, 1, 0
        %v1819 = vsel %vm1803, 1, 0
        %v1820 = vsel %vm1804, 1, 0
        %v1821 = vsel %vm1805, 1, 0
        %v1822 = vsel %vm1806, 1, 0
        %v1823 = vsel %vm1807, 1, 0
        %v1824 = vsel %vm1808, 1, 0
        %v1825 = vsel %vm1809, 1, 0
        %v1826 = vsel %vm1810, 1, 0
        %v1827 = vsel %vm1811, 1, 0
        %v1828 = vsel %vm1812, 1, 0
        %v1829 = vsel %vm1813, 1, 0
        %v1830 = vsel %vm1814, 1, 0
        %v1831 = vsel %vm1815, 1, 0
        %v1832 = vsel %vm1816, 1, 0
        %v1833 = vsel %vm1817, 1, 0
        %v1834 = vcvt.s32.f32 %v1818
        %v1835 = vcvt.s32.f32 %v1819
        %v1836 = vcvt.s32.f32 %v1820
        %v1837 = vcvt.s32.f32 %v1821
        %v1838 = vcvt.s32.f32 %v1822
        %v1839 = vcvt.s32.f32 %v1823
        %v1840 = vcvt.s32.f32 %v1824
        %v1841 = vcvt.s32.f32 %v1825
        %v1842 = vcvt.s32.f32 %v1826
        %v1843 = vcvt.s32.f32 %v1827
        %v1844 = vcvt.s32.f32 %v1828
        %v1845 = vcvt.s32.f32 %v1829
        %v1846 = vcvt.s32.f32 %v1830
        %v1847 = vcvt.s32.f32 %v1831
        %v1848 = vcvt.s32.f32 %v1832
        %v1849 = vcvt.s32.f32 %v1833
        %1850 = vst [vmem:[%s397] sm:$0xff] %v1834
        %1851 = vst [vmem:[%s397 + $0x20] sm:$0xff] %v1835
        %1852 = vst [vmem:[%s397 + $0x40] sm:$0xff] %v1836
        %1853 = vst [vmem:[%s397 + $0x60] sm:$0xff] %v1837
        %1854 = vst [vmem:[%s397 + $0x80] sm:$0xff] %v1838
        %1855 = vst [vmem:[%s397 + $0xa0] sm:$0xff] %v1839
        %1856 = vst [vmem:[%s397 + $0xc0] sm:$0xff] %v1840
        %1857 = vst [vmem:[%s397 + $0xe0] sm:$0xff] %v1841
        %1858 = vst [vmem:[%s397 + $0x100] sm:$0xff] %v1842
        %1859 = vst [vmem:[%s397 + $0x120] sm:$0xff] %v1843
        %1860 = vst [vmem:[%s397 + $0x140] sm:$0xff] %v1844
        %1861 = vst [vmem:[%s397 + $0x160] sm:$0xff] %v1845
        %1862 = vst [vmem:[%s397 + $0x180] sm:$0xff] %v1846
        %1863 = vst [vmem:[%s397 + $0x1a0] sm:$0xff] %v1847
        %1864 = vst [vmem:[%s397 + $0x1c0] sm:$0xff] %v1848
        %1865 = vst [vmem:[%s397 + $0x1e0] sm:$0xff] %v1849
        %1866 = vmax.xlane.f32.xlu0 %v1256
        %v1867 = vpop.xlane.xlu0 %1866
        %1868 = vmax.xlane.f32.xlu0 %v1260
        %v1869 = vpop.xlane.xlu0 %1868
        %1870 = vmax.xlane.f32.xlu0 %v1264
        %v1871 = vpop.xlane.xlu0 %1870
        %1872 = vmax.xlane.f32.xlu0 %v1268
        %v1873 = vpop.xlane.xlu0 %1872
        %1874 = vmax.xlane.f32.xlu0 %v1272
        %v1875 = vpop.xlane.xlu0 %1874
        %1876 = vmax.xlane.f32.xlu0 %v1276
        %v1877 = vpop.xlane.xlu0 %1876
        %1878 = vmax.xlane.f32.xlu0 %v1280
        %v1879 = vpop.xlane.xlu0 %1878
        %1880 = vmax.xlane.f32.xlu0 %v1284
        %v1881 = vpop.xlane.xlu0 %1880
        %1882 = vmax.xlane.f32.xlu0 %v1288
        %v1883 = vpop.xlane.xlu0 %1882
        %1884 = vmax.xlane.f32.xlu0 %v1292
        %v1885 = vpop.xlane.xlu0 %1884
        %1886 = vmax.xlane.f32.xlu0 %v1296
        %v1887 = vpop.xlane.xlu0 %1886
        %1888 = vmax.xlane.f32.xlu0 %v1300
        %v1889 = vpop.xlane.xlu0 %1888
        %1890 = vmax.xlane.f32.xlu0 %v1304
        %v1891 = vpop.xlane.xlu0 %1890
        %1892 = vmax.xlane.f32.xlu0 %v1308
        %v1893 = vpop.xlane.xlu0 %1892
        %1894 = vmax.xlane.f32.xlu0 %v1312
        %v1895 = vpop.xlane.xlu0 %1894
        %1896 = vmax.xlane.f32.xlu0 %v1316
        %v1897 = vpop.xlane.xlu0 %1896
        %vm1898 = vcmp.ge.f32.partialorder %v1256, %v1867
        %vm1899 = vcmp.ge.f32.partialorder %v1260, %v1869
        %vm1900 = vcmp.ge.f32.partialorder %v1264, %v1871
        %vm1901 = vcmp.ge.f32.partialorder %v1268, %v1873
        %vm1902 = vcmp.ge.f32.partialorder %v1272, %v1875
        %vm1903 = vcmp.ge.f32.partialorder %v1276, %v1877
        %vm1904 = vcmp.ge.f32.partialorder %v1280, %v1879
        %vm1905 = vcmp.ge.f32.partialorder %v1284, %v1881
        %vm1906 = vcmp.ge.f32.partialorder %v1288, %v1883
        %vm1907 = vcmp.ge.f32.partialorder %v1292, %v1885
        %vm1908 = vcmp.ge.f32.partialorder %v1296, %v1887
        %vm1909 = vcmp.ge.f32.partialorder %v1300, %v1889
        %vm1910 = vcmp.ge.f32.partialorder %v1304, %v1891
        %vm1911 = vcmp.ge.f32.partialorder %v1308, %v1893
        %vm1912 = vcmp.ge.f32.partialorder %v1312, %v1895
        %vm1913 = vcmp.ge.f32.partialorder %v1316, %v1897
        %v1914 = vsel %vm1898, %v1513, 128
        %v1915 = vsel %vm1899, %v1513, 128
        %v1916 = vsel %vm1900, %v1513, 128
        %v1917 = vsel %vm1901, %v1513, 128
        %v1918 = vsel %vm1902, %v1513, 128
        %v1919 = vsel %vm1903, %v1513, 128
        %v1920 = vsel %vm1904, %v1513, 128
        %v1921 = vsel %vm1905, %v1513, 128
        %v1922 = vsel %vm1906, %v1513, 128
        %v1923 = vsel %vm1907, %v1513, 128
        %v1924 = vsel %vm1908, %v1513, 128
        %v1925 = vsel %vm1909, %v1513, 128
        %v1926 = vsel %vm1910, %v1513, 128
        %v1927 = vsel %vm1911, %v1513, 128
        %v1928 = vsel %vm1912, %v1513, 128
        %v1929 = vsel %vm1913, %v1513, 128
        %v1930 = vand.u32 %v1914, 65535
        %v1931 = vshra.s32 %v1914, 16
        %v1932 = vcvt.s32.f32 %v1930
        %v1933 = vcvt.s32.f32 %v1931
        %1934 = vmin.xlane.f32.xlu0 %v1933
        %v1935 = vpop.xlane.xlu0 %1934
        %vm1936 = vcmp.eq.f32.partialorder %v1933, %v1935
        %v1937 = vsel %vm1936, %v1932, inf
        %1938 = vmin.xlane.f32.xlu0 %v1937
        %v1939 = vpop.xlane.xlu0 %1938
        %v1940 = vcvt.f32.s32 %v1939
        %v1941 = vcvt.f32.s32 %v1935
        %v1942 = vshll.u32 %v1941, 16
        %v1943 = vadd.s32 %v1942, %v1940
        %v1944 = vand.u32 %v1915, 65535
        %v1945 = vshra.s32 %v1915, 16
        %v1946 = vcvt.s32.f32 %v1944
        %v1947 = vcvt.s32.f32 %v1945
        %1948 = vmin.xlane.f32.xlu0 %v1947
        %v1949 = vpop.xlane.xlu0 %1948
        %vm1950 = vcmp.eq.f32.partialorder %v1947, %v1949
        %v1951 = vsel %vm1950, %v1946, inf
        %1952 = vmin.xlane.f32.xlu0 %v1951
        %v1953 = vpop.xlane.xlu0 %1952
        %v1954 = vcvt.f32.s32 %v1953
        %v1955 = vcvt.f32.s32 %v1949
        %v1956 = vshll.u32 %v1955, 16
        %v1957 = vadd.s32 %v1956, %v1954
        %v1958 = vand.u32 %v1916, 65535
        %v1959 = vshra.s32 %v1916, 16
        %v1960 = vcvt.s32.f32 %v1958
        %v1961 = vcvt.s32.f32 %v1959
        %1962 = vmin.xlane.f32.xlu0 %v1961
        %v1963 = vpop.xlane.xlu0 %1962
        %vm1964 = vcmp.eq.f32.partialorder %v1961, %v1963
        %v1965 = vsel %vm1964, %v1960, inf
        %1966 = vmin.xlane.f32.xlu0 %v1965
        %v1967 = vpop.xlane.xlu0 %1966
        %v1968 = vcvt.f32.s32 %v1967
        %v1969 = vcvt.f32.s32 %v1963
        %v1970 = vshll.u32 %v1969, 16
        %v1971 = vadd.s32 %v1970, %v1968
        %v1972 = vand.u32 %v1917, 65535
        %v1973 = vshra.s32 %v1917, 16
        %v1974 = vcvt.s32.f32 %v1972
        %v1975 = vcvt.s32.f32 %v1973
        %1976 = vmin.xlane.f32.xlu0 %v1975
        %v1977 = vpop.xlane.xlu0 %1976
        %vm1978 = vcmp.eq.f32.partialorder %v1975, %v1977
        %v1979 = vsel %vm1978, %v1974, inf
        %1980 = vmin.xlane.f32.xlu0 %v1979
        %v1981 = vpop.xlane.xlu0 %1980
        %v1982 = vcvt.f32.s32 %v1981
        %v1983 = vcvt.f32.s32 %v1977
        %v1984 = vshll.u32 %v1983, 16
        %v1985 = vadd.s32 %v1984, %v1982
        %v1986 = vand.u32 %v1918, 65535
        %v1987 = vshra.s32 %v1918, 16
        %v1988 = vcvt.s32.f32 %v1986
        %v1989 = vcvt.s32.f32 %v1987
        %1990 = vmin.xlane.f32.xlu0 %v1989
        %v1991 = vpop.xlane.xlu0 %1990
        %vm1992 = vcmp.eq.f32.partialorder %v1989, %v1991
        %v1993 = vsel %vm1992, %v1988, inf
        %1994 = vmin.xlane.f32.xlu0 %v1993
        %v1995 = vpop.xlane.xlu0 %1994
        %v1996 = vcvt.f32.s32 %v1995
        %v1997 = vcvt.f32.s32 %v1991
        %v1998 = vshll.u32 %v1997, 16
        %v1999 = vadd.s32 %v1998, %v1996
        %v2000 = vand.u32 %v1919, 65535
        %v2001 = vshra.s32 %v1919, 16
        %v2002 = vcvt.s32.f32 %v2000
        %v2003 = vcvt.s32.f32 %v2001
        %2004 = vmin.xlane.f32.xlu0 %v2003
        %v2005 = vpop.xlane.xlu0 %2004
        %vm2006 = vcmp.eq.f32.partialorder %v2003, %v2005
        %v2007 = vsel %vm2006, %v2002, inf
        %2008 = vmin.xlane.f32.xlu0 %v2007
        %v2009 = vpop.xlane.xlu0 %2008
        %v2010 = vcvt.f32.s32 %v2009
        %v2011 = vcvt.f32.s32 %v2005
        %v2012 = vshll.u32 %v2011, 16
        %v2013 = vadd.s32 %v2012, %v2010
        %v2014 = vand.u32 %v1920, 65535
        %v2015 = vshra.s32 %v1920, 16
        %v2016 = vcvt.s32.f32 %v2014
        %v2017 = vcvt.s32.f32 %v2015
        %2018 = vmin.xlane.f32.xlu0 %v2017
        %v2019 = vpop.xlane.xlu0 %2018
        %vm2020 = vcmp.eq.f32.partialorder %v2017, %v2019
        %v2021 = vsel %vm2020, %v2016, inf
        %2022 = vmin.xlane.f32.xlu0 %v2021
        %v2023 = vpop.xlane.xlu0 %2022
        %v2024 = vcvt.f32.s32 %v2023
        %v2025 = vcvt.f32.s32 %v2019
        %v2026 = vshll.u32 %v2025, 16
        %v2027 = vadd.s32 %v2026, %v2024
        %v2028 = vand.u32 %v1921, 65535
        %v2029 = vshra.s32 %v1921, 16
        %v2030 = vcvt.s32.f32 %v2028
        %v2031 = vcvt.s32.f32 %v2029
        %2032 = vmin.xlane.f32.xlu0 %v2031
        %v2033 = vpop.xlane.xlu0 %2032
        %vm2034 = vcmp.eq.f32.partialorder %v2031, %v2033
        %v2035 = vsel %vm2034, %v2030, inf
        %2036 = vmin.xlane.f32.xlu0 %v2035
        %v2037 = vpop.xlane.xlu0 %2036
        %v2038 = vcvt.f32.s32 %v2037
        %v2039 = vcvt.f32.s32 %v2033
        %v2040 = vshll.u32 %v2039, 16
        %v2041 = vadd.s32 %v2040, %v2038
        %v2042 = vand.u32 %v1922, 65535
        %v2043 = vshra.s32 %v1922, 16
        %v2044 = vcvt.s32.f32 %v2042
        %v2045 = vcvt.s32.f32 %v2043
        %2046 = vmin.xlane.f32.xlu0 %v2045
        %v2047 = vpop.xlane.xlu0 %2046
        %vm2048 = vcmp.eq.f32.partialorder %v2045, %v2047
        %v2049 = vsel %vm2048, %v2044, inf
        %2050 = vmin.xlane.f32.xlu0 %v2049
        %v2051 = vpop.xlane.xlu0 %2050
        %v2052 = vcvt.f32.s32 %v2051
        %v2053 = vcvt.f32.s32 %v2047
        %v2054 = vshll.u32 %v2053, 16
        %v2055 = vadd.s32 %v2054, %v2052
        %v2056 = vand.u32 %v1923, 65535
        %v2057 = vshra.s32 %v1923, 16
        %v2058 = vcvt.s32.f32 %v2056
        %v2059 = vcvt.s32.f32 %v2057
        %2060 = vmin.xlane.f32.xlu0 %v2059
        %v2061 = vpop.xlane.xlu0 %2060
        %vm2062 = vcmp.eq.f32.partialorder %v2059, %v2061
        %v2063 = vsel %vm2062, %v2058, inf
        %2064 = vmin.xlane.f32.xlu0 %v2063
        %v2065 = vpop.xlane.xlu0 %2064
        %v2066 = vcvt.f32.s32 %v2065
        %v2067 = vcvt.f32.s32 %v2061
        %v2068 = vshll.u32 %v2067, 16
        %v2069 = vadd.s32 %v2068, %v2066
        %v2070 = vand.u32 %v1924, 65535
        %v2071 = vshra.s32 %v1924, 16
        %v2072 = vcvt.s32.f32 %v2070
        %v2073 = vcvt.s32.f32 %v2071
        %2074 = vmin.xlane.f32.xlu0 %v2073
        %v2075 = vpop.xlane.xlu0 %2074
        %vm2076 = vcmp.eq.f32.partialorder %v2073, %v2075
        %v2077 = vsel %vm2076, %v2072, inf
        %2078 = vmin.xlane.f32.xlu0 %v2077
        %v2079 = vpop.xlane.xlu0 %2078
        %v2080 = vcvt.f32.s32 %v2079
        %v2081 = vcvt.f32.s32 %v2075
        %v2082 = vshll.u32 %v2081, 16
        %v2083 = vadd.s32 %v2082, %v2080
        %v2084 = vand.u32 %v1925, 65535
        %v2085 = vshra.s32 %v1925, 16
        %v2086 = vcvt.s32.f32 %v2084
        %v2087 = vcvt.s32.f32 %v2085
        %2088 = vmin.xlane.f32.xlu0 %v2087
        %v2089 = vpop.xlane.xlu0 %2088
        %vm2090 = vcmp.eq.f32.partialorder %v2087, %v2089
        %v2091 = vsel %vm2090, %v2086, inf
        %2092 = vmin.xlane.f32.xlu0 %v2091
        %v2093 = vpop.xlane.xlu0 %2092
        %v2094 = vcvt.f32.s32 %v2093
        %v2095 = vcvt.f32.s32 %v2089
        %v2096 = vshll.u32 %v2095, 16
        %v2097 = vadd.s32 %v2096, %v2094
        %v2098 = vand.u32 %v1926, 65535
        %v2099 = vshra.s32 %v1926, 16
        %v2100 = vcvt.s32.f32 %v2098
        %v2101 = vcvt.s32.f32 %v2099
        %2102 = vmin.xlane.f32.xlu0 %v2101
        %v2103 = vpop.xlane.xlu0 %2102
        %vm2104 = vcmp.eq.f32.partialorder %v2101, %v2103
        %v2105 = vsel %vm2104, %v2100, inf
        %2106 = vmin.xlane.f32.xlu0 %v2105
        %v2107 = vpop.xlane.xlu0 %2106
        %v2108 = vcvt.f32.s32 %v2107
        %v2109 = vcvt.f32.s32 %v2103
        %v2110 = vshll.u32 %v2109, 16
        %v2111 = vadd.s32 %v2110, %v2108
        %v2112 = vand.u32 %v1927, 65535
        %v2113 = vshra.s32 %v1927, 16
        %v2114 = vcvt.s32.f32 %v2112
        %v2115 = vcvt.s32.f32 %v2113
        %2116 = vmin.xlane.f32.xlu0 %v2115
        %v2117 = vpop.xlane.xlu0 %2116
        %vm2118 = vcmp.eq.f32.partialorder %v2115, %v2117
        %v2119 = vsel %vm2118, %v2114, inf
        %2120 = vmin.xlane.f32.xlu0 %v2119
        %v2121 = vpop.xlane.xlu0 %2120
        %v2122 = vcvt.f32.s32 %v2121
        %v2123 = vcvt.f32.s32 %v2117
        %v2124 = vshll.u32 %v2123, 16
        %v2125 = vadd.s32 %v2124, %v2122
        %v2126 = vand.u32 %v1928, 65535
        %v2127 = vshra.s32 %v1928, 16
        %v2128 = vcvt.s32.f32 %v2126
        %v2129 = vcvt.s32.f32 %v2127
        %2130 = vmin.xlane.f32.xlu0 %v2129
        %v2131 = vpop.xlane.xlu0 %2130
        %vm2132 = vcmp.eq.f32.partialorder %v2129, %v2131
        %v2133 = vsel %vm2132, %v2128, inf
        %2134 = vmin.xlane.f32.xlu0 %v2133
        %v2135 = vpop.xlane.xlu0 %2134
        %v2136 = vcvt.f32.s32 %v2135
        %v2137 = vcvt.f32.s32 %v2131
        %v2138 = vshll.u32 %v2137, 16
        %v2139 = vadd.s32 %v2138, %v2136
        %v2140 = vand.u32 %v1929, 65535
        %v2141 = vshra.s32 %v1929, 16
        %v2142 = vcvt.s32.f32 %v2140
        %v2143 = vcvt.s32.f32 %v2141
        %2144 = vmin.xlane.f32.xlu0 %v2143
        %v2145 = vpop.xlane.xlu0 %2144
        %vm2146 = vcmp.eq.f32.partialorder %v2143, %v2145
        %v2147 = vsel %vm2146, %v2142, inf
        %2148 = vmin.xlane.f32.xlu0 %v2147
        %v2149 = vpop.xlane.xlu0 %2148
        %v2150 = vcvt.f32.s32 %v2149
        %v2151 = vcvt.f32.s32 %v2145
        %v2152 = vshll.u32 %v2151, 16
        %v2153 = vadd.s32 %v2152, %v2150
        %vm2154 = vcmp.eq.s32.totalorder %v1513, %v1943
        %vm2155 = vcmp.eq.s32.totalorder %v1513, %v1957
        %vm2156 = vcmp.eq.s32.totalorder %v1513, %v1971
        %vm2157 = vcmp.eq.s32.totalorder %v1513, %v1985
        %vm2158 = vcmp.eq.s32.totalorder %v1513, %v1999
        %vm2159 = vcmp.eq.s32.totalorder %v1513, %v2013
        %vm2160 = vcmp.eq.s32.totalorder %v1513, %v2027
        %vm2161 = vcmp.eq.s32.totalorder %v1513, %v2041
        %vm2162 = vcmp.eq.s32.totalorder %v1513, %v2055
        %vm2163 = vcmp.eq.s32.totalorder %v1513, %v2069
        %vm2164 = vcmp.eq.s32.totalorder %v1513, %v2083
        %vm2165 = vcmp.eq.s32.totalorder %v1513, %v2097
        %vm2166 = vcmp.eq.s32.totalorder %v1513, %v2111
        %vm2167 = vcmp.eq.s32.totalorder %v1513, %v2125
        %vm2168 = vcmp.eq.s32.totalorder %v1513, %v2139
        %vm2169 = vcmp.eq.s32.totalorder %v1513, %v2153
        %v2170 = vsel %vm2154, 1, 0
        %v2171 = vsel %vm2155, 1, 0
        %v2172 = vsel %vm2156, 1, 0
        %v2173 = vsel %vm2157, 1, 0
        %v2174 = vsel %vm2158, 1, 0
        %v2175 = vsel %vm2159, 1, 0
        %v2176 = vsel %vm2160, 1, 0
        %v2177 = vsel %vm2161, 1, 0
        %v2178 = vsel %vm2162, 1, 0
        %v2179 = vsel %vm2163, 1, 0
        %v2180 = vsel %vm2164, 1, 0
        %v2181 = vsel %vm2165, 1, 0
        %v2182 = vsel %vm2166, 1, 0
        %v2183 = vsel %vm2167, 1, 0
        %v2184 = vsel %vm2168, 1, 0
        %v2185 = vsel %vm2169, 1, 0
        %v2186 = vcvt.s32.f32 %v2170
        %v2187 = vcvt.s32.f32 %v2171
        %v2188 = vcvt.s32.f32 %v2172
        %v2189 = vcvt.s32.f32 %v2173
        %v2190 = vcvt.s32.f32 %v2174
        %v2191 = vcvt.s32.f32 %v2175
        %v2192 = vcvt.s32.f32 %v2176
        %v2193 = vcvt.s32.f32 %v2177
        %v2194 = vcvt.s32.f32 %v2178
        %v2195 = vcvt.s32.f32 %v2179
        %v2196 = vcvt.s32.f32 %v2180
        %v2197 = vcvt.s32.f32 %v2181
        %v2198 = vcvt.s32.f32 %v2182
        %v2199 = vcvt.s32.f32 %v2183
        %v2200 = vcvt.s32.f32 %v2184
        %v2201 = vcvt.s32.f32 %v2185
        %2202 = vst [vmem:[%s411] sm:$0xff] %v2186
        %2203 = vst [vmem:[%s411 + $0x20] sm:$0xff] %v2187
        %2204 = vst [vmem:[%s411 + $0x40] sm:$0xff] %v2188
        %2205 = vst [vmem:[%s411 + $0x60] sm:$0xff] %v2189
        %2206 = vst [vmem:[%s411 + $0x80] sm:$0xff] %v2190
        %2207 = vst [vmem:[%s411 + $0xa0] sm:$0xff] %v2191
        %2208 = vst [vmem:[%s411 + $0xc0] sm:$0xff] %v2192
        %2209 = vst [vmem:[%s411 + $0xe0] sm:$0xff] %v2193
        %2210 = vst [vmem:[%s411 + $0x100] sm:$0xff] %v2194
        %2211 = vst [vmem:[%s411 + $0x120] sm:$0xff] %v2195
        %2212 = vst [vmem:[%s411 + $0x140] sm:$0xff] %v2196
        %2213 = vst [vmem:[%s411 + $0x160] sm:$0xff] %v2197
        %2214 = vst [vmem:[%s411 + $0x180] sm:$0xff] %v2198
        %2215 = vst [vmem:[%s411 + $0x1a0] sm:$0xff] %v2199
        %2216 = vst [vmem:[%s411 + $0x1c0] sm:$0xff] %v2200
        %2217 = vst [vmem:[%s411 + $0x1e0] sm:$0xff] %v2201
        %vm2218 = vcmask 7168
        %2219 = vst.msk [vmem:[%s426] sm:$0xff] %vm2218, %v1943
        %2220 = vst.msk [vmem:[%s426 + $0x8] sm:$0xff] %vm2218, %v1957
        %2221 = vst.msk [vmem:[%s426 + $0x10] sm:$0xff] %vm2218, %v1971
        %2222 = vst.msk [vmem:[%s426 + $0x18] sm:$0xff] %vm2218, %v1985
        %2223 = vst.msk [vmem:[%s426 + $0x20] sm:$0xff] %vm2218, %v1999
        %2224 = vst.msk [vmem:[%s426 + $0x28] sm:$0xff] %vm2218, %v2013
        %2225 = vst.msk [vmem:[%s426 + $0x30] sm:$0xff] %vm2218, %v2027
        %2226 = vst.msk [vmem:[%s426 + $0x38] sm:$0xff] %vm2218, %v2041
        %2227 = vst.msk [vmem:[%s426 + $0x40] sm:$0xff] %vm2218, %v2055
        %2228 = vst.msk [vmem:[%s426 + $0x48] sm:$0xff] %vm2218, %v2069
        %2229 = vst.msk [vmem:[%s426 + $0x50] sm:$0xff] %vm2218, %v2083
        %2230 = vst.msk [vmem:[%s426 + $0x58] sm:$0xff] %vm2218, %v2097
        %2231 = vst.msk [vmem:[%s426 + $0x60] sm:$0xff] %vm2218, %v2111
        %2232 = vst.msk [vmem:[%s426 + $0x68] sm:$0xff] %vm2218, %v2125
        %2233 = vst.msk [vmem:[%s426 + $0x70] sm:$0xff] %vm2218, %v2139
        %2234 = vst.msk [vmem:[%s426 + $0x78] sm:$0xff] %vm2218, %v2153
        %2235 = vmax.xlane.f32.xlu0 %v1449
        %v2236 = vpop.xlane.xlu0 %2235
        %2237 = vmax.xlane.f32.xlu0 %v1453
        %v2238 = vpop.xlane.xlu0 %2237
        %2239 = vmax.xlane.f32.xlu0 %v1457
        %v2240 = vpop.xlane.xlu0 %2239
        %2241 = vmax.xlane.f32.xlu0 %v1461
        %v2242 = vpop.xlane.xlu0 %2241
        %2243 = vmax.xlane.f32.xlu0 %v1465
        %v2244 = vpop.xlane.xlu0 %2243
        %2245 = vmax.xlane.f32.xlu0 %v1469
        %v2246 = vpop.xlane.xlu0 %2245
        %2247 = vmax.xlane.f32.xlu0 %v1473
        %v2248 = vpop.xlane.xlu0 %2247
        %2249 = vmax.xlane.f32.xlu0 %v1477
        %v2250 = vpop.xlane.xlu0 %2249
        %2251 = vmax.xlane.f32.xlu0 %v1481
        %v2252 = vpop.xlane.xlu0 %2251
        %2253 = vmax.xlane.f32.xlu0 %v1485
        %v2254 = vpop.xlane.xlu0 %2253
        %2255 = vmax.xlane.f32.xlu0 %v1489
        %v2256 = vpop.xlane.xlu0 %2255
        %2257 = vmax.xlane.f32.xlu0 %v1493
        %v2258 = vpop.xlane.xlu0 %2257
        %2259 = vmax.xlane.f32.xlu0 %v1497
        %v2260 = vpop.xlane.xlu0 %2259
        %2261 = vmax.xlane.f32.xlu0 %v1501
        %v2262 = vpop.xlane.xlu0 %2261
        %2263 = vmax.xlane.f32.xlu0 %v1505
        %v2264 = vpop.xlane.xlu0 %2263
        %2265 = vmax.xlane.f32.xlu0 %v1509
        %v2266 = vpop.xlane.xlu0 %2265
        %vm2267 = vcmp.ge.f32.partialorder %v1449, %v2236
        %vm2268 = vcmp.ge.f32.partialorder %v1453, %v2238
        %vm2269 = vcmp.ge.f32.partialorder %v1457, %v2240
        %vm2270 = vcmp.ge.f32.partialorder %v1461, %v2242
        %vm2271 = vcmp.ge.f32.partialorder %v1465, %v2244
        %vm2272 = vcmp.ge.f32.partialorder %v1469, %v2246
        %vm2273 = vcmp.ge.f32.partialorder %v1473, %v2248
        %vm2274 = vcmp.ge.f32.partialorder %v1477, %v2250
        %vm2275 = vcmp.ge.f32.partialorder %v1481, %v2252
        %vm2276 = vcmp.ge.f32.partialorder %v1485, %v2254
        %vm2277 = vcmp.ge.f32.partialorder %v1489, %v2256
        %vm2278 = vcmp.ge.f32.partialorder %v1493, %v2258
        %vm2279 = vcmp.ge.f32.partialorder %v1497, %v2260
        %vm2280 = vcmp.ge.f32.partialorder %v1501, %v2262
        %vm2281 = vcmp.ge.f32.partialorder %v1505, %v2264
        %vm2282 = vcmp.ge.f32.partialorder %v1509, %v2266
        %v2283 = vsel %vm2267, %v1513, 128
        %v2284 = vsel %vm2268, %v1513, 128
        %v2285 = vsel %vm2269, %v1513, 128
        %v2286 = vsel %vm2270, %v1513, 128
        %v2287 = vsel %vm2271, %v1513, 128
        %v2288 = vsel %vm2272, %v1513, 128
        %v2289 = vsel %vm2273, %v1513, 128
        %v2290 = vsel %vm2274, %v1513, 128
        %v2291 = vsel %vm2275, %v1513, 128
        %v2292 = vsel %vm2276, %v1513, 128
        %v2293 = vsel %vm2277, %v1513, 128
        %v2294 = vsel %vm2278, %v1513, 128
        %v2295 = vsel %vm2279, %v1513, 128
        %v2296 = vsel %vm2280, %v1513, 128
        %v2297 = vsel %vm2281, %v1513, 128
        %v2298 = vsel %vm2282, %v1513, 128
        %v2299 = vand.u32 %v2283, 65535
        %v2300 = vshra.s32 %v2283, 16
        %v2301 = vcvt.s32.f32 %v2299
        %v2302 = vcvt.s32.f32 %v2300
        %2303 = vmin.xlane.f32.xlu0 %v2302
        %v2304 = vpop.xlane.xlu0 %2303
        %vm2305 = vcmp.eq.f32.partialorder %v2302, %v2304
        %v2306 = vsel %vm2305, %v2301, inf
        %2307 = vmin.xlane.f32.xlu0 %v2306
        %v2308 = vpop.xlane.xlu0 %2307
        %v2309 = vcvt.f32.s32 %v2308
        %v2310 = vcvt.f32.s32 %v2304
        %v2311 = vshll.u32 %v2310, 16
        %v2312 = vadd.s32 %v2311, %v2309
        %v2313 = vand.u32 %v2284, 65535
        %v2314 = vshra.s32 %v2284, 16
        %v2315 = vcvt.s32.f32 %v2313
        %v2316 = vcvt.s32.f32 %v2314
        %2317 = vmin.xlane.f32.xlu0 %v2316
        %v2318 = vpop.xlane.xlu0 %2317
        %vm2319 = vcmp.eq.f32.partialorder %v2316, %v2318
        %v2320 = vsel %vm2319, %v2315, inf
        %2321 = vmin.xlane.f32.xlu0 %v2320
        %v2322 = vpop.xlane.xlu0 %2321
        %v2323 = vcvt.f32.s32 %v2322
        %v2324 = vcvt.f32.s32 %v2318
        %v2325 = vshll.u32 %v2324, 16
        %v2326 = vadd.s32 %v2325, %v2323
        %v2327 = vand.u32 %v2285, 65535
        %v2328 = vshra.s32 %v2285, 16
        %v2329 = vcvt.s32.f32 %v2327
        %v2330 = vcvt.s32.f32 %v2328
        %2331 = vmin.xlane.f32.xlu0 %v2330
        %v2332 = vpop.xlane.xlu0 %2331
        %vm2333 = vcmp.eq.f32.partialorder %v2330, %v2332
        %v2334 = vsel %vm2333, %v2329, inf
        %2335 = vmin.xlane.f32.xlu0 %v2334
        %v2336 = vpop.xlane.xlu0 %2335
        %v2337 = vcvt.f32.s32 %v2336
        %v2338 = vcvt.f32.s32 %v2332
        %v2339 = vshll.u32 %v2338, 16
        %v2340 = vadd.s32 %v2339, %v2337
        %v2341 = vand.u32 %v2286, 65535
        %v2342 = vshra.s32 %v2286, 16
        %v2343 = vcvt.s32.f32 %v2341
        %v2344 = vcvt.s32.f32 %v2342
        %2345 = vmin.xlane.f32.xlu0 %v2344
        %v2346 = vpop.xlane.xlu0 %2345
        %vm2347 = vcmp.eq.f32.partialorder %v2344, %v2346
        %v2348 = vsel %vm2347, %v2343, inf
        %2349 = vmin.xlane.f32.xlu0 %v2348
        %v2350 = vpop.xlane.xlu0 %2349
        %v2351 = vcvt.f32.s32 %v2350
        %v2352 = vcvt.f32.s32 %v2346
        %v2353 = vshll.u32 %v2352, 16
        %v2354 = vadd.s32 %v2353, %v2351
        %v2355 = vand.u32 %v2287, 65535
        %v2356 = vshra.s32 %v2287, 16
        %v2357 = vcvt.s32.f32 %v2355
        %v2358 = vcvt.s32.f32 %v2356
        %2359 = vmin.xlane.f32.xlu0 %v2358
        %v2360 = vpop.xlane.xlu0 %2359
        %vm2361 = vcmp.eq.f32.partialorder %v2358, %v2360
        %v2362 = vsel %vm2361, %v2357, inf
        %2363 = vmin.xlane.f32.xlu0 %v2362
        %v2364 = vpop.xlane.xlu0 %2363
        %v2365 = vcvt.f32.s32 %v2364
        %v2366 = vcvt.f32.s32 %v2360
        %v2367 = vshll.u32 %v2366, 16
        %v2368 = vadd.s32 %v2367, %v2365
        %v2369 = vand.u32 %v2288, 65535
        %v2370 = vshra.s32 %v2288, 16
        %v2371 = vcvt.s32.f32 %v2369
        %v2372 = vcvt.s32.f32 %v2370
        %2373 = vmin.xlane.f32.xlu0 %v2372
        %v2374 = vpop.xlane.xlu0 %2373
        %vm2375 = vcmp.eq.f32.partialorder %v2372, %v2374
        %v2376 = vsel %vm2375, %v2371, inf
        %2377 = vmin.xlane.f32.xlu0 %v2376
        %v2378 = vpop.xlane.xlu0 %2377
        %v2379 = vcvt.f32.s32 %v2378
        %v2380 = vcvt.f32.s32 %v2374
        %v2381 = vshll.u32 %v2380, 16
        %v2382 = vadd.s32 %v2381, %v2379
        %v2383 = vand.u32 %v2289, 65535
        %v2384 = vshra.s32 %v2289, 16
        %v2385 = vcvt.s32.f32 %v2383
        %v2386 = vcvt.s32.f32 %v2384
        %2387 = vmin.xlane.f32.xlu0 %v2386
        %v2388 = vpop.xlane.xlu0 %2387
        %vm2389 = vcmp.eq.f32.partialorder %v2386, %v2388
        %v2390 = vsel %vm2389, %v2385, inf
        %2391 = vmin.xlane.f32.xlu0 %v2390
        %v2392 = vpop.xlane.xlu0 %2391
        %v2393 = vcvt.f32.s32 %v2392
        %v2394 = vcvt.f32.s32 %v2388
        %v2395 = vshll.u32 %v2394, 16
        %v2396 = vadd.s32 %v2395, %v2393
        %v2397 = vand.u32 %v2290, 65535
        %v2398 = vshra.s32 %v2290, 16
        %v2399 = vcvt.s32.f32 %v2397
        %v2400 = vcvt.s32.f32 %v2398
        %2401 = vmin.xlane.f32.xlu0 %v2400
        %v2402 = vpop.xlane.xlu0 %2401
        %vm2403 = vcmp.eq.f32.partialorder %v2400, %v2402
        %v2404 = vsel %vm2403, %v2399, inf
        %2405 = vmin.xlane.f32.xlu0 %v2404
        %v2406 = vpop.xlane.xlu0 %2405
        %v2407 = vcvt.f32.s32 %v2406
        %v2408 = vcvt.f32.s32 %v2402
        %v2409 = vshll.u32 %v2408, 16
        %v2410 = vadd.s32 %v2409, %v2407
        %v2411 = vand.u32 %v2291, 65535
        %v2412 = vshra.s32 %v2291, 16
        %v2413 = vcvt.s32.f32 %v2411
        %v2414 = vcvt.s32.f32 %v2412
        %2415 = vmin.xlane.f32.xlu0 %v2414
        %v2416 = vpop.xlane.xlu0 %2415
        %vm2417 = vcmp.eq.f32.partialorder %v2414, %v2416
        %v2418 = vsel %vm2417, %v2413, inf
        %2419 = vmin.xlane.f32.xlu0 %v2418
        %v2420 = vpop.xlane.xlu0 %2419
        %v2421 = vcvt.f32.s32 %v2420
        %v2422 = vcvt.f32.s32 %v2416
        %v2423 = vshll.u32 %v2422, 16
        %v2424 = vadd.s32 %v2423, %v2421
        %v2425 = vand.u32 %v2292, 65535
        %v2426 = vshra.s32 %v2292, 16
        %v2427 = vcvt.s32.f32 %v2425
        %v2428 = vcvt.s32.f32 %v2426
        %2429 = vmin.xlane.f32.xlu0 %v2428
        %v2430 = vpop.xlane.xlu0 %2429
        %vm2431 = vcmp.eq.f32.partialorder %v2428, %v2430
        %v2432 = vsel %vm2431, %v2427, inf
        %2433 = vmin.xlane.f32.xlu0 %v2432
        %v2434 = vpop.xlane.xlu0 %2433
        %v2435 = vcvt.f32.s32 %v2434
        %v2436 = vcvt.f32.s32 %v2430
        %v2437 = vshll.u32 %v2436, 16
        %v2438 = vadd.s32 %v2437, %v2435
        %v2439 = vand.u32 %v2293, 65535
        %v2440 = vshra.s32 %v2293, 16
        %v2441 = vcvt.s32.f32 %v2439
        %v2442 = vcvt.s32.f32 %v2440
        %2443 = vmin.xlane.f32.xlu0 %v2442
        %v2444 = vpop.xlane.xlu0 %2443
        %vm2445 = vcmp.eq.f32.partialorder %v2442, %v2444
        %v2446 = vsel %vm2445, %v2441, inf
        %2447 = vmin.xlane.f32.xlu0 %v2446
        %v2448 = vpop.xlane.xlu0 %2447
        %v2449 = vcvt.f32.s32 %v2448
        %v2450 = vcvt.f32.s32 %v2444
        %v2451 = vshll.u32 %v2450, 16
        %v2452 = vadd.s32 %v2451, %v2449
        %v2453 = vand.u32 %v2294, 65535
        %v2454 = vshra.s32 %v2294, 16
        %v2455 = vcvt.s32.f32 %v2453
        %v2456 = vcvt.s32.f32 %v2454
        %2457 = vmin.xlane.f32.xlu0 %v2456
        %v2458 = vpop.xlane.xlu0 %2457
        %vm2459 = vcmp.eq.f32.partialorder %v2456, %v2458
        %v2460 = vsel %vm2459, %v2455, inf
        %2461 = vmin.xlane.f32.xlu0 %v2460
        %v2462 = vpop.xlane.xlu0 %2461
        %v2463 = vcvt.f32.s32 %v2462
        %v2464 = vcvt.f32.s32 %v2458
        %v2465 = vshll.u32 %v2464, 16
        %v2466 = vadd.s32 %v2465, %v2463
        %v2467 = vand.u32 %v2295, 65535
        %v2468 = vshra.s32 %v2295, 16
        %v2469 = vcvt.s32.f32 %v2467
        %v2470 = vcvt.s32.f32 %v2468
        %2471 = vmin.xlane.f32.xlu0 %v2470
        %v2472 = vpop.xlane.xlu0 %2471
        %vm2473 = vcmp.eq.f32.partialorder %v2470, %v2472
        %v2474 = vsel %vm2473, %v2469, inf
        %2475 = vmin.xlane.f32.xlu0 %v2474
        %v2476 = vpop.xlane.xlu0 %2475
        %v2477 = vcvt.f32.s32 %v2476
        %v2478 = vcvt.f32.s32 %v2472
        %v2479 = vshll.u32 %v2478, 16
        %v2480 = vadd.s32 %v2479, %v2477
        %v2481 = vand.u32 %v2296, 65535
        %v2482 = vshra.s32 %v2296, 16
        %v2483 = vcvt.s32.f32 %v2481
        %v2484 = vcvt.s32.f32 %v2482
        %2485 = vmin.xlane.f32.xlu0 %v2484
        %v2486 = vpop.xlane.xlu0 %2485
        %vm2487 = vcmp.eq.f32.partialorder %v2484, %v2486
        %v2488 = vsel %vm2487, %v2483, inf
        %2489 = vmin.xlane.f32.xlu0 %v2488
        %v2490 = vpop.xlane.xlu0 %2489
        %v2491 = vcvt.f32.s32 %v2490
        %v2492 = vcvt.f32.s32 %v2486
        %v2493 = vshll.u32 %v2492, 16
        %v2494 = vadd.s32 %v2493, %v2491
        %v2495 = vand.u32 %v2297, 65535
        %v2496 = vshra.s32 %v2297, 16
        %v2497 = vcvt.s32.f32 %v2495
        %v2498 = vcvt.s32.f32 %v2496
        %2499 = vmin.xlane.f32.xlu0 %v2498
        %v2500 = vpop.xlane.xlu0 %2499
        %vm2501 = vcmp.eq.f32.partialorder %v2498, %v2500
        %v2502 = vsel %vm2501, %v2497, inf
        %2503 = vmin.xlane.f32.xlu0 %v2502
        %v2504 = vpop.xlane.xlu0 %2503
        %v2505 = vcvt.f32.s32 %v2504
        %v2506 = vcvt.f32.s32 %v2500
        %v2507 = vshll.u32 %v2506, 16
        %v2508 = vadd.s32 %v2507, %v2505
        %v2509 = vand.u32 %v2298, 65535
        %v2510 = vshra.s32 %v2298, 16
        %v2511 = vcvt.s32.f32 %v2509
        %v2512 = vcvt.s32.f32 %v2510
        %2513 = vmin.xlane.f32.xlu0 %v2512
        %v2514 = vpop.xlane.xlu0 %2513
        %vm2515 = vcmp.eq.f32.partialorder %v2512, %v2514
        %v2516 = vsel %vm2515, %v2511, inf
        %2517 = vmin.xlane.f32.xlu0 %v2516
        %v2518 = vpop.xlane.xlu0 %2517
        %v2519 = vcvt.f32.s32 %v2518
        %v2520 = vcvt.f32.s32 %v2514
        %v2521 = vshll.u32 %v2520, 16
        %v2522 = vadd.s32 %v2521, %v2519
        %vm2523 = vcmp.eq.s32.totalorder %v1513, %v2312
        %vm2524 = vcmp.eq.s32.totalorder %v1513, %v2326
        %vm2525 = vcmp.eq.s32.totalorder %v1513, %v2340
        %vm2526 = vcmp.eq.s32.totalorder %v1513, %v2354
        %vm2527 = vcmp.eq.s32.totalorder %v1513, %v2368
        %vm2528 = vcmp.eq.s32.totalorder %v1513, %v2382
        %vm2529 = vcmp.eq.s32.totalorder %v1513, %v2396
        %vm2530 = vcmp.eq.s32.totalorder %v1513, %v2410
        %vm2531 = vcmp.eq.s32.totalorder %v1513, %v2424
        %vm2532 = vcmp.eq.s32.totalorder %v1513, %v2438
        %vm2533 = vcmp.eq.s32.totalorder %v1513, %v2452
        %vm2534 = vcmp.eq.s32.totalorder %v1513, %v2466
        %vm2535 = vcmp.eq.s32.totalorder %v1513, %v2480
        %vm2536 = vcmp.eq.s32.totalorder %v1513, %v2494
        %vm2537 = vcmp.eq.s32.totalorder %v1513, %v2508
        %vm2538 = vcmp.eq.s32.totalorder %v1513, %v2522
        %v2539 = vsel %vm2523, 1, 0
        %v2540 = vsel %vm2524, 1, 0
        %v2541 = vsel %vm2525, 1, 0
        %v2542 = vsel %vm2526, 1, 0
        %v2543 = vsel %vm2527, 1, 0
        %v2544 = vsel %vm2528, 1, 0
        %v2545 = vsel %vm2529, 1, 0
        %v2546 = vsel %vm2530, 1, 0
        %v2547 = vsel %vm2531, 1, 0
        %v2548 = vsel %vm2532, 1, 0
        %v2549 = vsel %vm2533, 1, 0
        %v2550 = vsel %vm2534, 1, 0
        %v2551 = vsel %vm2535, 1, 0
        %v2552 = vsel %vm2536, 1, 0
        %v2553 = vsel %vm2537, 1, 0
        %v2554 = vsel %vm2538, 1, 0
        %v2555 = vcvt.s32.f32 %v2539
        %v2556 = vcvt.s32.f32 %v2540
        %v2557 = vcvt.s32.f32 %v2541
        %v2558 = vcvt.s32.f32 %v2542
        %v2559 = vcvt.s32.f32 %v2543
        %v2560 = vcvt.s32.f32 %v2544
        %v2561 = vcvt.s32.f32 %v2545
        %v2562 = vcvt.s32.f32 %v2546
        %v2563 = vcvt.s32.f32 %v2547
        %v2564 = vcvt.s32.f32 %v2548
        %v2565 = vcvt.s32.f32 %v2549
        %v2566 = vcvt.s32.f32 %v2550
        %v2567 = vcvt.s32.f32 %v2551
        %v2568 = vcvt.s32.f32 %v2552
        %v2569 = vcvt.s32.f32 %v2553
        %v2570 = vcvt.s32.f32 %v2554
        %2571 = vst [vmem:[%s397 + $0x8] sm:$0xff] %v2555
        %2572 = vst [vmem:[%s397 + $0x28] sm:$0xff] %v2556
        %2573 = vst [vmem:[%s397 + $0x48] sm:$0xff] %v2557
        %2574 = vst [vmem:[%s397 + $0x68] sm:$0xff] %v2558
        %2575 = vst [vmem:[%s397 + $0x88] sm:$0xff] %v2559
        %2576 = vst [vmem:[%s397 + $0xa8] sm:$0xff] %v2560
        %2577 = vst [vmem:[%s397 + $0xc8] sm:$0xff] %v2561
        %2578 = vst [vmem:[%s397 + $0xe8] sm:$0xff] %v2562
        %2579 = vst [vmem:[%s397 + $0x108] sm:$0xff] %v2563
        %2580 = vst [vmem:[%s397 + $0x128] sm:$0xff] %v2564
        %2581 = vst [vmem:[%s397 + $0x148] sm:$0xff] %v2565
        %2582 = vst [vmem:[%s397 + $0x168] sm:$0xff] %v2566
        %2583 = vst [vmem:[%s397 + $0x188] sm:$0xff] %v2567
        %2584 = vst [vmem:[%s397 + $0x1a8] sm:$0xff] %v2568
        %2585 = vst [vmem:[%s397 + $0x1c8] sm:$0xff] %v2569
        %2586 = vst [vmem:[%s397 + $0x1e8] sm:$0xff] %v2570
        %2587 = vmax.xlane.f32.xlu0 %v1257
        %v2588 = vpop.xlane.xlu0 %2587
        %2589 = vmax.xlane.f32.xlu0 %v1261
        %v2590 = vpop.xlane.xlu0 %2589
        %2591 = vmax.xlane.f32.xlu0 %v1265
        %v2592 = vpop.xlane.xlu0 %2591
        %2593 = vmax.xlane.f32.xlu0 %v1269
        %v2594 = vpop.xlane.xlu0 %2593
        %2595 = vmax.xlane.f32.xlu0 %v1273
        %v2596 = vpop.xlane.xlu0 %2595
        %2597 = vmax.xlane.f32.xlu0 %v1277
        %v2598 = vpop.xlane.xlu0 %2597
        %2599 = vmax.xlane.f32.xlu0 %v1281
        %v2600 = vpop.xlane.xlu0 %2599
        %2601 = vmax.xlane.f32.xlu0 %v1285
        %v2602 = vpop.xlane.xlu0 %2601
        %2603 = vmax.xlane.f32.xlu0 %v1289
        %v2604 = vpop.xlane.xlu0 %2603
        %2605 = vmax.xlane.f32.xlu0 %v1293
        %v2606 = vpop.xlane.xlu0 %2605
        %2607 = vmax.xlane.f32.xlu0 %v1297
        %v2608 = vpop.xlane.xlu0 %2607
        %2609 = vmax.xlane.f32.xlu0 %v1301
        %v2610 = vpop.xlane.xlu0 %2609
        %2611 = vmax.xlane.f32.xlu0 %v1305
        %v2612 = vpop.xlane.xlu0 %2611
        %2613 = vmax.xlane.f32.xlu0 %v1309
        %v2614 = vpop.xlane.xlu0 %2613
        %2615 = vmax.xlane.f32.xlu0 %v1313
        %v2616 = vpop.xlane.xlu0 %2615
        %2617 = vmax.xlane.f32.xlu0 %v1317
        %v2618 = vpop.xlane.xlu0 %2617
        %vm2619 = vcmp.ge.f32.partialorder %v1257, %v2588
        %vm2620 = vcmp.ge.f32.partialorder %v1261, %v2590
        %vm2621 = vcmp.ge.f32.partialorder %v1265, %v2592
        %vm2622 = vcmp.ge.f32.partialorder %v1269, %v2594
        %vm2623 = vcmp.ge.f32.partialorder %v1273, %v2596
        %vm2624 = vcmp.ge.f32.partialorder %v1277, %v2598
        %vm2625 = vcmp.ge.f32.partialorder %v1281, %v2600
        %vm2626 = vcmp.ge.f32.partialorder %v1285, %v2602
        %vm2627 = vcmp.ge.f32.partialorder %v1289, %v2604
        %vm2628 = vcmp.ge.f32.partialorder %v1293, %v2606
        %vm2629 = vcmp.ge.f32.partialorder %v1297, %v2608
        %vm2630 = vcmp.ge.f32.partialorder %v1301, %v2610
        %vm2631 = vcmp.ge.f32.partialorder %v1305, %v2612
        %vm2632 = vcmp.ge.f32.partialorder %v1309, %v2614
        %vm2633 = vcmp.ge.f32.partialorder %v1313, %v2616
        %vm2634 = vcmp.ge.f32.partialorder %v1317, %v2618
        %v2635 = vsel %vm2619, %v1513, 128
        %v2636 = vsel %vm2620, %v1513, 128
        %v2637 = vsel %vm2621, %v1513, 128
        %v2638 = vsel %vm2622, %v1513, 128
        %v2639 = vsel %vm2623, %v1513, 128
        %v2640 = vsel %vm2624, %v1513, 128
        %v2641 = vsel %vm2625, %v1513, 128
        %v2642 = vsel %vm2626, %v1513, 128
        %v2643 = vsel %vm2627, %v1513, 128
        %v2644 = vsel %vm2628, %v1513, 128
        %v2645 = vsel %vm2629, %v1513, 128
        %v2646 = vsel %vm2630, %v1513, 128
        %v2647 = vsel %vm2631, %v1513, 128
        %v2648 = vsel %vm2632, %v1513, 128
        %v2649 = vsel %vm2633, %v1513, 128
        %v2650 = vsel %vm2634, %v1513, 128
        %v2651 = vand.u32 %v2635, 65535
        %v2652 = vshra.s32 %v2635, 16
        %v2653 = vcvt.s32.f32 %v2651
        %v2654 = vcvt.s32.f32 %v2652
        %2655 = vmin.xlane.f32.xlu0 %v2654
        %v2656 = vpop.xlane.xlu0 %2655
        %vm2657 = vcmp.eq.f32.partialorder %v2654, %v2656
        %v2658 = vsel %vm2657, %v2653, inf
        %2659 = vmin.xlane.f32.xlu0 %v2658
        %v2660 = vpop.xlane.xlu0 %2659
        %v2661 = vcvt.f32.s32 %v2660
        %v2662 = vcvt.f32.s32 %v2656
        %v2663 = vshll.u32 %v2662, 16
        %v2664 = vadd.s32 %v2663, %v2661
        %v2665 = vand.u32 %v2636, 65535
        %v2666 = vshra.s32 %v2636, 16
        %v2667 = vcvt.s32.f32 %v2665
        %v2668 = vcvt.s32.f32 %v2666
        %2669 = vmin.xlane.f32.xlu0 %v2668
        %v2670 = vpop.xlane.xlu0 %2669
        %vm2671 = vcmp.eq.f32.partialorder %v2668, %v2670
        %v2672 = vsel %vm2671, %v2667, inf
        %2673 = vmin.xlane.f32.xlu0 %v2672
        %v2674 = vpop.xlane.xlu0 %2673
        %v2675 = vcvt.f32.s32 %v2674
        %v2676 = vcvt.f32.s32 %v2670
        %v2677 = vshll.u32 %v2676, 16
        %v2678 = vadd.s32 %v2677, %v2675
        %v2679 = vand.u32 %v2637, 65535
        %v2680 = vshra.s32 %v2637, 16
        %v2681 = vcvt.s32.f32 %v2679
        %v2682 = vcvt.s32.f32 %v2680
        %2683 = vmin.xlane.f32.xlu0 %v2682
        %v2684 = vpop.xlane.xlu0 %2683
        %vm2685 = vcmp.eq.f32.partialorder %v2682, %v2684
        %v2686 = vsel %vm2685, %v2681, inf
        %2687 = vmin.xlane.f32.xlu0 %v2686
        %v2688 = vpop.xlane.xlu0 %2687
        %v2689 = vcvt.f32.s32 %v2688
        %v2690 = vcvt.f32.s32 %v2684
        %v2691 = vshll.u32 %v2690, 16
        %v2692 = vadd.s32 %v2691, %v2689
        %v2693 = vand.u32 %v2638, 65535
        %v2694 = vshra.s32 %v2638, 16
        %v2695 = vcvt.s32.f32 %v2693
        %v2696 = vcvt.s32.f32 %v2694
        %2697 = vmin.xlane.f32.xlu0 %v2696
        %v2698 = vpop.xlane.xlu0 %2697
        %vm2699 = vcmp.eq.f32.partialorder %v2696, %v2698
        %v2700 = vsel %vm2699, %v2695, inf
        %2701 = vmin.xlane.f32.xlu0 %v2700
        %v2702 = vpop.xlane.xlu0 %2701
        %v2703 = vcvt.f32.s32 %v2702
        %v2704 = vcvt.f32.s32 %v2698
        %v2705 = vshll.u32 %v2704, 16
        %v2706 = vadd.s32 %v2705, %v2703
        %v2707 = vand.u32 %v2639, 65535
        %v2708 = vshra.s32 %v2639, 16
        %v2709 = vcvt.s32.f32 %v2707
        %v2710 = vcvt.s32.f32 %v2708
        %2711 = vmin.xlane.f32.xlu0 %v2710
        %v2712 = vpop.xlane.xlu0 %2711
        %vm2713 = vcmp.eq.f32.partialorder %v2710, %v2712
        %v2714 = vsel %vm2713, %v2709, inf
        %2715 = vmin.xlane.f32.xlu0 %v2714
        %v2716 = vpop.xlane.xlu0 %2715
        %v2717 = vcvt.f32.s32 %v2716
        %v2718 = vcvt.f32.s32 %v2712
        %v2719 = vshll.u32 %v2718, 16
        %v2720 = vadd.s32 %v2719, %v2717
        %v2721 = vand.u32 %v2640, 65535
        %v2722 = vshra.s32 %v2640, 16
        %v2723 = vcvt.s32.f32 %v2721
        %v2724 = vcvt.s32.f32 %v2722
        %2725 = vmin.xlane.f32.xlu0 %v2724
        %v2726 = vpop.xlane.xlu0 %2725
        %vm2727 = vcmp.eq.f32.partialorder %v2724, %v2726
        %v2728 = vsel %vm2727, %v2723, inf
        %2729 = vmin.xlane.f32.xlu0 %v2728
        %v2730 = vpop.xlane.xlu0 %2729
        %v2731 = vcvt.f32.s32 %v2730
        %v2732 = vcvt.f32.s32 %v2726
        %v2733 = vshll.u32 %v2732, 16
        %v2734 = vadd.s32 %v2733, %v2731
        %v2735 = vand.u32 %v2641, 65535
        %v2736 = vshra.s32 %v2641, 16
        %v2737 = vcvt.s32.f32 %v2735
        %v2738 = vcvt.s32.f32 %v2736
        %2739 = vmin.xlane.f32.xlu0 %v2738
        %v2740 = vpop.xlane.xlu0 %2739
        %vm2741 = vcmp.eq.f32.partialorder %v2738, %v2740
        %v2742 = vsel %vm2741, %v2737, inf
        %2743 = vmin.xlane.f32.xlu0 %v2742
        %v2744 = vpop.xlane.xlu0 %2743
        %v2745 = vcvt.f32.s32 %v2744
        %v2746 = vcvt.f32.s32 %v2740
        %v2747 = vshll.u32 %v2746, 16
        %v2748 = vadd.s32 %v2747, %v2745
        %v2749 = vand.u32 %v2642, 65535
        %v2750 = vshra.s32 %v2642, 16
        %v2751 = vcvt.s32.f32 %v2749
        %v2752 = vcvt.s32.f32 %v2750
        %2753 = vmin.xlane.f32.xlu0 %v2752
        %v2754 = vpop.xlane.xlu0 %2753
        %vm2755 = vcmp.eq.f32.partialorder %v2752, %v2754
        %v2756 = vsel %vm2755, %v2751, inf
        %2757 = vmin.xlane.f32.xlu0 %v2756
        %v2758 = vpop.xlane.xlu0 %2757
        %v2759 = vcvt.f32.s32 %v2758
        %v2760 = vcvt.f32.s32 %v2754
        %v2761 = vshll.u32 %v2760, 16
        %v2762 = vadd.s32 %v2761, %v2759
        %v2763 = vand.u32 %v2643, 65535
        %v2764 = vshra.s32 %v2643, 16
        %v2765 = vcvt.s32.f32 %v2763
        %v2766 = vcvt.s32.f32 %v2764
        %2767 = vmin.xlane.f32.xlu0 %v2766
        %v2768 = vpop.xlane.xlu0 %2767
        %vm2769 = vcmp.eq.f32.partialorder %v2766, %v2768
        %v2770 = vsel %vm2769, %v2765, inf
        %2771 = vmin.xlane.f32.xlu0 %v2770
        %v2772 = vpop.xlane.xlu0 %2771
        %v2773 = vcvt.f32.s32 %v2772
        %v2774 = vcvt.f32.s32 %v2768
        %v2775 = vshll.u32 %v2774, 16
        %v2776 = vadd.s32 %v2775, %v2773
        %v2777 = vand.u32 %v2644, 65535
        %v2778 = vshra.s32 %v2644, 16
        %v2779 = vcvt.s32.f32 %v2777
        %v2780 = vcvt.s32.f32 %v2778
        %2781 = vmin.xlane.f32.xlu0 %v2780
        %v2782 = vpop.xlane.xlu0 %2781
        %vm2783 = vcmp.eq.f32.partialorder %v2780, %v2782
        %v2784 = vsel %vm2783, %v2779, inf
        %2785 = vmin.xlane.f32.xlu0 %v2784
        %v2786 = vpop.xlane.xlu0 %2785
        %v2787 = vcvt.f32.s32 %v2786
        %v2788 = vcvt.f32.s32 %v2782
        %v2789 = vshll.u32 %v2788, 16
        %v2790 = vadd.s32 %v2789, %v2787
        %v2791 = vand.u32 %v2645, 65535
        %v2792 = vshra.s32 %v2645, 16
        %v2793 = vcvt.s32.f32 %v2791
        %v2794 = vcvt.s32.f32 %v2792
        %2795 = vmin.xlane.f32.xlu0 %v2794
        %v2796 = vpop.xlane.xlu0 %2795
        %vm2797 = vcmp.eq.f32.partialorder %v2794, %v2796
        %v2798 = vsel %vm2797, %v2793, inf
        %2799 = vmin.xlane.f32.xlu0 %v2798
        %v2800 = vpop.xlane.xlu0 %2799
        %v2801 = vcvt.f32.s32 %v2800
        %v2802 = vcvt.f32.s32 %v2796
        %v2803 = vshll.u32 %v2802, 16
        %v2804 = vadd.s32 %v2803, %v2801
        %v2805 = vand.u32 %v2646, 65535
        %v2806 = vshra.s32 %v2646, 16
        %v2807 = vcvt.s32.f32 %v2805
        %v2808 = vcvt.s32.f32 %v2806
        %2809 = vmin.xlane.f32.xlu0 %v2808
        %v2810 = vpop.xlane.xlu0 %2809
        %vm2811 = vcmp.eq.f32.partialorder %v2808, %v2810
        %v2812 = vsel %vm2811, %v2807, inf
        %2813 = vmin.xlane.f32.xlu0 %v2812
        %v2814 = vpop.xlane.xlu0 %2813
        %v2815 = vcvt.f32.s32 %v2814
        %v2816 = vcvt.f32.s32 %v2810
        %v2817 = vshll.u32 %v2816, 16
        %v2818 = vadd.s32 %v2817, %v2815
        %v2819 = vand.u32 %v2647, 65535
        %v2820 = vshra.s32 %v2647, 16
        %v2821 = vcvt.s32.f32 %v2819
        %v2822 = vcvt.s32.f32 %v2820
        %2823 = vmin.xlane.f32.xlu0 %v2822
        %v2824 = vpop.xlane.xlu0 %2823
        %vm2825 = vcmp.eq.f32.partialorder %v2822, %v2824
        %v2826 = vsel %vm2825, %v2821, inf
        %2827 = vmin.xlane.f32.xlu0 %v2826
        %v2828 = vpop.xlane.xlu0 %2827
        %v2829 = vcvt.f32.s32 %v2828
        %v2830 = vcvt.f32.s32 %v2824
        %v2831 = vshll.u32 %v2830, 16
        %v2832 = vadd.s32 %v2831, %v2829
        %v2833 = vand.u32 %v2648, 65535
        %v2834 = vshra.s32 %v2648, 16
        %v2835 = vcvt.s32.f32 %v2833
        %v2836 = vcvt.s32.f32 %v2834
        %2837 = vmin.xlane.f32.xlu0 %v2836
        %v2838 = vpop.xlane.xlu0 %2837
        %vm2839 = vcmp.eq.f32.partialorder %v2836, %v2838
        %v2840 = vsel %vm2839, %v2835, inf
        %2841 = vmin.xlane.f32.xlu0 %v2840
        %v2842 = vpop.xlane.xlu0 %2841
        %v2843 = vcvt.f32.s32 %v2842
        %v2844 = vcvt.f32.s32 %v2838
        %v2845 = vshll.u32 %v2844, 16
        %v2846 = vadd.s32 %v2845, %v2843
        %v2847 = vand.u32 %v2649, 65535
        %v2848 = vshra.s32 %v2649, 16
        %v2849 = vcvt.s32.f32 %v2847
        %v2850 = vcvt.s32.f32 %v2848
        %2851 = vmin.xlane.f32.xlu0 %v2850
        %v2852 = vpop.xlane.xlu0 %2851
        %vm2853 = vcmp.eq.f32.partialorder %v2850, %v2852
        %v2854 = vsel %vm2853, %v2849, inf
        %2855 = vmin.xlane.f32.xlu0 %v2854
        %v2856 = vpop.xlane.xlu0 %2855
        %v2857 = vcvt.f32.s32 %v2856
        %v2858 = vcvt.f32.s32 %v2852
        %v2859 = vshll.u32 %v2858, 16
        %v2860 = vadd.s32 %v2859, %v2857
        %v2861 = vand.u32 %v2650, 65535
        %v2862 = vshra.s32 %v2650, 16
        %v2863 = vcvt.s32.f32 %v2861
        %v2864 = vcvt.s32.f32 %v2862
        %2865 = vmin.xlane.f32.xlu0 %v2864
        %v2866 = vpop.xlane.xlu0 %2865
        %vm2867 = vcmp.eq.f32.partialorder %v2864, %v2866
        %v2868 = vsel %vm2867, %v2863, inf
        %2869 = vmin.xlane.f32.xlu0 %v2868
        %v2870 = vpop.xlane.xlu0 %2869
        %v2871 = vcvt.f32.s32 %v2870
        %v2872 = vcvt.f32.s32 %v2866
        %v2873 = vshll.u32 %v2872, 16
        %v2874 = vadd.s32 %v2873, %v2871
        %vm2875 = vcmp.eq.s32.totalorder %v1513, %v2664
        %vm2876 = vcmp.eq.s32.totalorder %v1513, %v2678
        %vm2877 = vcmp.eq.s32.totalorder %v1513, %v2692
        %vm2878 = vcmp.eq.s32.totalorder %v1513, %v2706
        %vm2879 = vcmp.eq.s32.totalorder %v1513, %v2720
        %vm2880 = vcmp.eq.s32.totalorder %v1513, %v2734
        %vm2881 = vcmp.eq.s32.totalorder %v1513, %v2748
        %vm2882 = vcmp.eq.s32.totalorder %v1513, %v2762
        %vm2883 = vcmp.eq.s32.totalorder %v1513, %v2776
        %vm2884 = vcmp.eq.s32.totalorder %v1513, %v2790
        %vm2885 = vcmp.eq.s32.totalorder %v1513, %v2804
        %vm2886 = vcmp.eq.s32.totalorder %v1513, %v2818
        %vm2887 = vcmp.eq.s32.totalorder %v1513, %v2832
        %vm2888 = vcmp.eq.s32.totalorder %v1513, %v2846
        %vm2889 = vcmp.eq.s32.totalorder %v1513, %v2860
        %vm2890 = vcmp.eq.s32.totalorder %v1513, %v2874
        %v2891 = vsel %vm2875, 1, 0
        %v2892 = vsel %vm2876, 1, 0
        %v2893 = vsel %vm2877, 1, 0
        %v2894 = vsel %vm2878, 1, 0
        %v2895 = vsel %vm2879, 1, 0
        %v2896 = vsel %vm2880, 1, 0
        %v2897 = vsel %vm2881, 1, 0
        %v2898 = vsel %vm2882, 1, 0
        %v2899 = vsel %vm2883, 1, 0
        %v2900 = vsel %vm2884, 1, 0
        %v2901 = vsel %vm2885, 1, 0
        %v2902 = vsel %vm2886, 1, 0
        %v2903 = vsel %vm2887, 1, 0
        %v2904 = vsel %vm2888, 1, 0
        %v2905 = vsel %vm2889, 1, 0
        %v2906 = vsel %vm2890, 1, 0
        %v2907 = vcvt.s32.f32 %v2891
        %v2908 = vcvt.s32.f32 %v2892
        %v2909 = vcvt.s32.f32 %v2893
        %v2910 = vcvt.s32.f32 %v2894
        %v2911 = vcvt.s32.f32 %v2895
        %v2912 = vcvt.s32.f32 %v2896
        %v2913 = vcvt.s32.f32 %v2897
        %v2914 = vcvt.s32.f32 %v2898
        %v2915 = vcvt.s32.f32 %v2899
        %v2916 = vcvt.s32.f32 %v2900
        %v2917 = vcvt.s32.f32 %v2901
        %v2918 = vcvt.s32.f32 %v2902
        %v2919 = vcvt.s32.f32 %v2903
        %v2920 = vcvt.s32.f32 %v2904
        %v2921 = vcvt.s32.f32 %v2905
        %v2922 = vcvt.s32.f32 %v2906
        %2923 = vst [vmem:[%s411 + $0x8] sm:$0xff] %v2907
        %2924 = vst [vmem:[%s411 + $0x28] sm:$0xff] %v2908
        %2925 = vst [vmem:[%s411 + $0x48] sm:$0xff] %v2909
        %2926 = vst [vmem:[%s411 + $0x68] sm:$0xff] %v2910
        %2927 = vst [vmem:[%s411 + $0x88] sm:$0xff] %v2911
        %2928 = vst [vmem:[%s411 + $0xa8] sm:$0xff] %v2912
        %2929 = vst [vmem:[%s411 + $0xc8] sm:$0xff] %v2913
        %2930 = vst [vmem:[%s411 + $0xe8] sm:$0xff] %v2914
        %2931 = vst [vmem:[%s411 + $0x108] sm:$0xff] %v2915
        %2932 = vst [vmem:[%s411 + $0x128] sm:$0xff] %v2916
        %2933 = vst [vmem:[%s411 + $0x148] sm:$0xff] %v2917
        %2934 = vst [vmem:[%s411 + $0x168] sm:$0xff] %v2918
        %2935 = vst [vmem:[%s411 + $0x188] sm:$0xff] %v2919
        %2936 = vst [vmem:[%s411 + $0x1a8] sm:$0xff] %v2920
        %2937 = vst [vmem:[%s411 + $0x1c8] sm:$0xff] %v2921
        %2938 = vst [vmem:[%s411 + $0x1e8] sm:$0xff] %v2922
        %vm2939 = vcmask 15368
        %2940 = vst.msk [vmem:[%s426] sm:$0xff] %vm2939, %v2664
        %2941 = vst.msk [vmem:[%s426 + $0x8] sm:$0xff] %vm2939, %v2678
        %2942 = vst.msk [vmem:[%s426 + $0x10] sm:$0xff] %vm2939, %v2692
        %2943 = vst.msk [vmem:[%s426 + $0x18] sm:$0xff] %vm2939, %v2706
        %2944 = vst.msk [vmem:[%s426 + $0x20] sm:$0xff] %vm2939, %v2720
        %2945 = vst.msk [vmem:[%s426 + $0x28] sm:$0xff] %vm2939, %v2734
        %2946 = vst.msk [vmem:[%s426 + $0x30] sm:$0xff] %vm2939, %v2748
        %2947 = vst.msk [vmem:[%s426 + $0x38] sm:$0xff] %vm2939, %v2762
        %2948 = vst.msk [vmem:[%s426 + $0x40] sm:$0xff] %vm2939, %v2776
        %2949 = vst.msk [vmem:[%s426 + $0x48] sm:$0xff] %vm2939, %v2790
        %2950 = vst.msk [vmem:[%s426 + $0x50] sm:$0xff] %vm2939, %v2804
        %2951 = vst.msk [vmem:[%s426 + $0x58] sm:$0xff] %vm2939, %v2818
        %2952 = vst.msk [vmem:[%s426 + $0x60] sm:$0xff] %vm2939, %v2832
        %2953 = vst.msk [vmem:[%s426 + $0x68] sm:$0xff] %vm2939, %v2846
        %2954 = vst.msk [vmem:[%s426 + $0x70] sm:$0xff] %vm2939, %v2860
        %2955 = vst.msk [vmem:[%s426 + $0x78] sm:$0xff] %vm2939, %v2874
        %2956 = vmax.xlane.f32.xlu0 %v1450
        %v2957 = vpop.xlane.xlu0 %2956
        %2958 = vmax.xlane.f32.xlu0 %v1454
        %v2959 = vpop.xlane.xlu0 %2958
        %2960 = vmax.xlane.f32.xlu0 %v1458
        %v2961 = vpop.xlane.xlu0 %2960
        %2962 = vmax.xlane.f32.xlu0 %v1462
        %v2963 = vpop.xlane.xlu0 %2962
        %2964 = vmax.xlane.f32.xlu0 %v1466
        %v2965 = vpop.xlane.xlu0 %2964
        %2966 = vmax.xlane.f32.xlu0 %v1470
        %v2967 = vpop.xlane.xlu0 %2966
        %2968 = vmax.xlane.f32.xlu0 %v1474
        %v2969 = vpop.xlane.xlu0 %2968
        %2970 = vmax.xlane.f32.xlu0 %v1478
        %v2971 = vpop.xlane.xlu0 %2970
        %2972 = vmax.xlane.f32.xlu0 %v1482
        %v2973 = vpop.xlane.xlu0 %2972
        %2974 = vmax.xlane.f32.xlu0 %v1486
        %v2975 = vpop.xlane.xlu0 %2974
        %2976 = vmax.xlane.f32.xlu0 %v1490
        %v2977 = vpop.xlane.xlu0 %2976
        %2978 = vmax.xlane.f32.xlu0 %v1494
        %v2979 = vpop.xlane.xlu0 %2978
        %2980 = vmax.xlane.f32.xlu0 %v1498
        %v2981 = vpop.xlane.xlu0 %2980
        %2982 = vmax.xlane.f32.xlu0 %v1502
        %v2983 = vpop.xlane.xlu0 %2982
        %2984 = vmax.xlane.f32.xlu0 %v1506
        %v2985 = vpop.xlane.xlu0 %2984
        %2986 = vmax.xlane.f32.xlu0 %v1510
        %v2987 = vpop.xlane.xlu0 %2986
        %vm2988 = vcmp.ge.f32.partialorder %v1450, %v2957
        %vm2989 = vcmp.ge.f32.partialorder %v1454, %v2959
        %vm2990 = vcmp.ge.f32.partialorder %v1458, %v2961
        %vm2991 = vcmp.ge.f32.partialorder %v1462, %v2963
        %vm2992 = vcmp.ge.f32.partialorder %v1466, %v2965
        %vm2993 = vcmp.ge.f32.partialorder %v1470, %v2967
        %vm2994 = vcmp.ge.f32.partialorder %v1474, %v2969
        %vm2995 = vcmp.ge.f32.partialorder %v1478, %v2971
        %vm2996 = vcmp.ge.f32.partialorder %v1482, %v2973
        %vm2997 = vcmp.ge.f32.partialorder %v1486, %v2975
        %vm2998 = vcmp.ge.f32.partialorder %v1490, %v2977
        %vm2999 = vcmp.ge.f32.partialorder %v1494, %v2979
        %vm3000 = vcmp.ge.f32.partialorder %v1498, %v2981
        %vm3001 = vcmp.ge.f32.partialorder %v1502, %v2983
        %vm3002 = vcmp.ge.f32.partialorder %v1506, %v2985
        %vm3003 = vcmp.ge.f32.partialorder %v1510, %v2987
        %v3004 = vsel %vm2988, %v1513, 128
        %v3005 = vsel %vm2989, %v1513, 128
        %v3006 = vsel %vm2990, %v1513, 128
        %v3007 = vsel %vm2991, %v1513, 128
        %v3008 = vsel %vm2992, %v1513, 128
        %v3009 = vsel %vm2993, %v1513, 128
        %v3010 = vsel %vm2994, %v1513, 128
        %v3011 = vsel %vm2995, %v1513, 128
        %v3012 = vsel %vm2996, %v1513, 128
        %v3013 = vsel %vm2997, %v1513, 128
        %v3014 = vsel %vm2998, %v1513, 128
        %v3015 = vsel %vm2999, %v1513, 128
        %v3016 = vsel %vm3000, %v1513, 128
        %v3017 = vsel %vm3001, %v1513, 128
        %v3018 = vsel %vm3002, %v1513, 128
        %v3019 = vsel %vm3003, %v1513, 128
        %v3020 = vand.u32 %v3004, 65535
        %v3021 = vshra.s32 %v3004, 16
        %v3022 = vcvt.s32.f32 %v3020
        %v3023 = vcvt.s32.f32 %v3021
        %3024 = vmin.xlane.f32.xlu0 %v3023
        %v3025 = vpop.xlane.xlu0 %3024
        %vm3026 = vcmp.eq.f32.partialorder %v3023, %v3025
        %v3027 = vsel %vm3026, %v3022, inf
        %3028 = vmin.xlane.f32.xlu0 %v3027
        %v3029 = vpop.xlane.xlu0 %3028
        %v3030 = vcvt.f32.s32 %v3029
        %v3031 = vcvt.f32.s32 %v3025
        %v3032 = vshll.u32 %v3031, 16
        %v3033 = vadd.s32 %v3032, %v3030
        %v3034 = vand.u32 %v3005, 65535
        %v3035 = vshra.s32 %v3005, 16
        %v3036 = vcvt.s32.f32 %v3034
        %v3037 = vcvt.s32.f32 %v3035
        %3038 = vmin.xlane.f32.xlu0 %v3037
        %v3039 = vpop.xlane.xlu0 %3038
        %vm3040 = vcmp.eq.f32.partialorder %v3037, %v3039
        %v3041 = vsel %vm3040, %v3036, inf
        %3042 = vmin.xlane.f32.xlu0 %v3041
        %v3043 = vpop.xlane.xlu0 %3042
        %v3044 = vcvt.f32.s32 %v3043
        %v3045 = vcvt.f32.s32 %v3039
        %v3046 = vshll.u32 %v3045, 16
        %v3047 = vadd.s32 %v3046, %v3044
        %v3048 = vand.u32 %v3006, 65535
        %v3049 = vshra.s32 %v3006, 16
        %v3050 = vcvt.s32.f32 %v3048
        %v3051 = vcvt.s32.f32 %v3049
        %3052 = vmin.xlane.f32.xlu0 %v3051
        %v3053 = vpop.xlane.xlu0 %3052
        %vm3054 = vcmp.eq.f32.partialorder %v3051, %v3053
        %v3055 = vsel %vm3054, %v3050, inf
        %3056 = vmin.xlane.f32.xlu0 %v3055
        %v3057 = vpop.xlane.xlu0 %3056
        %v3058 = vcvt.f32.s32 %v3057
        %v3059 = vcvt.f32.s32 %v3053
        %v3060 = vshll.u32 %v3059, 16
        %v3061 = vadd.s32 %v3060, %v3058
        %v3062 = vand.u32 %v3007, 65535
        %v3063 = vshra.s32 %v3007, 16
        %v3064 = vcvt.s32.f32 %v3062
        %v3065 = vcvt.s32.f32 %v3063
        %3066 = vmin.xlane.f32.xlu0 %v3065
        %v3067 = vpop.xlane.xlu0 %3066
        %vm3068 = vcmp.eq.f32.partialorder %v3065, %v3067
        %v3069 = vsel %vm3068, %v3064, inf
        %3070 = vmin.xlane.f32.xlu0 %v3069
        %v3071 = vpop.xlane.xlu0 %3070
        %v3072 = vcvt.f32.s32 %v3071
        %v3073 = vcvt.f32.s32 %v3067
        %v3074 = vshll.u32 %v3073, 16
        %v3075 = vadd.s32 %v3074, %v3072
        %v3076 = vand.u32 %v3008, 65535
        %v3077 = vshra.s32 %v3008, 16
        %v3078 = vcvt.s32.f32 %v3076
        %v3079 = vcvt.s32.f32 %v3077
        %3080 = vmin.xlane.f32.xlu0 %v3079
        %v3081 = vpop.xlane.xlu0 %3080
        %vm3082 = vcmp.eq.f32.partialorder %v3079, %v3081
        %v3083 = vsel %vm3082, %v3078, inf
        %3084 = vmin.xlane.f32.xlu0 %v3083
        %v3085 = vpop.xlane.xlu0 %3084
        %v3086 = vcvt.f32.s32 %v3085
        %v3087 = vcvt.f32.s32 %v3081
        %v3088 = vshll.u32 %v3087, 16
        %v3089 = vadd.s32 %v3088, %v3086
        %v3090 = vand.u32 %v3009, 65535
        %v3091 = vshra.s32 %v3009, 16
        %v3092 = vcvt.s32.f32 %v3090
        %v3093 = vcvt.s32.f32 %v3091
        %3094 = vmin.xlane.f32.xlu0 %v3093
        %v3095 = vpop.xlane.xlu0 %3094
        %vm3096 = vcmp.eq.f32.partialorder %v3093, %v3095
        %v3097 = vsel %vm3096, %v3092, inf
        %3098 = vmin.xlane.f32.xlu0 %v3097
        %v3099 = vpop.xlane.xlu0 %3098
        %v3100 = vcvt.f32.s32 %v3099
        %v3101 = vcvt.f32.s32 %v3095
        %v3102 = vshll.u32 %v3101, 16
        %v3103 = vadd.s32 %v3102, %v3100
        %v3104 = vand.u32 %v3010, 65535
        %v3105 = vshra.s32 %v3010, 16
        %v3106 = vcvt.s32.f32 %v3104
        %v3107 = vcvt.s32.f32 %v3105
        %3108 = vmin.xlane.f32.xlu0 %v3107
        %v3109 = vpop.xlane.xlu0 %3108
        %vm3110 = vcmp.eq.f32.partialorder %v3107, %v3109
        %v3111 = vsel %vm3110, %v3106, inf
        %3112 = vmin.xlane.f32.xlu0 %v3111
        %v3113 = vpop.xlane.xlu0 %3112
        %v3114 = vcvt.f32.s32 %v3113
        %v3115 = vcvt.f32.s32 %v3109
        %v3116 = vshll.u32 %v3115, 16
        %v3117 = vadd.s32 %v3116, %v3114
        %v3118 = vand.u32 %v3011, 65535
        %v3119 = vshra.s32 %v3011, 16
        %v3120 = vcvt.s32.f32 %v3118
        %v3121 = vcvt.s32.f32 %v3119
        %3122 = vmin.xlane.f32.xlu0 %v3121
        %v3123 = vpop.xlane.xlu0 %3122
        %vm3124 = vcmp.eq.f32.partialorder %v3121, %v3123
        %v3125 = vsel %vm3124, %v3120, inf
        %3126 = vmin.xlane.f32.xlu0 %v3125
        %v3127 = vpop.xlane.xlu0 %3126
        %v3128 = vcvt.f32.s32 %v3127
        %v3129 = vcvt.f32.s32 %v3123
        %v3130 = vshll.u32 %v3129, 16
        %v3131 = vadd.s32 %v3130, %v3128
        %v3132 = vand.u32 %v3012, 65535
        %v3133 = vshra.s32 %v3012, 16
        %v3134 = vcvt.s32.f32 %v3132
        %v3135 = vcvt.s32.f32 %v3133
        %3136 = vmin.xlane.f32.xlu0 %v3135
        %v3137 = vpop.xlane.xlu0 %3136
        %vm3138 = vcmp.eq.f32.partialorder %v3135, %v3137
        %v3139 = vsel %vm3138, %v3134, inf
        %3140 = vmin.xlane.f32.xlu0 %v3139
        %v3141 = vpop.xlane.xlu0 %3140
        %v3142 = vcvt.f32.s32 %v3141
        %v3143 = vcvt.f32.s32 %v3137
        %v3144 = vshll.u32 %v3143, 16
        %v3145 = vadd.s32 %v3144, %v3142
        %v3146 = vand.u32 %v3013, 65535
        %v3147 = vshra.s32 %v3013, 16
        %v3148 = vcvt.s32.f32 %v3146
        %v3149 = vcvt.s32.f32 %v3147
        %3150 = vmin.xlane.f32.xlu0 %v3149
        %v3151 = vpop.xlane.xlu0 %3150
        %vm3152 = vcmp.eq.f32.partialorder %v3149, %v3151
        %v3153 = vsel %vm3152, %v3148, inf
        %3154 = vmin.xlane.f32.xlu0 %v3153
        %v3155 = vpop.xlane.xlu0 %3154
        %v3156 = vcvt.f32.s32 %v3155
        %v3157 = vcvt.f32.s32 %v3151
        %v3158 = vshll.u32 %v3157, 16
        %v3159 = vadd.s32 %v3158, %v3156
        %v3160 = vand.u32 %v3014, 65535
        %v3161 = vshra.s32 %v3014, 16
        %v3162 = vcvt.s32.f32 %v3160
        %v3163 = vcvt.s32.f32 %v3161
        %3164 = vmin.xlane.f32.xlu0 %v3163
        %v3165 = vpop.xlane.xlu0 %3164
        %vm3166 = vcmp.eq.f32.partialorder %v3163, %v3165
        %v3167 = vsel %vm3166, %v3162, inf
        %3168 = vmin.xlane.f32.xlu0 %v3167
        %v3169 = vpop.xlane.xlu0 %3168
        %v3170 = vcvt.f32.s32 %v3169
        %v3171 = vcvt.f32.s32 %v3165
        %v3172 = vshll.u32 %v3171, 16
        %v3173 = vadd.s32 %v3172, %v3170
        %v3174 = vand.u32 %v3015, 65535
        %v3175 = vshra.s32 %v3015, 16
        %v3176 = vcvt.s32.f32 %v3174
        %v3177 = vcvt.s32.f32 %v3175
        %3178 = vmin.xlane.f32.xlu0 %v3177
        %v3179 = vpop.xlane.xlu0 %3178
        %vm3180 = vcmp.eq.f32.partialorder %v3177, %v3179
        %v3181 = vsel %vm3180, %v3176, inf
        %3182 = vmin.xlane.f32.xlu0 %v3181
        %v3183 = vpop.xlane.xlu0 %3182
        %v3184 = vcvt.f32.s32 %v3183
        %v3185 = vcvt.f32.s32 %v3179
        %v3186 = vshll.u32 %v3185, 16
        %v3187 = vadd.s32 %v3186, %v3184
        %v3188 = vand.u32 %v3016, 65535
        %v3189 = vshra.s32 %v3016, 16
        %v3190 = vcvt.s32.f32 %v3188
        %v3191 = vcvt.s32.f32 %v3189
        %3192 = vmin.xlane.f32.xlu0 %v3191
        %v3193 = vpop.xlane.xlu0 %3192
        %vm3194 = vcmp.eq.f32.partialorder %v3191, %v3193
        %v3195 = vsel %vm3194, %v3190, inf
        %3196 = vmin.xlane.f32.xlu0 %v3195
        %v3197 = vpop.xlane.xlu0 %3196
        %v3198 = vcvt.f32.s32 %v3197
        %v3199 = vcvt.f32.s32 %v3193
        %v3200 = vshll.u32 %v3199, 16
        %v3201 = vadd.s32 %v3200, %v3198
        %v3202 = vand.u32 %v3017, 65535
        %v3203 = vshra.s32 %v3017, 16
        %v3204 = vcvt.s32.f32 %v3202
        %v3205 = vcvt.s32.f32 %v3203
        %3206 = vmin.xlane.f32.xlu0 %v3205
        %v3207 = vpop.xlane.xlu0 %3206
        %vm3208 = vcmp.eq.f32.partialorder %v3205, %v3207
        %v3209 = vsel %vm3208, %v3204, inf
        %3210 = vmin.xlane.f32.xlu0 %v3209
        %v3211 = vpop.xlane.xlu0 %3210
        %v3212 = vcvt.f32.s32 %v3211
        %v3213 = vcvt.f32.s32 %v3207
        %v3214 = vshll.u32 %v3213, 16
        %v3215 = vadd.s32 %v3214, %v3212
        %v3216 = vand.u32 %v3018, 65535
        %v3217 = vshra.s32 %v3018, 16
        %v3218 = vcvt.s32.f32 %v3216
        %v3219 = vcvt.s32.f32 %v3217
        %3220 = vmin.xlane.f32.xlu0 %v3219
        %v3221 = vpop.xlane.xlu0 %3220
        %vm3222 = vcmp.eq.f32.partialorder %v3219, %v3221
        %v3223 = vsel %vm3222, %v3218, inf
        %3224 = vmin.xlane.f32.xlu0 %v3223
        %v3225 = vpop.xlane.xlu0 %3224
        %v3226 = vcvt.f32.s32 %v3225
        %v3227 = vcvt.f32.s32 %v3221
        %v3228 = vshll.u32 %v3227, 16
        %v3229 = vadd.s32 %v3228, %v3226
        %v3230 = vand.u32 %v3019, 65535
        %v3231 = vshra.s32 %v3019, 16
        %v3232 = vcvt.s32.f32 %v3230
        %v3233 = vcvt.s32.f32 %v3231
        %3234 = vmin.xlane.f32.xlu0 %v3233
        %v3235 = vpop.xlane.xlu0 %3234
        %vm3236 = vcmp.eq.f32.partialorder %v3233, %v3235
        %v3237 = vsel %vm3236, %v3232, inf
        %3238 = vmin.xlane.f32.xlu0 %v3237
        %v3239 = vpop.xlane.xlu0 %3238
        %v3240 = vcvt.f32.s32 %v3239
        %v3241 = vcvt.f32.s32 %v3235
        %v3242 = vshll.u32 %v3241, 16
        %v3243 = vadd.s32 %v3242, %v3240
        %vm3244 = vcmp.eq.s32.totalorder %v1513, %v3033
        %vm3245 = vcmp.eq.s32.totalorder %v1513, %v3047
        %vm3246 = vcmp.eq.s32.totalorder %v1513, %v3061
        %vm3247 = vcmp.eq.s32.totalorder %v1513, %v3075
        %vm3248 = vcmp.eq.s32.totalorder %v1513, %v3089
        %vm3249 = vcmp.eq.s32.totalorder %v1513, %v3103
        %vm3250 = vcmp.eq.s32.totalorder %v1513, %v3117
        %vm3251 = vcmp.eq.s32.totalorder %v1513, %v3131
        %vm3252 = vcmp.eq.s32.totalorder %v1513, %v3145
        %vm3253 = vcmp.eq.s32.totalorder %v1513, %v3159
        %vm3254 = vcmp.eq.s32.totalorder %v1513, %v3173
        %vm3255 = vcmp.eq.s32.totalorder %v1513, %v3187
        %vm3256 = vcmp.eq.s32.totalorder %v1513, %v3201
        %vm3257 = vcmp.eq.s32.totalorder %v1513, %v3215
        %vm3258 = vcmp.eq.s32.totalorder %v1513, %v3229
        %vm3259 = vcmp.eq.s32.totalorder %v1513, %v3243
        %v3260 = vsel %vm3244, 1, 0
        %v3261 = vsel %vm3245, 1, 0
        %v3262 = vsel %vm3246, 1, 0
        %v3263 = vsel %vm3247, 1, 0
        %v3264 = vsel %vm3248, 1, 0
        %v3265 = vsel %vm3249, 1, 0
        %v3266 = vsel %vm3250, 1, 0
        %v3267 = vsel %vm3251, 1, 0
        %v3268 = vsel %vm3252, 1, 0
        %v3269 = vsel %vm3253, 1, 0
        %v3270 = vsel %vm3254, 1, 0
        %v3271 = vsel %vm3255, 1, 0
        %v3272 = vsel %vm3256, 1, 0
        %v3273 = vsel %vm3257, 1, 0
        %v3274 = vsel %vm3258, 1, 0
        %v3275 = vsel %vm3259, 1, 0
        %v3276 = vcvt.s32.f32 %v3260
        %v3277 = vcvt.s32.f32 %v3261
        %v3278 = vcvt.s32.f32 %v3262
        %v3279 = vcvt.s32.f32 %v3263
        %v3280 = vcvt.s32.f32 %v3264
        %v3281 = vcvt.s32.f32 %v3265
        %v3282 = vcvt.s32.f32 %v3266
        %v3283 = vcvt.s32.f32 %v3267
        %v3284 = vcvt.s32.f32 %v3268
        %v3285 = vcvt.s32.f32 %v3269
        %v3286 = vcvt.s32.f32 %v3270
        %v3287 = vcvt.s32.f32 %v3271
        %v3288 = vcvt.s32.f32 %v3272
        %v3289 = vcvt.s32.f32 %v3273
        %v3290 = vcvt.s32.f32 %v3274
        %v3291 = vcvt.s32.f32 %v3275
        %3292 = vst [vmem:[%s397 + $0x10] sm:$0xff] %v3276
        %3293 = vst [vmem:[%s397 + $0x30] sm:$0xff] %v3277
        %3294 = vst [vmem:[%s397 + $0x50] sm:$0xff] %v3278
        %3295 = vst [vmem:[%s397 + $0x70] sm:$0xff] %v3279
        %3296 = vst [vmem:[%s397 + $0x90] sm:$0xff] %v3280
        %3297 = vst [vmem:[%s397 + $0xb0] sm:$0xff] %v3281
        %3298 = vst [vmem:[%s397 + $0xd0] sm:$0xff] %v3282
        %3299 = vst [vmem:[%s397 + $0xf0] sm:$0xff] %v3283
        %3300 = vst [vmem:[%s397 + $0x110] sm:$0xff] %v3284
        %3301 = vst [vmem:[%s397 + $0x130] sm:$0xff] %v3285
        %3302 = vst [vmem:[%s397 + $0x150] sm:$0xff] %v3286
        %3303 = vst [vmem:[%s397 + $0x170] sm:$0xff] %v3287
        %3304 = vst [vmem:[%s397 + $0x190] sm:$0xff] %v3288
        %3305 = vst [vmem:[%s397 + $0x1b0] sm:$0xff] %v3289
        %3306 = vst [vmem:[%s397 + $0x1d0] sm:$0xff] %v3290
        %3307 = vst [vmem:[%s397 + $0x1f0] sm:$0xff] %v3291
        %3308 = vmax.xlane.f32.xlu0 %v1258
        %v3309 = vpop.xlane.xlu0 %3308
        %3310 = vmax.xlane.f32.xlu0 %v1262
        %v3311 = vpop.xlane.xlu0 %3310
        %3312 = vmax.xlane.f32.xlu0 %v1266
        %v3313 = vpop.xlane.xlu0 %3312
        %3314 = vmax.xlane.f32.xlu0 %v1270
        %v3315 = vpop.xlane.xlu0 %3314
        %3316 = vmax.xlane.f32.xlu0 %v1274
        %v3317 = vpop.xlane.xlu0 %3316
        %3318 = vmax.xlane.f32.xlu0 %v1278
        %v3319 = vpop.xlane.xlu0 %3318
        %3320 = vmax.xlane.f32.xlu0 %v1282
        %v3321 = vpop.xlane.xlu0 %3320
        %3322 = vmax.xlane.f32.xlu0 %v1286
        %v3323 = vpop.xlane.xlu0 %3322
        %3324 = vmax.xlane.f32.xlu0 %v1290
        %v3325 = vpop.xlane.xlu0 %3324
        %3326 = vmax.xlane.f32.xlu0 %v1294
        %v3327 = vpop.xlane.xlu0 %3326
        %3328 = vmax.xlane.f32.xlu0 %v1298
        %v3329 = vpop.xlane.xlu0 %3328
        %3330 = vmax.xlane.f32.xlu0 %v1302
        %v3331 = vpop.xlane.xlu0 %3330
        %3332 = vmax.xlane.f32.xlu0 %v1306
        %v3333 = vpop.xlane.xlu0 %3332
        %3334 = vmax.xlane.f32.xlu0 %v1310
        %v3335 = vpop.xlane.xlu0 %3334
        %3336 = vmax.xlane.f32.xlu0 %v1314
        %v3337 = vpop.xlane.xlu0 %3336
        %3338 = vmax.xlane.f32.xlu0 %v1318
        %v3339 = vpop.xlane.xlu0 %3338
        %vm3340 = vcmp.ge.f32.partialorder %v1258, %v3309
        %vm3341 = vcmp.ge.f32.partialorder %v1262, %v3311
        %vm3342 = vcmp.ge.f32.partialorder %v1266, %v3313
        %vm3343 = vcmp.ge.f32.partialorder %v1270, %v3315
        %vm3344 = vcmp.ge.f32.partialorder %v1274, %v3317
        %vm3345 = vcmp.ge.f32.partialorder %v1278, %v3319
        %vm3346 = vcmp.ge.f32.partialorder %v1282, %v3321
        %vm3347 = vcmp.ge.f32.partialorder %v1286, %v3323
        %vm3348 = vcmp.ge.f32.partialorder %v1290, %v3325
        %vm3349 = vcmp.ge.f32.partialorder %v1294, %v3327
        %vm3350 = vcmp.ge.f32.partialorder %v1298, %v3329
        %vm3351 = vcmp.ge.f32.partialorder %v1302, %v3331
        %vm3352 = vcmp.ge.f32.partialorder %v1306, %v3333
        %vm3353 = vcmp.ge.f32.partialorder %v1310, %v3335
        %vm3354 = vcmp.ge.f32.partialorder %v1314, %v3337
        %vm3355 = vcmp.ge.f32.partialorder %v1318, %v3339
        %v3356 = vsel %vm3340, %v1513, 128
        %v3357 = vsel %vm3341, %v1513, 128
        %v3358 = vsel %vm3342, %v1513, 128
        %v3359 = vsel %vm3343, %v1513, 128
        %v3360 = vsel %vm3344, %v1513, 128
        %v3361 = vsel %vm3345, %v1513, 128
        %v3362 = vsel %vm3346, %v1513, 128
        %v3363 = vsel %vm3347, %v1513, 128
        %v3364 = vsel %vm3348, %v1513, 128
        %v3365 = vsel %vm3349, %v1513, 128
        %v3366 = vsel %vm3350, %v1513, 128
        %v3367 = vsel %vm3351, %v1513, 128
        %v3368 = vsel %vm3352, %v1513, 128
        %v3369 = vsel %vm3353, %v1513, 128
        %v3370 = vsel %vm3354, %v1513, 128
        %v3371 = vsel %vm3355, %v1513, 128
        %v3372 = vand.u32 %v3356, 65535
        %v3373 = vshra.s32 %v3356, 16
        %v3374 = vcvt.s32.f32 %v3372
        %v3375 = vcvt.s32.f32 %v3373
        %3376 = vmin.xlane.f32.xlu0 %v3375
        %v3377 = vpop.xlane.xlu0 %3376
        %vm3378 = vcmp.eq.f32.partialorder %v3375, %v3377
        %v3379 = vsel %vm3378, %v3374, inf
        %3380 = vmin.xlane.f32.xlu0 %v3379
        %v3381 = vpop.xlane.xlu0 %3380
        %v3382 = vcvt.f32.s32 %v3381
        %v3383 = vcvt.f32.s32 %v3377
        %v3384 = vshll.u32 %v3383, 16
        %v3385 = vadd.s32 %v3384, %v3382
        %v3386 = vand.u32 %v3357, 65535
        %v3387 = vshra.s32 %v3357, 16
        %v3388 = vcvt.s32.f32 %v3386
        %v3389 = vcvt.s32.f32 %v3387
        %3390 = vmin.xlane.f32.xlu0 %v3389
        %v3391 = vpop.xlane.xlu0 %3390
        %vm3392 = vcmp.eq.f32.partialorder %v3389, %v3391
        %v3393 = vsel %vm3392, %v3388, inf
        %3394 = vmin.xlane.f32.xlu0 %v3393
        %v3395 = vpop.xlane.xlu0 %3394
        %v3396 = vcvt.f32.s32 %v3395
        %v3397 = vcvt.f32.s32 %v3391
        %v3398 = vshll.u32 %v3397, 16
        %v3399 = vadd.s32 %v3398, %v3396
        %v3400 = vand.u32 %v3358, 65535
        %v3401 = vshra.s32 %v3358, 16
        %v3402 = vcvt.s32.f32 %v3400
        %v3403 = vcvt.s32.f32 %v3401
        %3404 = vmin.xlane.f32.xlu0 %v3403
        %v3405 = vpop.xlane.xlu0 %3404
        %vm3406 = vcmp.eq.f32.partialorder %v3403, %v3405
        %v3407 = vsel %vm3406, %v3402, inf
        %3408 = vmin.xlane.f32.xlu0 %v3407
        %v3409 = vpop.xlane.xlu0 %3408
        %v3410 = vcvt.f32.s32 %v3409
        %v3411 = vcvt.f32.s32 %v3405
        %v3412 = vshll.u32 %v3411, 16
        %v3413 = vadd.s32 %v3412, %v3410
        %v3414 = vand.u32 %v3359, 65535
        %v3415 = vshra.s32 %v3359, 16
        %v3416 = vcvt.s32.f32 %v3414
        %v3417 = vcvt.s32.f32 %v3415
        %3418 = vmin.xlane.f32.xlu0 %v3417
        %v3419 = vpop.xlane.xlu0 %3418
        %vm3420 = vcmp.eq.f32.partialorder %v3417, %v3419
        %v3421 = vsel %vm3420, %v3416, inf
        %3422 = vmin.xlane.f32.xlu0 %v3421
        %v3423 = vpop.xlane.xlu0 %3422
        %v3424 = vcvt.f32.s32 %v3423
        %v3425 = vcvt.f32.s32 %v3419
        %v3426 = vshll.u32 %v3425, 16
        %v3427 = vadd.s32 %v3426, %v3424
        %v3428 = vand.u32 %v3360, 65535
        %v3429 = vshra.s32 %v3360, 16
        %v3430 = vcvt.s32.f32 %v3428
        %v3431 = vcvt.s32.f32 %v3429
        %3432 = vmin.xlane.f32.xlu0 %v3431
        %v3433 = vpop.xlane.xlu0 %3432
        %vm3434 = vcmp.eq.f32.partialorder %v3431, %v3433
        %v3435 = vsel %vm3434, %v3430, inf
        %3436 = vmin.xlane.f32.xlu0 %v3435
        %v3437 = vpop.xlane.xlu0 %3436
        %v3438 = vcvt.f32.s32 %v3437
        %v3439 = vcvt.f32.s32 %v3433
        %v3440 = vshll.u32 %v3439, 16
        %v3441 = vadd.s32 %v3440, %v3438
        %v3442 = vand.u32 %v3361, 65535
        %v3443 = vshra.s32 %v3361, 16
        %v3444 = vcvt.s32.f32 %v3442
        %v3445 = vcvt.s32.f32 %v3443
        %3446 = vmin.xlane.f32.xlu0 %v3445
        %v3447 = vpop.xlane.xlu0 %3446
        %vm3448 = vcmp.eq.f32.partialorder %v3445, %v3447
        %v3449 = vsel %vm3448, %v3444, inf
        %3450 = vmin.xlane.f32.xlu0 %v3449
        %v3451 = vpop.xlane.xlu0 %3450
        %v3452 = vcvt.f32.s32 %v3451
        %v3453 = vcvt.f32.s32 %v3447
        %v3454 = vshll.u32 %v3453, 16
        %v3455 = vadd.s32 %v3454, %v3452
        %v3456 = vand.u32 %v3362, 65535
        %v3457 = vshra.s32 %v3362, 16
        %v3458 = vcvt.s32.f32 %v3456
        %v3459 = vcvt.s32.f32 %v3457
        %3460 = vmin.xlane.f32.xlu0 %v3459
        %v3461 = vpop.xlane.xlu0 %3460
        %vm3462 = vcmp.eq.f32.partialorder %v3459, %v3461
        %v3463 = vsel %vm3462, %v3458, inf
        %3464 = vmin.xlane.f32.xlu0 %v3463
        %v3465 = vpop.xlane.xlu0 %3464
        %v3466 = vcvt.f32.s32 %v3465
        %v3467 = vcvt.f32.s32 %v3461
        %v3468 = vshll.u32 %v3467, 16
        %v3469 = vadd.s32 %v3468, %v3466
        %v3470 = vand.u32 %v3363, 65535
        %v3471 = vshra.s32 %v3363, 16
        %v3472 = vcvt.s32.f32 %v3470
        %v3473 = vcvt.s32.f32 %v3471
        %3474 = vmin.xlane.f32.xlu0 %v3473
        %v3475 = vpop.xlane.xlu0 %3474
        %vm3476 = vcmp.eq.f32.partialorder %v3473, %v3475
        %v3477 = vsel %vm3476, %v3472, inf
        %3478 = vmin.xlane.f32.xlu0 %v3477
        %v3479 = vpop.xlane.xlu0 %3478
        %v3480 = vcvt.f32.s32 %v3479
        %v3481 = vcvt.f32.s32 %v3475
        %v3482 = vshll.u32 %v3481, 16
        %v3483 = vadd.s32 %v3482, %v3480
        %v3484 = vand.u32 %v3364, 65535
        %v3485 = vshra.s32 %v3364, 16
        %v3486 = vcvt.s32.f32 %v3484
        %v3487 = vcvt.s32.f32 %v3485
        %3488 = vmin.xlane.f32.xlu0 %v3487
        %v3489 = vpop.xlane.xlu0 %3488
        %vm3490 = vcmp.eq.f32.partialorder %v3487, %v3489
        %v3491 = vsel %vm3490, %v3486, inf
        %3492 = vmin.xlane.f32.xlu0 %v3491
        %v3493 = vpop.xlane.xlu0 %3492
        %v3494 = vcvt.f32.s32 %v3493
        %v3495 = vcvt.f32.s32 %v3489
        %v3496 = vshll.u32 %v3495, 16
        %v3497 = vadd.s32 %v3496, %v3494
        %v3498 = vand.u32 %v3365, 65535
        %v3499 = vshra.s32 %v3365, 16
        %v3500 = vcvt.s32.f32 %v3498
        %v3501 = vcvt.s32.f32 %v3499
        %3502 = vmin.xlane.f32.xlu0 %v3501
        %v3503 = vpop.xlane.xlu0 %3502
        %vm3504 = vcmp.eq.f32.partialorder %v3501, %v3503
        %v3505 = vsel %vm3504, %v3500, inf
        %3506 = vmin.xlane.f32.xlu0 %v3505
        %v3507 = vpop.xlane.xlu0 %3506
        %v3508 = vcvt.f32.s32 %v3507
        %v3509 = vcvt.f32.s32 %v3503
        %v3510 = vshll.u32 %v3509, 16
        %v3511 = vadd.s32 %v3510, %v3508
        %v3512 = vand.u32 %v3366, 65535
        %v3513 = vshra.s32 %v3366, 16
        %v3514 = vcvt.s32.f32 %v3512
        %v3515 = vcvt.s32.f32 %v3513
        %3516 = vmin.xlane.f32.xlu0 %v3515
        %v3517 = vpop.xlane.xlu0 %3516
        %vm3518 = vcmp.eq.f32.partialorder %v3515, %v3517
        %v3519 = vsel %vm3518, %v3514, inf
        %3520 = vmin.xlane.f32.xlu0 %v3519
        %v3521 = vpop.xlane.xlu0 %3520
        %v3522 = vcvt.f32.s32 %v3521
        %v3523 = vcvt.f32.s32 %v3517
        %v3524 = vshll.u32 %v3523, 16
        %v3525 = vadd.s32 %v3524, %v3522
        %v3526 = vand.u32 %v3367, 65535
        %v3527 = vshra.s32 %v3367, 16
        %v3528 = vcvt.s32.f32 %v3526
        %v3529 = vcvt.s32.f32 %v3527
        %3530 = vmin.xlane.f32.xlu0 %v3529
        %v3531 = vpop.xlane.xlu0 %3530
        %vm3532 = vcmp.eq.f32.partialorder %v3529, %v3531
        %v3533 = vsel %vm3532, %v3528, inf
        %3534 = vmin.xlane.f32.xlu0 %v3533
        %v3535 = vpop.xlane.xlu0 %3534
        %v3536 = vcvt.f32.s32 %v3535
        %v3537 = vcvt.f32.s32 %v3531
        %v3538 = vshll.u32 %v3537, 16
        %v3539 = vadd.s32 %v3538, %v3536
        %v3540 = vand.u32 %v3368, 65535
        %v3541 = vshra.s32 %v3368, 16
        %v3542 = vcvt.s32.f32 %v3540
        %v3543 = vcvt.s32.f32 %v3541
        %3544 = vmin.xlane.f32.xlu0 %v3543
        %v3545 = vpop.xlane.xlu0 %3544
        %vm3546 = vcmp.eq.f32.partialorder %v3543, %v3545
        %v3547 = vsel %vm3546, %v3542, inf
        %3548 = vmin.xlane.f32.xlu0 %v3547
        %v3549 = vpop.xlane.xlu0 %3548
        %v3550 = vcvt.f32.s32 %v3549
        %v3551 = vcvt.f32.s32 %v3545
        %v3552 = vshll.u32 %v3551, 16
        %v3553 = vadd.s32 %v3552, %v3550
        %v3554 = vand.u32 %v3369, 65535
        %v3555 = vshra.s32 %v3369, 16
        %v3556 = vcvt.s32.f32 %v3554
        %v3557 = vcvt.s32.f32 %v3555
        %3558 = vmin.xlane.f32.xlu0 %v3557
        %v3559 = vpop.xlane.xlu0 %3558
        %vm3560 = vcmp.eq.f32.partialorder %v3557, %v3559
        %v3561 = vsel %vm3560, %v3556, inf
        %3562 = vmin.xlane.f32.xlu0 %v3561
        %v3563 = vpop.xlane.xlu0 %3562
        %v3564 = vcvt.f32.s32 %v3563
        %v3565 = vcvt.f32.s32 %v3559
        %v3566 = vshll.u32 %v3565, 16
        %v3567 = vadd.s32 %v3566, %v3564
        %v3568 = vand.u32 %v3370, 65535
        %v3569 = vshra.s32 %v3370, 16
        %v3570 = vcvt.s32.f32 %v3568
        %v3571 = vcvt.s32.f32 %v3569
        %3572 = vmin.xlane.f32.xlu0 %v3571
        %v3573 = vpop.xlane.xlu0 %3572
        %vm3574 = vcmp.eq.f32.partialorder %v3571, %v3573
        %v3575 = vsel %vm3574, %v3570, inf
        %3576 = vmin.xlane.f32.xlu0 %v3575
        %v3577 = vpop.xlane.xlu0 %3576
        %v3578 = vcvt.f32.s32 %v3577
        %v3579 = vcvt.f32.s32 %v3573
        %v3580 = vshll.u32 %v3579, 16
        %v3581 = vadd.s32 %v3580, %v3578
        %v3582 = vand.u32 %v3371, 65535
        %v3583 = vshra.s32 %v3371, 16
        %v3584 = vcvt.s32.f32 %v3582
        %v3585 = vcvt.s32.f32 %v3583
        %3586 = vmin.xlane.f32.xlu0 %v3585
        %v3587 = vpop.xlane.xlu0 %3586
        %vm3588 = vcmp.eq.f32.partialorder %v3585, %v3587
        %v3589 = vsel %vm3588, %v3584, inf
        %3590 = vmin.xlane.f32.xlu0 %v3589
        %v3591 = vpop.xlane.xlu0 %3590
        %v3592 = vcvt.f32.s32 %v3591
        %v3593 = vcvt.f32.s32 %v3587
        %v3594 = vshll.u32 %v3593, 16
        %v3595 = vadd.s32 %v3594, %v3592
        %vm3596 = vcmp.eq.s32.totalorder %v1513, %v3385
        %vm3597 = vcmp.eq.s32.totalorder %v1513, %v3399
        %vm3598 = vcmp.eq.s32.totalorder %v1513, %v3413
        %vm3599 = vcmp.eq.s32.totalorder %v1513, %v3427
        %vm3600 = vcmp.eq.s32.totalorder %v1513, %v3441
        %vm3601 = vcmp.eq.s32.totalorder %v1513, %v3455
        %vm3602 = vcmp.eq.s32.totalorder %v1513, %v3469
        %vm3603 = vcmp.eq.s32.totalorder %v1513, %v3483
        %vm3604 = vcmp.eq.s32.totalorder %v1513, %v3497
        %vm3605 = vcmp.eq.s32.totalorder %v1513, %v3511
        %vm3606 = vcmp.eq.s32.totalorder %v1513, %v3525
        %vm3607 = vcmp.eq.s32.totalorder %v1513, %v3539
        %vm3608 = vcmp.eq.s32.totalorder %v1513, %v3553
        %vm3609 = vcmp.eq.s32.totalorder %v1513, %v3567
        %vm3610 = vcmp.eq.s32.totalorder %v1513, %v3581
        %vm3611 = vcmp.eq.s32.totalorder %v1513, %v3595
        %v3612 = vsel %vm3596, 1, 0
        %v3613 = vsel %vm3597, 1, 0
        %v3614 = vsel %vm3598, 1, 0
        %v3615 = vsel %vm3599, 1, 0
        %v3616 = vsel %vm3600, 1, 0
        %v3617 = vsel %vm3601, 1, 0
        %v3618 = vsel %vm3602, 1, 0
        %v3619 = vsel %vm3603, 1, 0
        %v3620 = vsel %vm3604, 1, 0
        %v3621 = vsel %vm3605, 1, 0
        %v3622 = vsel %vm3606, 1, 0
        %v3623 = vsel %vm3607, 1, 0
        %v3624 = vsel %vm3608, 1, 0
        %v3625 = vsel %vm3609, 1, 0
        %v3626 = vsel %vm3610, 1, 0
        %v3627 = vsel %vm3611, 1, 0
        %v3628 = vcvt.s32.f32 %v3612
        %v3629 = vcvt.s32.f32 %v3613
        %v3630 = vcvt.s32.f32 %v3614
        %v3631 = vcvt.s32.f32 %v3615
        %v3632 = vcvt.s32.f32 %v3616
        %v3633 = vcvt.s32.f32 %v3617
        %v3634 = vcvt.s32.f32 %v3618
        %v3635 = vcvt.s32.f32 %v3619
        %v3636 = vcvt.s32.f32 %v3620
        %v3637 = vcvt.s32.f32 %v3621
        %v3638 = vcvt.s32.f32 %v3622
        %v3639 = vcvt.s32.f32 %v3623
        %v3640 = vcvt.s32.f32 %v3624
        %v3641 = vcvt.s32.f32 %v3625
        %v3642 = vcvt.s32.f32 %v3626
        %v3643 = vcvt.s32.f32 %v3627
        %3644 = vst [vmem:[%s411 + $0x10] sm:$0xff] %v3628
        %3645 = vst [vmem:[%s411 + $0x30] sm:$0xff] %v3629
        %3646 = vst [vmem:[%s411 + $0x50] sm:$0xff] %v3630
        %3647 = vst [vmem:[%s411 + $0x70] sm:$0xff] %v3631
        %3648 = vst [vmem:[%s411 + $0x90] sm:$0xff] %v3632
        %3649 = vst [vmem:[%s411 + $0xb0] sm:$0xff] %v3633
        %3650 = vst [vmem:[%s411 + $0xd0] sm:$0xff] %v3634
        %3651 = vst [vmem:[%s411 + $0xf0] sm:$0xff] %v3635
        %3652 = vst [vmem:[%s411 + $0x110] sm:$0xff] %v3636
        %3653 = vst [vmem:[%s411 + $0x130] sm:$0xff] %v3637
        %3654 = vst [vmem:[%s411 + $0x150] sm:$0xff] %v3638
        %3655 = vst [vmem:[%s411 + $0x170] sm:$0xff] %v3639
        %3656 = vst [vmem:[%s411 + $0x190] sm:$0xff] %v3640
        %3657 = vst [vmem:[%s411 + $0x1b0] sm:$0xff] %v3641
        %3658 = vst [vmem:[%s411 + $0x1d0] sm:$0xff] %v3642
        %3659 = vst [vmem:[%s411 + $0x1f0] sm:$0xff] %v3643
        %vm3660 = vcmask 23568
        %3661 = vst.msk [vmem:[%s426] sm:$0xff] %vm3660, %v3385
        %3662 = vst.msk [vmem:[%s426 + $0x8] sm:$0xff] %vm3660, %v3399
        %3663 = vst.msk [vmem:[%s426 + $0x10] sm:$0xff] %vm3660, %v3413
        %3664 = vst.msk [vmem:[%s426 + $0x18] sm:$0xff] %vm3660, %v3427
        %3665 = vst.msk [vmem:[%s426 + $0x20] sm:$0xff] %vm3660, %v3441
        %3666 = vst.msk [vmem:[%s426 + $0x28] sm:$0xff] %vm3660, %v3455
        %3667 = vst.msk [vmem:[%s426 + $0x30] sm:$0xff] %vm3660, %v3469
        %3668 = vst.msk [vmem:[%s426 + $0x38] sm:$0xff] %vm3660, %v3483
        %3669 = vst.msk [vmem:[%s426 + $0x40] sm:$0xff] %vm3660, %v3497
        %3670 = vst.msk [vmem:[%s426 + $0x48] sm:$0xff] %vm3660, %v3511
        %3671 = vst.msk [vmem:[%s426 + $0x50] sm:$0xff] %vm3660, %v3525
        %3672 = vst.msk [vmem:[%s426 + $0x58] sm:$0xff] %vm3660, %v3539
        %3673 = vst.msk [vmem:[%s426 + $0x60] sm:$0xff] %vm3660, %v3553
        %3674 = vst.msk [vmem:[%s426 + $0x68] sm:$0xff] %vm3660, %v3567
        %3675 = vst.msk [vmem:[%s426 + $0x70] sm:$0xff] %vm3660, %v3581
        %3676 = vst.msk [vmem:[%s426 + $0x78] sm:$0xff] %vm3660, %v3595
        %3677 = vmax.xlane.f32.xlu0 %v1451
        %v3678 = vpop.xlane.xlu0 %3677
        %3679 = vmax.xlane.f32.xlu0 %v1455
        %v3680 = vpop.xlane.xlu0 %3679
        %3681 = vmax.xlane.f32.xlu0 %v1459
        %v3682 = vpop.xlane.xlu0 %3681
        %3683 = vmax.xlane.f32.xlu0 %v1463
        %v3684 = vpop.xlane.xlu0 %3683
        %3685 = vmax.xlane.f32.xlu0 %v1467
        %v3686 = vpop.xlane.xlu0 %3685
        %3687 = vmax.xlane.f32.xlu0 %v1471
        %v3688 = vpop.xlane.xlu0 %3687
        %3689 = vmax.xlane.f32.xlu0 %v1475
        %v3690 = vpop.xlane.xlu0 %3689
        %3691 = vmax.xlane.f32.xlu0 %v1479
        %v3692 = vpop.xlane.xlu0 %3691
        %3693 = vmax.xlane.f32.xlu0 %v1483
        %v3694 = vpop.xlane.xlu0 %3693
        %3695 = vmax.xlane.f32.xlu0 %v1487
        %v3696 = vpop.xlane.xlu0 %3695
        %3697 = vmax.xlane.f32.xlu0 %v1491
        %v3698 = vpop.xlane.xlu0 %3697
        %3699 = vmax.xlane.f32.xlu0 %v1495
        %v3700 = vpop.xlane.xlu0 %3699
        %3701 = vmax.xlane.f32.xlu0 %v1499
        %v3702 = vpop.xlane.xlu0 %3701
        %3703 = vmax.xlane.f32.xlu0 %v1503
        %v3704 = vpop.xlane.xlu0 %3703
        %3705 = vmax.xlane.f32.xlu0 %v1507
        %v3706 = vpop.xlane.xlu0 %3705
        %3707 = vmax.xlane.f32.xlu0 %v1511
        %v3708 = vpop.xlane.xlu0 %3707
        %vm3709 = vcmp.ge.f32.partialorder %v1451, %v3678
        %vm3710 = vcmp.ge.f32.partialorder %v1455, %v3680
        %vm3711 = vcmp.ge.f32.partialorder %v1459, %v3682
        %vm3712 = vcmp.ge.f32.partialorder %v1463, %v3684
        %vm3713 = vcmp.ge.f32.partialorder %v1467, %v3686
        %vm3714 = vcmp.ge.f32.partialorder %v1471, %v3688
        %vm3715 = vcmp.ge.f32.partialorder %v1475, %v3690
        %vm3716 = vcmp.ge.f32.partialorder %v1479, %v3692
        %vm3717 = vcmp.ge.f32.partialorder %v1483, %v3694
        %vm3718 = vcmp.ge.f32.partialorder %v1487, %v3696
        %vm3719 = vcmp.ge.f32.partialorder %v1491, %v3698
        %vm3720 = vcmp.ge.f32.partialorder %v1495, %v3700
        %vm3721 = vcmp.ge.f32.partialorder %v1499, %v3702
        %vm3722 = vcmp.ge.f32.partialorder %v1503, %v3704
        %vm3723 = vcmp.ge.f32.partialorder %v1507, %v3706
        %vm3724 = vcmp.ge.f32.partialorder %v1511, %v3708
        %v3725 = vsel %vm3709, %v1513, 128
        %v3726 = vsel %vm3710, %v1513, 128
        %v3727 = vsel %vm3711, %v1513, 128
        %v3728 = vsel %vm3712, %v1513, 128
        %v3729 = vsel %vm3713, %v1513, 128
        %v3730 = vsel %vm3714, %v1513, 128
        %v3731 = vsel %vm3715, %v1513, 128
        %v3732 = vsel %vm3716, %v1513, 128
        %v3733 = vsel %vm3717, %v1513, 128
        %v3734 = vsel %vm3718, %v1513, 128
        %v3735 = vsel %vm3719, %v1513, 128
        %v3736 = vsel %vm3720, %v1513, 128
        %v3737 = vsel %vm3721, %v1513, 128
        %v3738 = vsel %vm3722, %v1513, 128
        %v3739 = vsel %vm3723, %v1513, 128
        %v3740 = vsel %vm3724, %v1513, 128
        %v3741 = vand.u32 %v3725, 65535
        %v3742 = vshra.s32 %v3725, 16
        %v3743 = vcvt.s32.f32 %v3741
        %v3744 = vcvt.s32.f32 %v3742
        %3745 = vmin.xlane.f32.xlu0 %v3744
        %v3746 = vpop.xlane.xlu0 %3745
        %vm3747 = vcmp.eq.f32.partialorder %v3744, %v3746
        %v3748 = vsel %vm3747, %v3743, inf
        %3749 = vmin.xlane.f32.xlu0 %v3748
        %v3750 = vpop.xlane.xlu0 %3749
        %v3751 = vcvt.f32.s32 %v3750
        %v3752 = vcvt.f32.s32 %v3746
        %v3753 = vshll.u32 %v3752, 16
        %v3754 = vadd.s32 %v3753, %v3751
        %v3755 = vand.u32 %v3726, 65535
        %v3756 = vshra.s32 %v3726, 16
        %v3757 = vcvt.s32.f32 %v3755
        %v3758 = vcvt.s32.f32 %v3756
        %3759 = vmin.xlane.f32.xlu0 %v3758
        %v3760 = vpop.xlane.xlu0 %3759
        %vm3761 = vcmp.eq.f32.partialorder %v3758, %v3760
        %v3762 = vsel %vm3761, %v3757, inf
        %3763 = vmin.xlane.f32.xlu0 %v3762
        %v3764 = vpop.xlane.xlu0 %3763
        %v3765 = vcvt.f32.s32 %v3764
        %v3766 = vcvt.f32.s32 %v3760
        %v3767 = vshll.u32 %v3766, 16
        %v3768 = vadd.s32 %v3767, %v3765
        %v3769 = vand.u32 %v3727, 65535
        %v3770 = vshra.s32 %v3727, 16
        %v3771 = vcvt.s32.f32 %v3769
        %v3772 = vcvt.s32.f32 %v3770
        %3773 = vmin.xlane.f32.xlu0 %v3772
        %v3774 = vpop.xlane.xlu0 %3773
        %vm3775 = vcmp.eq.f32.partialorder %v3772, %v3774
        %v3776 = vsel %vm3775, %v3771, inf
        %3777 = vmin.xlane.f32.xlu0 %v3776
        %v3778 = vpop.xlane.xlu0 %3777
        %v3779 = vcvt.f32.s32 %v3778
        %v3780 = vcvt.f32.s32 %v3774
        %v3781 = vshll.u32 %v3780, 16
        %v3782 = vadd.s32 %v3781, %v3779
        %v3783 = vand.u32 %v3728, 65535
        %v3784 = vshra.s32 %v3728, 16
        %v3785 = vcvt.s32.f32 %v3783
        %v3786 = vcvt.s32.f32 %v3784
        %3787 = vmin.xlane.f32.xlu0 %v3786
        %v3788 = vpop.xlane.xlu0 %3787
        %vm3789 = vcmp.eq.f32.partialorder %v3786, %v3788
        %v3790 = vsel %vm3789, %v3785, inf
        %3791 = vmin.xlane.f32.xlu0 %v3790
        %v3792 = vpop.xlane.xlu0 %3791
        %v3793 = vcvt.f32.s32 %v3792
        %v3794 = vcvt.f32.s32 %v3788
        %v3795 = vshll.u32 %v3794, 16
        %v3796 = vadd.s32 %v3795, %v3793
        %v3797 = vand.u32 %v3729, 65535
        %v3798 = vshra.s32 %v3729, 16
        %v3799 = vcvt.s32.f32 %v3797
        %v3800 = vcvt.s32.f32 %v3798
        %3801 = vmin.xlane.f32.xlu0 %v3800
        %v3802 = vpop.xlane.xlu0 %3801
        %vm3803 = vcmp.eq.f32.partialorder %v3800, %v3802
        %v3804 = vsel %vm3803, %v3799, inf
        %3805 = vmin.xlane.f32.xlu0 %v3804
        %v3806 = vpop.xlane.xlu0 %3805
        %v3807 = vcvt.f32.s32 %v3806
        %v3808 = vcvt.f32.s32 %v3802
        %v3809 = vshll.u32 %v3808, 16
        %v3810 = vadd.s32 %v3809, %v3807
        %v3811 = vand.u32 %v3730, 65535
        %v3812 = vshra.s32 %v3730, 16
        %v3813 = vcvt.s32.f32 %v3811
        %v3814 = vcvt.s32.f32 %v3812
        %3815 = vmin.xlane.f32.xlu0 %v3814
        %v3816 = vpop.xlane.xlu0 %3815
        %vm3817 = vcmp.eq.f32.partialorder %v3814, %v3816
        %v3818 = vsel %vm3817, %v3813, inf
        %3819 = vmin.xlane.f32.xlu0 %v3818
        %v3820 = vpop.xlane.xlu0 %3819
        %v3821 = vcvt.f32.s32 %v3820
        %v3822 = vcvt.f32.s32 %v3816
        %v3823 = vshll.u32 %v3822, 16
        %v3824 = vadd.s32 %v3823, %v3821
        %v3825 = vand.u32 %v3731, 65535
        %v3826 = vshra.s32 %v3731, 16
        %v3827 = vcvt.s32.f32 %v3825
        %v3828 = vcvt.s32.f32 %v3826
        %3829 = vmin.xlane.f32.xlu0 %v3828
        %v3830 = vpop.xlane.xlu0 %3829
        %vm3831 = vcmp.eq.f32.partialorder %v3828, %v3830
        %v3832 = vsel %vm3831, %v3827, inf
        %3833 = vmin.xlane.f32.xlu0 %v3832
        %v3834 = vpop.xlane.xlu0 %3833
        %v3835 = vcvt.f32.s32 %v3834
        %v3836 = vcvt.f32.s32 %v3830
        %v3837 = vshll.u32 %v3836, 16
        %v3838 = vadd.s32 %v3837, %v3835
        %v3839 = vand.u32 %v3732, 65535
        %v3840 = vshra.s32 %v3732, 16
        %v3841 = vcvt.s32.f32 %v3839
        %v3842 = vcvt.s32.f32 %v3840
        %3843 = vmin.xlane.f32.xlu0 %v3842
        %v3844 = vpop.xlane.xlu0 %3843
        %vm3845 = vcmp.eq.f32.partialorder %v3842, %v3844
        %v3846 = vsel %vm3845, %v3841, inf
        %3847 = vmin.xlane.f32.xlu0 %v3846
        %v3848 = vpop.xlane.xlu0 %3847
        %v3849 = vcvt.f32.s32 %v3848
        %v3850 = vcvt.f32.s32 %v3844
        %v3851 = vshll.u32 %v3850, 16
        %v3852 = vadd.s32 %v3851, %v3849
        %v3853 = vand.u32 %v3733, 65535
        %v3854 = vshra.s32 %v3733, 16
        %v3855 = vcvt.s32.f32 %v3853
        %v3856 = vcvt.s32.f32 %v3854
        %3857 = vmin.xlane.f32.xlu0 %v3856
        %v3858 = vpop.xlane.xlu0 %3857
        %vm3859 = vcmp.eq.f32.partialorder %v3856, %v3858
        %v3860 = vsel %vm3859, %v3855, inf
        %3861 = vmin.xlane.f32.xlu0 %v3860
        %v3862 = vpop.xlane.xlu0 %3861
        %v3863 = vcvt.f32.s32 %v3862
        %v3864 = vcvt.f32.s32 %v3858
        %v3865 = vshll.u32 %v3864, 16
        %v3866 = vadd.s32 %v3865, %v3863
        %v3867 = vand.u32 %v3734, 65535
        %v3868 = vshra.s32 %v3734, 16
        %v3869 = vcvt.s32.f32 %v3867
        %v3870 = vcvt.s32.f32 %v3868
        %3871 = vmin.xlane.f32.xlu0 %v3870
        %v3872 = vpop.xlane.xlu0 %3871
        %vm3873 = vcmp.eq.f32.partialorder %v3870, %v3872
        %v3874 = vsel %vm3873, %v3869, inf
        %3875 = vmin.xlane.f32.xlu0 %v3874
        %v3876 = vpop.xlane.xlu0 %3875
        %v3877 = vcvt.f32.s32 %v3876
        %v3878 = vcvt.f32.s32 %v3872
        %v3879 = vshll.u32 %v3878, 16
        %v3880 = vadd.s32 %v3879, %v3877
        %v3881 = vand.u32 %v3735, 65535
        %v3882 = vshra.s32 %v3735, 16
        %v3883 = vcvt.s32.f32 %v3881
        %v3884 = vcvt.s32.f32 %v3882
        %3885 = vmin.xlane.f32.xlu0 %v3884
        %v3886 = vpop.xlane.xlu0 %3885
        %vm3887 = vcmp.eq.f32.partialorder %v3884, %v3886
        %v3888 = vsel %vm3887, %v3883, inf
        %3889 = vmin.xlane.f32.xlu0 %v3888
        %v3890 = vpop.xlane.xlu0 %3889
        %v3891 = vcvt.f32.s32 %v3890
        %v3892 = vcvt.f32.s32 %v3886
        %v3893 = vshll.u32 %v3892, 16
        %v3894 = vadd.s32 %v3893, %v3891
        %v3895 = vand.u32 %v3736, 65535
        %v3896 = vshra.s32 %v3736, 16
        %v3897 = vcvt.s32.f32 %v3895
        %v3898 = vcvt.s32.f32 %v3896
        %3899 = vmin.xlane.f32.xlu0 %v3898
        %v3900 = vpop.xlane.xlu0 %3899
        %vm3901 = vcmp.eq.f32.partialorder %v3898, %v3900
        %v3902 = vsel %vm3901, %v3897, inf
        %3903 = vmin.xlane.f32.xlu0 %v3902
        %v3904 = vpop.xlane.xlu0 %3903
        %v3905 = vcvt.f32.s32 %v3904
        %v3906 = vcvt.f32.s32 %v3900
        %v3907 = vshll.u32 %v3906, 16
        %v3908 = vadd.s32 %v3907, %v3905
        %v3909 = vand.u32 %v3737, 65535
        %v3910 = vshra.s32 %v3737, 16
        %v3911 = vcvt.s32.f32 %v3909
        %v3912 = vcvt.s32.f32 %v3910
        %3913 = vmin.xlane.f32.xlu0 %v3912
        %v3914 = vpop.xlane.xlu0 %3913
        %vm3915 = vcmp.eq.f32.partialorder %v3912, %v3914
        %v3916 = vsel %vm3915, %v3911, inf
        %3917 = vmin.xlane.f32.xlu0 %v3916
        %v3918 = vpop.xlane.xlu0 %3917
        %v3919 = vcvt.f32.s32 %v3918
        %v3920 = vcvt.f32.s32 %v3914
        %v3921 = vshll.u32 %v3920, 16
        %v3922 = vadd.s32 %v3921, %v3919
        %v3923 = vand.u32 %v3738, 65535
        %v3924 = vshra.s32 %v3738, 16
        %v3925 = vcvt.s32.f32 %v3923
        %v3926 = vcvt.s32.f32 %v3924
        %3927 = vmin.xlane.f32.xlu0 %v3926
        %v3928 = vpop.xlane.xlu0 %3927
        %vm3929 = vcmp.eq.f32.partialorder %v3926, %v3928
        %v3930 = vsel %vm3929, %v3925, inf
        %3931 = vmin.xlane.f32.xlu0 %v3930
        %v3932 = vpop.xlane.xlu0 %3931
        %v3933 = vcvt.f32.s32 %v3932
        %v3934 = vcvt.f32.s32 %v3928
        %v3935 = vshll.u32 %v3934, 16
        %v3936 = vadd.s32 %v3935, %v3933
        %v3937 = vand.u32 %v3739, 65535
        %v3938 = vshra.s32 %v3739, 16
        %v3939 = vcvt.s32.f32 %v3937
        %v3940 = vcvt.s32.f32 %v3938
        %3941 = vmin.xlane.f32.xlu0 %v3940
        %v3942 = vpop.xlane.xlu0 %3941
        %vm3943 = vcmp.eq.f32.partialorder %v3940, %v3942
        %v3944 = vsel %vm3943, %v3939, inf
        %3945 = vmin.xlane.f32.xlu0 %v3944
        %v3946 = vpop.xlane.xlu0 %3945
        %v3947 = vcvt.f32.s32 %v3946
        %v3948 = vcvt.f32.s32 %v3942
        %v3949 = vshll.u32 %v3948, 16
        %v3950 = vadd.s32 %v3949, %v3947
        %v3951 = vand.u32 %v3740, 65535
        %v3952 = vshra.s32 %v3740, 16
        %v3953 = vcvt.s32.f32 %v3951
        %v3954 = vcvt.s32.f32 %v3952
        %3955 = vmin.xlane.f32.xlu0 %v3954
        %v3956 = vpop.xlane.xlu0 %3955
        %vm3957 = vcmp.eq.f32.partialorder %v3954, %v3956
        %v3958 = vsel %vm3957, %v3953, inf
        %3959 = vmin.xlane.f32.xlu0 %v3958
        %v3960 = vpop.xlane.xlu0 %3959
        %v3961 = vcvt.f32.s32 %v3960
        %v3962 = vcvt.f32.s32 %v3956
        %v3963 = vshll.u32 %v3962, 16
        %v3964 = vadd.s32 %v3963, %v3961
        %vm3965 = vcmp.eq.s32.totalorder %v1513, %v3754
        %vm3966 = vcmp.eq.s32.totalorder %v1513, %v3768
        %vm3967 = vcmp.eq.s32.totalorder %v1513, %v3782
        %vm3968 = vcmp.eq.s32.totalorder %v1513, %v3796
        %vm3969 = vcmp.eq.s32.totalorder %v1513, %v3810
        %vm3970 = vcmp.eq.s32.totalorder %v1513, %v3824
        %vm3971 = vcmp.eq.s32.totalorder %v1513, %v3838
        %vm3972 = vcmp.eq.s32.totalorder %v1513, %v3852
        %vm3973 = vcmp.eq.s32.totalorder %v1513, %v3866
        %vm3974 = vcmp.eq.s32.totalorder %v1513, %v3880
        %vm3975 = vcmp.eq.s32.totalorder %v1513, %v3894
        %vm3976 = vcmp.eq.s32.totalorder %v1513, %v3908
        %vm3977 = vcmp.eq.s32.totalorder %v1513, %v3922
        %vm3978 = vcmp.eq.s32.totalorder %v1513, %v3936
        %vm3979 = vcmp.eq.s32.totalorder %v1513, %v3950
        %vm3980 = vcmp.eq.s32.totalorder %v1513, %v3964
        %v3981 = vsel %vm3965, 1, 0
        %v3982 = vsel %vm3966, 1, 0
        %v3983 = vsel %vm3967, 1, 0
        %v3984 = vsel %vm3968, 1, 0
        %v3985 = vsel %vm3969, 1, 0
        %v3986 = vsel %vm3970, 1, 0
        %v3987 = vsel %vm3971, 1, 0
        %v3988 = vsel %vm3972, 1, 0
        %v3989 = vsel %vm3973, 1, 0
        %v3990 = vsel %vm3974, 1, 0
        %v3991 = vsel %vm3975, 1, 0
        %v3992 = vsel %vm3976, 1, 0
        %v3993 = vsel %vm3977, 1, 0
        %v3994 = vsel %vm3978, 1, 0
        %v3995 = vsel %vm3979, 1, 0
        %v3996 = vsel %vm3980, 1, 0
        %v3997 = vcvt.s32.f32 %v3981
        %v3998 = vcvt.s32.f32 %v3982
        %v3999 = vcvt.s32.f32 %v3983
        %v4000 = vcvt.s32.f32 %v3984
        %v4001 = vcvt.s32.f32 %v3985
        %v4002 = vcvt.s32.f32 %v3986
        %v4003 = vcvt.s32.f32 %v3987
        %v4004 = vcvt.s32.f32 %v3988
        %v4005 = vcvt.s32.f32 %v3989
        %v4006 = vcvt.s32.f32 %v3990
        %v4007 = vcvt.s32.f32 %v3991
        %v4008 = vcvt.s32.f32 %v3992
        %v4009 = vcvt.s32.f32 %v3993
        %v4010 = vcvt.s32.f32 %v3994
        %v4011 = vcvt.s32.f32 %v3995
        %v4012 = vcvt.s32.f32 %v3996
        %4013 = vst [vmem:[%s397 + $0x18] sm:$0xff] %v3997
        %4014 = vst [vmem:[%s397 + $0x38] sm:$0xff] %v3998
        %4015 = vst [vmem:[%s397 + $0x58] sm:$0xff] %v3999
        %4016 = vst [vmem:[%s397 + $0x78] sm:$0xff] %v4000
        %4017 = vst [vmem:[%s397 + $0x98] sm:$0xff] %v4001
        %4018 = vst [vmem:[%s397 + $0xb8] sm:$0xff] %v4002
        %4019 = vst [vmem:[%s397 + $0xd8] sm:$0xff] %v4003
        %4020 = vst [vmem:[%s397 + $0xf8] sm:$0xff] %v4004
        %4021 = vst [vmem:[%s397 + $0x118] sm:$0xff] %v4005
        %4022 = vst [vmem:[%s397 + $0x138] sm:$0xff] %v4006
        %4023 = vst [vmem:[%s397 + $0x158] sm:$0xff] %v4007
        %4024 = vst [vmem:[%s397 + $0x178] sm:$0xff] %v4008
        %4025 = vst [vmem:[%s397 + $0x198] sm:$0xff] %v4009
        %4026 = vst [vmem:[%s397 + $0x1b8] sm:$0xff] %v4010
        %4027 = vst [vmem:[%s397 + $0x1d8] sm:$0xff] %v4011
        %4028 = vst [vmem:[%s397 + $0x1f8] sm:$0xff] %v4012
        %4029 = vmax.xlane.f32.xlu0 %v1259
        %v4030 = vpop.xlane.xlu0 %4029
        %4031 = vmax.xlane.f32.xlu0 %v1263
        %v4032 = vpop.xlane.xlu0 %4031
        %4033 = vmax.xlane.f32.xlu0 %v1267
        %v4034 = vpop.xlane.xlu0 %4033
        %4035 = vmax.xlane.f32.xlu0 %v1271
        %v4036 = vpop.xlane.xlu0 %4035
        %4037 = vmax.xlane.f32.xlu0 %v1275
        %v4038 = vpop.xlane.xlu0 %4037
        %4039 = vmax.xlane.f32.xlu0 %v1279
        %v4040 = vpop.xlane.xlu0 %4039
        %4041 = vmax.xlane.f32.xlu0 %v1283
        %v4042 = vpop.xlane.xlu0 %4041
        %4043 = vmax.xlane.f32.xlu0 %v1287
        %v4044 = vpop.xlane.xlu0 %4043
        %4045 = vmax.xlane.f32.xlu0 %v1291
        %v4046 = vpop.xlane.xlu0 %4045
        %4047 = vmax.xlane.f32.xlu0 %v1295
        %v4048 = vpop.xlane.xlu0 %4047
        %4049 = vmax.xlane.f32.xlu0 %v1299
        %v4050 = vpop.xlane.xlu0 %4049
        %4051 = vmax.xlane.f32.xlu0 %v1303
        %v4052 = vpop.xlane.xlu0 %4051
        %4053 = vmax.xlane.f32.xlu0 %v1307
        %v4054 = vpop.xlane.xlu0 %4053
        %4055 = vmax.xlane.f32.xlu0 %v1311
        %v4056 = vpop.xlane.xlu0 %4055
        %4057 = vmax.xlane.f32.xlu0 %v1315
        %v4058 = vpop.xlane.xlu0 %4057
        %4059 = vmax.xlane.f32.xlu0 %v1319
        %v4060 = vpop.xlane.xlu0 %4059
        %vm4061 = vcmp.ge.f32.partialorder %v1259, %v4030
        %vm4062 = vcmp.ge.f32.partialorder %v1263, %v4032
        %vm4063 = vcmp.ge.f32.partialorder %v1267, %v4034
        %vm4064 = vcmp.ge.f32.partialorder %v1271, %v4036
        %vm4065 = vcmp.ge.f32.partialorder %v1275, %v4038
        %vm4066 = vcmp.ge.f32.partialorder %v1279, %v4040
        %vm4067 = vcmp.ge.f32.partialorder %v1283, %v4042
        %vm4068 = vcmp.ge.f32.partialorder %v1287, %v4044
        %vm4069 = vcmp.ge.f32.partialorder %v1291, %v4046
        %vm4070 = vcmp.ge.f32.partialorder %v1295, %v4048
        %vm4071 = vcmp.ge.f32.partialorder %v1299, %v4050
        %vm4072 = vcmp.ge.f32.partialorder %v1303, %v4052
        %vm4073 = vcmp.ge.f32.partialorder %v1307, %v4054
        %vm4074 = vcmp.ge.f32.partialorder %v1311, %v4056
        %vm4075 = vcmp.ge.f32.partialorder %v1315, %v4058
        %vm4076 = vcmp.ge.f32.partialorder %v1319, %v4060
        %v4077 = vsel %vm4061, %v1513, 128
        %v4078 = vsel %vm4062, %v1513, 128
        %v4079 = vsel %vm4063, %v1513, 128
        %v4080 = vsel %vm4064, %v1513, 128
        %v4081 = vsel %vm4065, %v1513, 128
        %v4082 = vsel %vm4066, %v1513, 128
        %v4083 = vsel %vm4067, %v1513, 128
        %v4084 = vsel %vm4068, %v1513, 128
        %v4085 = vsel %vm4069, %v1513, 128
        %v4086 = vsel %vm4070, %v1513, 128
        %v4087 = vsel %vm4071, %v1513, 128
        %v4088 = vsel %vm4072, %v1513, 128
        %v4089 = vsel %vm4073, %v1513, 128
        %v4090 = vsel %vm4074, %v1513, 128
        %v4091 = vsel %vm4075, %v1513, 128
        %v4092 = vsel %vm4076, %v1513, 128
        %v4093 = vand.u32 %v4077, 65535
        %v4094 = vshra.s32 %v4077, 16
        %v4095 = vcvt.s32.f32 %v4093
        %v4096 = vcvt.s32.f32 %v4094
        %4097 = vmin.xlane.f32.xlu0 %v4096
        %v4098 = vpop.xlane.xlu0 %4097
        %vm4099 = vcmp.eq.f32.partialorder %v4096, %v4098
        %v4100 = vsel %vm4099, %v4095, inf
        %4101 = vmin.xlane.f32.xlu0 %v4100
        %v4102 = vpop.xlane.xlu0 %4101
        %v4103 = vcvt.f32.s32 %v4102
        %v4104 = vcvt.f32.s32 %v4098
        %v4105 = vshll.u32 %v4104, 16
        %v4106 = vadd.s32 %v4105, %v4103
        %v4107 = vand.u32 %v4078, 65535
        %v4108 = vshra.s32 %v4078, 16
        %v4109 = vcvt.s32.f32 %v4107
        %v4110 = vcvt.s32.f32 %v4108
        %4111 = vmin.xlane.f32.xlu0 %v4110
        %v4112 = vpop.xlane.xlu0 %4111
        %vm4113 = vcmp.eq.f32.partialorder %v4110, %v4112
        %v4114 = vsel %vm4113, %v4109, inf
        %4115 = vmin.xlane.f32.xlu0 %v4114
        %v4116 = vpop.xlane.xlu0 %4115
        %v4117 = vcvt.f32.s32 %v4116
        %v4118 = vcvt.f32.s32 %v4112
        %v4119 = vshll.u32 %v4118, 16
        %v4120 = vadd.s32 %v4119, %v4117
        %v4121 = vand.u32 %v4079, 65535
        %v4122 = vshra.s32 %v4079, 16
        %v4123 = vcvt.s32.f32 %v4121
        %v4124 = vcvt.s32.f32 %v4122
        %4125 = vmin.xlane.f32.xlu0 %v4124
        %v4126 = vpop.xlane.xlu0 %4125
        %vm4127 = vcmp.eq.f32.partialorder %v4124, %v4126
        %v4128 = vsel %vm4127, %v4123, inf
        %4129 = vmin.xlane.f32.xlu0 %v4128
        %v4130 = vpop.xlane.xlu0 %4129
        %v4131 = vcvt.f32.s32 %v4130
        %v4132 = vcvt.f32.s32 %v4126
        %v4133 = vshll.u32 %v4132, 16
        %v4134 = vadd.s32 %v4133, %v4131
        %v4135 = vand.u32 %v4080, 65535
        %v4136 = vshra.s32 %v4080, 16
        %v4137 = vcvt.s32.f32 %v4135
        %v4138 = vcvt.s32.f32 %v4136
        %4139 = vmin.xlane.f32.xlu0 %v4138
        %v4140 = vpop.xlane.xlu0 %4139
        %vm4141 = vcmp.eq.f32.partialorder %v4138, %v4140
        %v4142 = vsel %vm4141, %v4137, inf
        %4143 = vmin.xlane.f32.xlu0 %v4142
        %v4144 = vpop.xlane.xlu0 %4143
        %v4145 = vcvt.f32.s32 %v4144
        %v4146 = vcvt.f32.s32 %v4140
        %v4147 = vshll.u32 %v4146, 16
        %v4148 = vadd.s32 %v4147, %v4145
        %v4149 = vand.u32 %v4081, 65535
        %v4150 = vshra.s32 %v4081, 16
        %v4151 = vcvt.s32.f32 %v4149
        %v4152 = vcvt.s32.f32 %v4150
        %4153 = vmin.xlane.f32.xlu0 %v4152
        %v4154 = vpop.xlane.xlu0 %4153
        %vm4155 = vcmp.eq.f32.partialorder %v4152, %v4154
        %v4156 = vsel %vm4155, %v4151, inf
        %4157 = vmin.xlane.f32.xlu0 %v4156
        %v4158 = vpop.xlane.xlu0 %4157
        %v4159 = vcvt.f32.s32 %v4158
        %v4160 = vcvt.f32.s32 %v4154
        %v4161 = vshll.u32 %v4160, 16
        %v4162 = vadd.s32 %v4161, %v4159
        %v4163 = vand.u32 %v4082, 65535
        %v4164 = vshra.s32 %v4082, 16
        %v4165 = vcvt.s32.f32 %v4163
        %v4166 = vcvt.s32.f32 %v4164
        %4167 = vmin.xlane.f32.xlu0 %v4166
        %v4168 = vpop.xlane.xlu0 %4167
        %vm4169 = vcmp.eq.f32.partialorder %v4166, %v4168
        %v4170 = vsel %vm4169, %v4165, inf
        %4171 = vmin.xlane.f32.xlu0 %v4170
        %v4172 = vpop.xlane.xlu0 %4171
        %v4173 = vcvt.f32.s32 %v4172
        %v4174 = vcvt.f32.s32 %v4168
        %v4175 = vshll.u32 %v4174, 16
        %v4176 = vadd.s32 %v4175, %v4173
        %v4177 = vand.u32 %v4083, 65535
        %v4178 = vshra.s32 %v4083, 16
        %v4179 = vcvt.s32.f32 %v4177
        %v4180 = vcvt.s32.f32 %v4178
        %4181 = vmin.xlane.f32.xlu0 %v4180
        %v4182 = vpop.xlane.xlu0 %4181
        %vm4183 = vcmp.eq.f32.partialorder %v4180, %v4182
        %v4184 = vsel %vm4183, %v4179, inf
        %4185 = vmin.xlane.f32.xlu0 %v4184
        %v4186 = vpop.xlane.xlu0 %4185
        %v4187 = vcvt.f32.s32 %v4186
        %v4188 = vcvt.f32.s32 %v4182
        %v4189 = vshll.u32 %v4188, 16
        %v4190 = vadd.s32 %v4189, %v4187
        %v4191 = vand.u32 %v4084, 65535
        %v4192 = vshra.s32 %v4084, 16
        %v4193 = vcvt.s32.f32 %v4191
        %v4194 = vcvt.s32.f32 %v4192
        %4195 = vmin.xlane.f32.xlu0 %v4194
        %v4196 = vpop.xlane.xlu0 %4195
        %vm4197 = vcmp.eq.f32.partialorder %v4194, %v4196
        %v4198 = vsel %vm4197, %v4193, inf
        %4199 = vmin.xlane.f32.xlu0 %v4198
        %v4200 = vpop.xlane.xlu0 %4199
        %v4201 = vcvt.f32.s32 %v4200
        %v4202 = vcvt.f32.s32 %v4196
        %v4203 = vshll.u32 %v4202, 16
        %v4204 = vadd.s32 %v4203, %v4201
        %v4205 = vand.u32 %v4085, 65535
        %v4206 = vshra.s32 %v4085, 16
        %v4207 = vcvt.s32.f32 %v4205
        %v4208 = vcvt.s32.f32 %v4206
        %4209 = vmin.xlane.f32.xlu0 %v4208
        %v4210 = vpop.xlane.xlu0 %4209
        %vm4211 = vcmp.eq.f32.partialorder %v4208, %v4210
        %v4212 = vsel %vm4211, %v4207, inf
        %4213 = vmin.xlane.f32.xlu0 %v4212
        %v4214 = vpop.xlane.xlu0 %4213
        %v4215 = vcvt.f32.s32 %v4214
        %v4216 = vcvt.f32.s32 %v4210
        %v4217 = vshll.u32 %v4216, 16
        %v4218 = vadd.s32 %v4217, %v4215
        %v4219 = vand.u32 %v4086, 65535
        %v4220 = vshra.s32 %v4086, 16
        %v4221 = vcvt.s32.f32 %v4219
        %v4222 = vcvt.s32.f32 %v4220
        %4223 = vmin.xlane.f32.xlu0 %v4222
        %v4224 = vpop.xlane.xlu0 %4223
        %vm4225 = vcmp.eq.f32.partialorder %v4222, %v4224
        %v4226 = vsel %vm4225, %v4221, inf
        %4227 = vmin.xlane.f32.xlu0 %v4226
        %v4228 = vpop.xlane.xlu0 %4227
        %v4229 = vcvt.f32.s32 %v4228
        %v4230 = vcvt.f32.s32 %v4224
        %v4231 = vshll.u32 %v4230, 16
        %v4232 = vadd.s32 %v4231, %v4229
        %v4233 = vand.u32 %v4087, 65535
        %v4234 = vshra.s32 %v4087, 16
        %v4235 = vcvt.s32.f32 %v4233
        %v4236 = vcvt.s32.f32 %v4234
        %4237 = vmin.xlane.f32.xlu0 %v4236
        %v4238 = vpop.xlane.xlu0 %4237
        %vm4239 = vcmp.eq.f32.partialorder %v4236, %v4238
        %v4240 = vsel %vm4239, %v4235, inf
        %4241 = vmin.xlane.f32.xlu0 %v4240
        %v4242 = vpop.xlane.xlu0 %4241
        %v4243 = vcvt.f32.s32 %v4242
        %v4244 = vcvt.f32.s32 %v4238
        %v4245 = vshll.u32 %v4244, 16
        %v4246 = vadd.s32 %v4245, %v4243
        %v4247 = vand.u32 %v4088, 65535
        %v4248 = vshra.s32 %v4088, 16
        %v4249 = vcvt.s32.f32 %v4247
        %v4250 = vcvt.s32.f32 %v4248
        %4251 = vmin.xlane.f32.xlu0 %v4250
        %v4252 = vpop.xlane.xlu0 %4251
        %vm4253 = vcmp.eq.f32.partialorder %v4250, %v4252
        %v4254 = vsel %vm4253, %v4249, inf
        %4255 = vmin.xlane.f32.xlu0 %v4254
        %v4256 = vpop.xlane.xlu0 %4255
        %v4257 = vcvt.f32.s32 %v4256
        %v4258 = vcvt.f32.s32 %v4252
        %v4259 = vshll.u32 %v4258, 16
        %v4260 = vadd.s32 %v4259, %v4257
        %v4261 = vand.u32 %v4089, 65535
        %v4262 = vshra.s32 %v4089, 16
        %v4263 = vcvt.s32.f32 %v4261
        %v4264 = vcvt.s32.f32 %v4262
        %4265 = vmin.xlane.f32.xlu0 %v4264
        %v4266 = vpop.xlane.xlu0 %4265
        %vm4267 = vcmp.eq.f32.partialorder %v4264, %v4266
        %v4268 = vsel %vm4267, %v4263, inf
        %4269 = vmin.xlane.f32.xlu0 %v4268
        %v4270 = vpop.xlane.xlu0 %4269
        %v4271 = vcvt.f32.s32 %v4270
        %v4272 = vcvt.f32.s32 %v4266
        %v4273 = vshll.u32 %v4272, 16
        %v4274 = vadd.s32 %v4273, %v4271
        %v4275 = vand.u32 %v4090, 65535
        %v4276 = vshra.s32 %v4090, 16
        %v4277 = vcvt.s32.f32 %v4275
        %v4278 = vcvt.s32.f32 %v4276
        %4279 = vmin.xlane.f32.xlu0 %v4278
        %v4280 = vpop.xlane.xlu0 %4279
        %vm4281 = vcmp.eq.f32.partialorder %v4278, %v4280
        %v4282 = vsel %vm4281, %v4277, inf
        %4283 = vmin.xlane.f32.xlu0 %v4282
        %v4284 = vpop.xlane.xlu0 %4283
        %v4285 = vcvt.f32.s32 %v4284
        %v4286 = vcvt.f32.s32 %v4280
        %v4287 = vshll.u32 %v4286, 16
        %v4288 = vadd.s32 %v4287, %v4285
        %v4289 = vand.u32 %v4091, 65535
        %v4290 = vshra.s32 %v4091, 16
        %v4291 = vcvt.s32.f32 %v4289
        %v4292 = vcvt.s32.f32 %v4290
        %4293 = vmin.xlane.f32.xlu0 %v4292
        %v4294 = vpop.xlane.xlu0 %4293
        %vm4295 = vcmp.eq.f32.partialorder %v4292, %v4294
        %v4296 = vsel %vm4295, %v4291, inf
        %4297 = vmin.xlane.f32.xlu0 %v4296
        %v4298 = vpop.xlane.xlu0 %4297
        %v4299 = vcvt.f32.s32 %v4298
        %v4300 = vcvt.f32.s32 %v4294
        %v4301 = vshll.u32 %v4300, 16
        %v4302 = vadd.s32 %v4301, %v4299
        %v4303 = vand.u32 %v4092, 65535
        %v4304 = vshra.s32 %v4092, 16
        %v4305 = vcvt.s32.f32 %v4303
        %v4306 = vcvt.s32.f32 %v4304
        %4307 = vmin.xlane.f32.xlu0 %v4306
        %v4308 = vpop.xlane.xlu0 %4307
        %vm4309 = vcmp.eq.f32.partialorder %v4306, %v4308
        %v4310 = vsel %vm4309, %v4305, inf
        %4311 = vmin.xlane.f32.xlu0 %v4310
        %v4312 = vpop.xlane.xlu0 %4311
        %v4313 = vcvt.f32.s32 %v4312
        %v4314 = vcvt.f32.s32 %v4308
        %v4315 = vshll.u32 %v4314, 16
        %v4316 = vadd.s32 %v4315, %v4313
        %vm4317 = vcmp.eq.s32.totalorder %v1513, %v4106
        %vm4318 = vcmp.eq.s32.totalorder %v1513, %v4120
        %vm4319 = vcmp.eq.s32.totalorder %v1513, %v4134
        %vm4320 = vcmp.eq.s32.totalorder %v1513, %v4148
        %vm4321 = vcmp.eq.s32.totalorder %v1513, %v4162
        %vm4322 = vcmp.eq.s32.totalorder %v1513, %v4176
        %vm4323 = vcmp.eq.s32.totalorder %v1513, %v4190
        %vm4324 = vcmp.eq.s32.totalorder %v1513, %v4204
        %vm4325 = vcmp.eq.s32.totalorder %v1513, %v4218
        %vm4326 = vcmp.eq.s32.totalorder %v1513, %v4232
        %vm4327 = vcmp.eq.s32.totalorder %v1513, %v4246
        %vm4328 = vcmp.eq.s32.totalorder %v1513, %v4260
        %vm4329 = vcmp.eq.s32.totalorder %v1513, %v4274
        %vm4330 = vcmp.eq.s32.totalorder %v1513, %v4288
        %vm4331 = vcmp.eq.s32.totalorder %v1513, %v4302
        %vm4332 = vcmp.eq.s32.totalorder %v1513, %v4316
        %v4333 = vsel %vm4317, 1, 0
        %v4334 = vsel %vm4318, 1, 0
        %v4335 = vsel %vm4319, 1, 0
        %v4336 = vsel %vm4320, 1, 0
        %v4337 = vsel %vm4321, 1, 0
        %v4338 = vsel %vm4322, 1, 0
        %v4339 = vsel %vm4323, 1, 0
        %v4340 = vsel %vm4324, 1, 0
        %v4341 = vsel %vm4325, 1, 0
        %v4342 = vsel %vm4326, 1, 0
        %v4343 = vsel %vm4327, 1, 0
        %v4344 = vsel %vm4328, 1, 0
        %v4345 = vsel %vm4329, 1, 0
        %v4346 = vsel %vm4330, 1, 0
        %v4347 = vsel %vm4331, 1, 0
        %v4348 = vsel %vm4332, 1, 0
        %v4349 = vcvt.s32.f32 %v4333
        %v4350 = vcvt.s32.f32 %v4334
        %v4351 = vcvt.s32.f32 %v4335
        %v4352 = vcvt.s32.f32 %v4336
        %v4353 = vcvt.s32.f32 %v4337
        %v4354 = vcvt.s32.f32 %v4338
        %v4355 = vcvt.s32.f32 %v4339
        %v4356 = vcvt.s32.f32 %v4340
        %v4357 = vcvt.s32.f32 %v4341
        %v4358 = vcvt.s32.f32 %v4342
        %v4359 = vcvt.s32.f32 %v4343
        %v4360 = vcvt.s32.f32 %v4344
        %v4361 = vcvt.s32.f32 %v4345
        %v4362 = vcvt.s32.f32 %v4346
        %v4363 = vcvt.s32.f32 %v4347
        %v4364 = vcvt.s32.f32 %v4348
        %4365 = vst [vmem:[%s411 + $0x18] sm:$0xff] %v4349
        %4366 = vst [vmem:[%s411 + $0x38] sm:$0xff] %v4350
        %4367 = vst [vmem:[%s411 + $0x58] sm:$0xff] %v4351
        %4368 = vst [vmem:[%s411 + $0x78] sm:$0xff] %v4352
        %4369 = vst [vmem:[%s411 + $0x98] sm:$0xff] %v4353
        %4370 = vst [vmem:[%s411 + $0xb8] sm:$0xff] %v4354
        %4371 = vst [vmem:[%s411 + $0xd8] sm:$0xff] %v4355
        %4372 = vst [vmem:[%s411 + $0xf8] sm:$0xff] %v4356
        %4373 = vst [vmem:[%s411 + $0x118] sm:$0xff] %v4357
        %4374 = vst [vmem:[%s411 + $0x138] sm:$0xff] %v4358
        %4375 = vst [vmem:[%s411 + $0x158] sm:$0xff] %v4359
        %4376 = vst [vmem:[%s411 + $0x178] sm:$0xff] %v4360
        %4377 = vst [vmem:[%s411 + $0x198] sm:$0xff] %v4361
        %4378 = vst [vmem:[%s411 + $0x1b8] sm:$0xff] %v4362
        %4379 = vst [vmem:[%s411 + $0x1d8] sm:$0xff] %v4363
        %4380 = vst [vmem:[%s411 + $0x1f8] sm:$0xff] %v4364
        %vm4381 = vcmask 31768
        %4382 = vst.msk [vmem:[%s426] sm:$0xff] %vm4381, %v4106
        %4383 = vst.msk [vmem:[%s426 + $0x8] sm:$0xff] %vm4381, %v4120
        %4384 = vst.msk [vmem:[%s426 + $0x10] sm:$0xff] %vm4381, %v4134
        %4385 = vst.msk [vmem:[%s426 + $0x18] sm:$0xff] %vm4381, %v4148
        %4386 = vst.msk [vmem:[%s426 + $0x20] sm:$0xff] %vm4381, %v4162
        %4387 = vst.msk [vmem:[%s426 + $0x28] sm:$0xff] %vm4381, %v4176
        %4388 = vst.msk [vmem:[%s426 + $0x30] sm:$0xff] %vm4381, %v4190
        %4389 = vst.msk [vmem:[%s426 + $0x38] sm:$0xff] %vm4381, %v4204
        %4390 = vst.msk [vmem:[%s426 + $0x40] sm:$0xff] %vm4381, %v4218
        %4391 = vst.msk [vmem:[%s426 + $0x48] sm:$0xff] %vm4381, %v4232
        %4392 = vst.msk [vmem:[%s426 + $0x50] sm:$0xff] %vm4381, %v4246
        %4393 = vst.msk [vmem:[%s426 + $0x58] sm:$0xff] %vm4381, %v4260
        %4394 = vst.msk [vmem:[%s426 + $0x60] sm:$0xff] %vm4381, %v4274
        %4395 = vst.msk [vmem:[%s426 + $0x68] sm:$0xff] %vm4381, %v4288
        %4396 = vst.msk [vmem:[%s426 + $0x70] sm:$0xff] %vm4381, %v4302
        %4397 = vst.msk [vmem:[%s426 + $0x78] sm:$0xff] %vm4381, %v4316
        %s4398 = sand.u32 %s156, 1
        %s4399 = scalar_lea.sflag [#allocation4], %s4398
        %s4400 = sand.u32 %s156, 1
        %s4401 = smul.addr %s4400, 512
        %s4402 = scalar_lea.vmem [#allocation10], %s4401
        %s4403 = smul.u32 16, %s33
        %p4404 = scmp.lt.s32.totalorder %s4403, 31
        %s4405 = scalar_select %p4404, %s4403, 31
        %s4406 = smul.addr %s4405, 8
        %s4407 = scalar_lea.vmem %s6, %s4406
        %s4408 = sand.u32 %s33, 1
        %s4409 = scalar_lea.sflag [#allocation12], %s4408
        %s4410 = sand.u32 %s208, 1
        %s4411 = smul.addr %s4410, 512
        %s4412 = scalar_lea.vmem [#allocation11], %s4411
        %s4413 = sand.u32 %s33, 1
        %s4414 = scalar_lea.sflag [#allocation12], %s4413
        %s4415 = sand.u32 %s234, 1
        %s4416 = smul.addr %s4415, 512
        %s4417 = scalar_lea.vmem [#allocation13], %s4416
        // Predicated region
        $region57: #{tpu_custom_call.1} parent=39 // pred_check
          %p4418 = pneg %p166
        $region58: #{tpu_custom_call.1} parent=39 // pred_check_branch
          %4420 = sbr.rel (%p4418) target = $region60
        $region59: #{tpu_custom_call.1} parent=39 // pred_region
          %s4421 = smul.u32 16, %s33
          %s4423 = ssub.s32 8192, 8192
          %4424 = vsyncadd %s4399, %s4423
          %s4425 = smul.addr %s4421, 4
          %s4426 = smul.addr %s4425, 128
          %s4427 = scalar_lea.hbm %s5, %s4426
          %s4428 = sshll.u32 %s4402, 4
          %s4429 = int_to_ptr.vmem [resolvable:$true] %s4428
          %4434 = dma.vmem_to_hbm [thread:$0]  %s4429, 8192, %s4427, %s4399, 512, 512, 32
        $region60: #{tpu_custom_call.1} parent=39 // pred_fallthru
          _
        // Predicated region
        $region61: #{tpu_custom_call.1} parent=39 // pred_check
          %p4435 = pneg %p192
        $region62: #{tpu_custom_call.1} parent=39 // pred_check_branch
          %4437 = sbr.rel (%p4435) target = $region64
        $region63: #{tpu_custom_call.1} parent=39 // pred_region
          %s4438 = smul.u32 16, %s33
        $region64: #{tpu_custom_call.1} parent=39 // pred_fallthru
          _
        // Predicated region
        $region65: #{tpu_custom_call.1} parent=39 // pred_check
          %p4439 = pneg %p218
        $region66: #{tpu_custom_call.1} parent=39 // pred_check_branch
          %4441 = sbr.rel (%p4439) target = $region68
        $region67: #{tpu_custom_call.1} parent=39 // pred_region
          %s4442 = smul.u32 16, %s33
          %s4444 = ssub.s32 8192, 8192
          %4445 = vsyncadd %s4409, %s4444
          %s4446 = smul.addr %s4442, 4
          %s4447 = smul.addr %s4446, 128
          %s4448 = scalar_lea.hbm %s7, %s4447
          %s4449 = sshll.u32 %s4412, 4
          %s4450 = int_to_ptr.vmem [resolvable:$true] %s4449
          %4455 = dma.vmem_to_hbm [thread:$0]  %s4450, 8192, %s4448, %s4409, 512, 512, 32
        $region68: #{tpu_custom_call.1} parent=39 // pred_fallthru
          _
        // Predicated region
        $region69: #{tpu_custom_call.1} parent=39 // pred_check
          %p4456 = pneg %p244
        $region70: #{tpu_custom_call.1} parent=39 // pred_check_branch
          %4458 = sbr.rel (%p4456) target = $region72
        $region71: #{tpu_custom_call.1} parent=39 // pred_region
          %s4459 = smul.u32 16, %s33
          %s4461 = ssub.s32 8192, 8192
          %4462 = vsyncadd %s4414, %s4461
          %s4463 = smul.addr %s4459, 4
          %s4464 = smul.addr %s4463, 128
          %s4465 = scalar_lea.hbm %s8, %s4464
          %s4466 = sshll.u32 %s4417, 4
          %s4467 = int_to_ptr.vmem [resolvable:$true] %s4466
          %4472 = dma.vmem_to_hbm [thread:$0]  %s4467, 8192, %s4465, %s4414, 512, 512, 32
        $region72: #{tpu_custom_call.1} parent=39 // pred_fallthru
          _
      $region40: #{tpu_custom_call.1} parent=5 // pred_fallthru
        _
      %p4473 = scmp.le.s32.totalorder 2, %s28
      // Predicated region
      $region73: #{tpu_custom_call.1} parent=5 // pred_check
        %p4474 = pneg %p4473
      $region74: #{tpu_custom_call.1} parent=5 // pred_check_branch
        %4476 = sbr.rel (%p4474) target = $region76
      $region75: #{tpu_custom_call.1} parent=5 // pred_region
        %s4477 = ssub.s32 %s28, 2
        // Predicated region
        $region77: #{tpu_custom_call.1} parent=75 // pred_check
          %p4478 = pneg %p172
        $region78: #{tpu_custom_call.1} parent=75 // pred_check_branch
          %4480 = sbr.rel (%p4478) target = $region80
        $region79: #{tpu_custom_call.1} parent=75 // pred_region
          %s4481 = sand.u32 %s157, 1
          %s4482 = scalar_lea.sflag [#allocation4], %s4481
          %s4483 = sand.u32 %s157, 1
          %s4484 = smul.addr %s4483, 512
          %s4485 = scalar_lea.vmem [#allocation10], %s4484
          %4486 = dma.done %s4482, 8192
        $region80: #{tpu_custom_call.1} parent=75 // pred_fallthru
          _
        // Predicated region
        $region81: #{tpu_custom_call.1} parent=75 // pred_check
          %p4487 = pneg %p198
        $region82: #{tpu_custom_call.1} parent=75 // pred_check_branch
          %4489 = sbr.rel (%p4487) target = $region84
        $region83: #{tpu_custom_call.1} parent=75 // pred_region
          %s4490 = smul.u32 16, %s34
          %p4491 = scmp.lt.s32.totalorder %s4490, 31
          %s4492 = scalar_select %p4491, %s4490, 31
          %s4493 = smul.addr %s4492, 8
          %s4494 = scalar_lea.vmem %s6, %s4493
        $region84: #{tpu_custom_call.1} parent=75 // pred_fallthru
          _
        // Predicated region
        $region85: #{tpu_custom_call.1} parent=75 // pred_check
          %p4495 = pneg %p224
        $region86: #{tpu_custom_call.1} parent=75 // pred_check_branch
          %4497 = sbr.rel (%p4495) target = $region88
        $region87: #{tpu_custom_call.1} parent=75 // pred_region
          %s4498 = sand.u32 %s34, 1
          %s4499 = scalar_lea.sflag [#allocation12], %s4498
          %s4500 = sand.u32 %s209, 1
          %s4501 = smul.addr %s4500, 512
          %s4502 = scalar_lea.vmem [#allocation11], %s4501
          %4503 = dma.done %s4499, 8192
        $region88: #{tpu_custom_call.1} parent=75 // pred_fallthru
          _
        // Predicated region
        $region89: #{tpu_custom_call.1} parent=75 // pred_check
          %p4504 = pneg %p250
        $region90: #{tpu_custom_call.1} parent=75 // pred_check_branch
          %4506 = sbr.rel (%p4504) target = $region92
        $region91: #{tpu_custom_call.1} parent=75 // pred_region
          %s4507 = sand.u32 %s34, 1
          %s4508 = scalar_lea.sflag [#allocation12], %s4507
          %s4509 = sand.u32 %s235, 1
          %s4510 = smul.addr %s4509, 512
          %s4511 = scalar_lea.vmem [#allocation13], %s4510
          %4512 = dma.done %s4508, 8192
        $region92: #{tpu_custom_call.1} parent=75 // pred_fallthru
          _
      $region76: #{tpu_custom_call.1} parent=5 // pred_fallthru
        _
    $region6: #{tpu_custom_call.1} parent=1 // loop_footer
      %s32 = sadd.s32 1, %s28
    $region7: #{tpu_custom_call.1} parent=1 // loop_footer_branch
      %27 = sbr.rel target = $region3
    $region8: #{tpu_custom_call.1} parent=1 // loop_exit
      _
    %4513 = vsyncpa [#allocation3], 1
    %s4514 = scalar_lea.sflag [#allocation3], 1
    %4515 = vsyncpa %s4514, 1
    %4516 = vsyncpa [#allocation6], 1
    %s4517 = scalar_lea.sflag [#allocation6], 1
    %4518 = vsyncpa %s4517, 1
    %4519 = vsyncpa [#allocation9], 1
    %4520 = vsyncpa [#allocation4], 1
    %s4521 = scalar_lea.sflag [#allocation4], 1
    %4522 = vsyncpa %s4521, 1
    %4523 = vsyncpa [#allocation12], 1
    %s4524 = scalar_lea.sflag [#allocation12], 1
    %4525 = vsyncpa %s4524, 1

</llo_original>
